<compile_context>
chip_gen: v7x
topology: tpu7x:2x2x1
jax: 0.10.0
libtpu: 0.0.40
codegen_flags: <defaults>
</compile_context>

<pallas_src>
import functools

import jax
import jax.numpy as jnp
from jax.experimental import pallas as pl
from jax.experimental.pallas import tpu as pltpu


_MXU_C_THRESHOLD = 256          # use MXU for the LN channel reduction when C >= this


# --------------------------------------------------------------------------- small helpers
def _round_up(n, m):
    return ((n + m - 1) // m) * m


def _vmem_limit(*block_bytes):
    # Budget VMEM per kernel from actual block bytes (double-buffered) + headroom for
    # in-kernel temporaries, instead of a flat global limit.
    need = 2 * sum(block_bytes)
    return int(min(max(3 * sum(block_bytes) + (8 << 20), 16 << 20, need), 112 << 20))


def _cparams(sem, *block_bytes):
    return pltpu.CompilerParams(dimension_semantics=tuple(sem),
                                vmem_limit_bytes=_vmem_limit(*block_bytes))


def _pick_hw_tile(hwp, target=1024):
    # largest multiple of 128 that divides hwp and is <= target
    best, t = 128, 128
    while t <= min(hwp, target):
        if hwp % t == 0:
            best = t
        t += 128
    return best


def _choose_hw_tiling(hw):
    hwp = _round_up(hw, 128)
    tile = _pick_hw_tile(hwp, 1024)
    if tile < 512 and hwp > 512:
        # Awkward factorization: pad a few extra columns rather than run 128-lane steps
        # dominated by per-step pipeline overhead.
        hwp = _round_up(hw, 512)
        tile = 512
    return hwp, tile


def _pick_c_tile(C, hwp, target_bytes=2 << 20):
    if C % 8 != 0:
        return C
    target = max(8, (target_bytes // (hwp * 4)) // 8 * 8)
    best = 8
    for t in range(8, C + 1, 8):
        if C % t == 0 and t <= target:
            best = t
    return best


# -------------------------------------------------------------------------- GELU (tanh form)
_SQRT_2_OVER_PI = 0.7978845608028654
_GELU_C = 0.044715


def _gelu(x):
    # tanh-form GELU: the transcendental runs on the EUP (free bundle slot). Max abs error
    # vs the exact erf form used by nn.GELU() is ~3e-4, far below the bf16-MXU noise floor.
    return 0.5 * x * (1.0 + jnp.tanh(_SQRT_2_OVER_PI * (x + _GELU_C * x * x * x)))


# -------------------------------------------------------------- LayerNorm (channels_first) math
def _ln_cf_math(x, w, b, *, eps, use_mxu):
    # x: (C, T) f32; w, b: (C, 1) f32. Normalizes over the channel axis (axis 0).
    C = x.shape[0]
    if use_mxu:
        # Channel reduction on the otherwise idle MXU; two-pass mean/variance (the one-pass
        # m2 - u^2 form cancels badly when |mean| >> std).
        ones = jnp.ones((8, C), jnp.float32)
        u = jnp.dot(ones, x, preferred_element_type=jnp.float32)[0:1] * (1.0 / C)
        d = x - u
        s = jnp.dot(ones, d * d, preferred_element_type=jnp.float32)[0:1] * (1.0 / C)
    else:
        u = jnp.mean(x, axis=0, keepdims=True)
        d = x - u
        s = jnp.mean(d * d, axis=0, keepdims=True)
    return w * (d * jax.lax.rsqrt(s + eps)) + b


# ----------------------------------------------------- depthwise 3x3 on a flat (C, HW) layout
def _dw_flat_accum(x, w9, row, col, *, H, W):
    # x: (Ct, HWp) f32, row-major flattened image (zero-padded tail columns allowed);
    # w9: (Ct, 9) per-channel taps; row/col: (1, HWp) int32 spatial coordinates.
    # 3x3 cross-correlation with zero padding, implemented with XLU rolls along the lane
    # axis + VPU edge masks: lane-dense, no halo tensor, no strided tap slices.
    hwp = x.shape[1]
    acc = x * w9[:, 4:5]                      # center tap (dy=0, dx=0)
    t = -1
    for dy in (-1, 0, 1):
        for dx in (-1, 0, 1):
            t += 1
            if dy == 0 and dx == 0:
                continue
            delta = dy * W + dx               # out[p] = x[p + delta] where valid
            tap = pltpu.roll(x, shift=(-delta) % hwp, axis=1)
            m = None
            if dx == 1:
                m = col < (W - 1)
            elif dx == -1:
                m = col > 0
            if dy == 1:
                mr = row < (H - 1)
                m = mr if m is None else (m & mr)
            elif dy == -1:
                mr = row > 0
                m = mr if m is None else (m & mr)
            acc = acc + jnp.where(m, tap, 0.0) * w9[:, t:t + 1]
    return acc


# ------------------------------------------- fused LayerNorm1 + depthwise 3x3 QKV conv kernel
def _ln_dw_kernel(x_ref, lnw_ref, lnb_ref, w9_ref, rc_ref, o_ref, *, eps, H, W, use_mxu):
    x = x_ref[...].astype(jnp.float32)                           # (C, HWp)
    ln = _ln_cf_math(x, lnw_ref[...].astype(jnp.float32),
                     lnb_ref[...].astype(jnp.float32), eps=eps, use_mxu=use_mxu)
    row = rc_ref[0:1, :]
    col = rc_ref[1:2, :]
    o_ref[...] = _dw_flat_accum(ln, w9_ref[...].astype(jnp.float32), row, col,
                                H=H, W=W).astype(o_ref.dtype)


def _ln1_dwconv(xf, ln_w, ln_b, w9, rowcol, H, W, eps):
    # TODO(synk): for very large C*H*W this kernel (grid=(B,), full (C,HW) block because the
    # LN reduces over channels) should be spatially tiled with in-kernel halo handling.
    B, C, HWp = xf.shape
    kernel = functools.partial(_ln_dw_kernel, eps=eps, H=H, W=W,
                               use_mxu=(C >= _MXU_C_THRESHOLD))
    img = pl.BlockSpec((pl.Squeezed(), C, HWp), lambda n: (n, 0, 0))
    nb = C * HWp * 4
    return pl.pallas_call(
        kernel,
        out_shape=jax.ShapeDtypeStruct((B, C, HWp), xf.dtype),
        grid_spec=pltpu.PrefetchScalarGridSpec(
            num_scalar_prefetch=0, grid=(B,),
            in_specs=[img,
                      pl.BlockSpec((C, 1), lambda n: (0, 0)),
                      pl.BlockSpec((C, 1), lambda n: (0, 0)),
                      pl.BlockSpec((C, 9), lambda n: (0, 0)),
                      pl.BlockSpec((2, HWp), lambda n: (0, 0))],
            out_specs=img),
        compiler_params=_cparams(("parallel",), nb, nb),
    )(xf, ln_w, ln_b, w9, rowcol)


# ------------------------------------------------------------------------ pointwise (1x1) conv
def _pointwise(x, w_bf16, b, tile, act=None):
    B, Ci, HWp = x.shape
    Co = w_bf16.shape[0]
    has_bias = b is not None

    def kernel(*refs):
        if has_bias:
            x_ref, w_ref, b_ref, o_ref = refs
        else:
            x_ref, w_ref, o_ref = refs
        xx = x_ref[...].astype(jnp.bfloat16)                     # MXU is bf16-native
        y = jnp.dot(w_ref[...], xx, preferred_element_type=jnp.float32)
        if has_bias:
            y = y + b_ref[...].astype(jnp.float32)
        if act == "gelu":
            y = _gelu(y)
        o_ref[...] = y.astype(o_ref.dtype)

    in_specs = [pl.BlockSpec((pl.Squeezed(), Ci, tile), lambda n, t: (n, 0, t)),
                pl.BlockSpec((Co, Ci), lambda n, t: (0, 0))]
    args = [x, w_bf16]
    if has_bias:
        in_specs.append(pl.BlockSpec((Co, 1), lambda n, t: (0, 0)))
        args.append(b)
    nb = (Ci * tile * 4, Co * Ci * 2, Co * tile * 4)
    return pl.pallas_call(
        kernel,
        out_shape=jax.ShapeDtypeStruct((B, Co, HWp), x.dtype),
        grid_spec=pltpu.PrefetchScalarGridSpec(
            num_scalar_prefetch=0, grid=(B, HWp // tile),
            in_specs=in_specs,
            out_specs=pl.BlockSpec((pl.Squeezed(), Co, tile), lambda n, t: (n, 0, t))),
        compiler_params=_cparams(("parallel", "parallel"), *nb),
    )(*args)


# ---------------------------------------------------------------- flash attention (d, S) layout
def _flash_attn_kernel(q_ref, k_ref, v_ref, o_ref, m_sc, l_sc, acc_sc,
                       *, scale, kv_tile, hw, hwp):
    ki = pl.program_id(3)

    @pl.when(ki == 0)
    def _():
        m_sc[...] = jnp.full_like(m_sc, -jnp.inf)
        l_sc[...] = jnp.zeros_like(l_sc)
        acc_sc[...] = jnp.zeros_like(acc_sc)

    # q/k/v arrive in (d, S_tile) layout straight from the qkv projection (no transposes).
    q = (q_ref[...].astype(jnp.float32) * scale).astype(jnp.bfloat16)   # (d, Tq)
    k = k_ref[...].astype(jnp.bfloat16)                                  # (d, Tk)
    v = v_ref[...].astype(jnp.bfloat16)                                  # (d, Tk)

    # Scores in (kv, q) layout: kv reductions land on sublanes, the running (1, Tq) stats
    # stay lane-dense, and the output comes out directly as (d, Tq).
    s = jax.lax.dot_general(k, q, (((0,), (0,)), ((), ())),
                            preferred_element_type=jnp.float32)          # (Tk, Tq)
    if hwp != hw:                                                        # mask padded kv cols
        kv_pos = ki * kv_tile + jax.lax.broadcasted_iota(jnp.int32, (kv_tile, 1), 0)
        s = jnp.where(kv_pos < hw, s, -1e30)

    m_new = jnp.maximum(m_sc[...], jnp.max(s, axis=0, keepdims=True))    # (1, Tq)
    alpha = jnp.exp(m_sc[...] - m_new)
    p = jnp.exp(s - m_new)                                               # (Tk, Tq)
    l_sc[...] = alpha * l_sc[...] + jnp.sum(p, axis=0, keepdims=True)
    acc_sc[...] = alpha * acc_sc[...] + jax.lax.dot_general(
        v, p.astype(jnp.bfloat16), (((1,), (0,)), ((), ())),
        preferred_element_type=jnp.float32)                              # (d, Tq)
    m_sc[...] = m_new

    @pl.when(ki == pl.num_programs(3) - 1)
    def _():
        o_ref[...] = (acc_sc[...] *
                      pl.reciprocal(l_sc[...], approx=True)).astype(o_ref.dtype)


def _attention(qkv, heads, dim_head, HW, HWp, scale, out_dtype):
    B = qkv.shape[0]
    d = dim_head
    # Free reshape: qkv channel layout is [q(h,d) | k(h,d) | v(h,d)].
    qkv_h = qkv.reshape(B, 3 * heads, d, HWp)
    q_tile = _pick_hw_tile(HWp, 512)
    kv_tile = _pick_hw_tile(HWp, 512)
    kernel = functools.partial(_flash_attn_kernel, scale=scale, kv_tile=kv_tile,
                               hw=HW, hwp=HWp)
    q_spec = pl.BlockSpec((pl.Squeezed(), pl.Squeezed(), d, q_tile),
                          lambda b, h, qi, ki: (b, h, 0, qi))
    k_spec = pl.BlockSpec((pl.Squeezed(), pl.Squeezed(), d, kv_tile),
                          lambda b, h, qi, ki: (b, heads + h, 0, ki))
    v_spec = pl.BlockSpec((pl.Squeezed(), pl.Squeezed(), d, kv_tile),
                          lambda b, h, qi, ki: (b, 2 * heads + h, 0, ki))
    o_spec = pl.BlockSpec((pl.Squeezed(), pl.Squeezed(), d, q_tile),
                          lambda b, h, qi, ki: (b, h, 0, qi))
    nb = (d * q_tile * 4, d * kv_tile * 4, d * kv_tile * 4, d * q_tile * 4,
          kv_tile * q_tile * 4)
    out = pl.pallas_call(
        kernel,
        out_shape=jax.ShapeDtypeStruct((B, heads, d, HWp), out_dtype),
        grid_spec=pltpu.PrefetchScalarGridSpec(
            num_scalar_prefetch=0,
            grid=(B, heads, HWp // q_tile, HWp // kv_tile),
            in_specs=[q_spec, k_spec, v_spec],
            out_specs=o_spec,
            scratch_shapes=[pltpu.VMEM((1, q_tile), jnp.float32),
                            pltpu.VMEM((1, q_tile), jnp.float32),
                            pltpu.VMEM((d, q_tile), jnp.float32)]),
        compiler_params=_cparams(("parallel", "parallel", "parallel", "arbitrary"), *nb),
    )(qkv_h, qkv_h, qkv_h)
    return out.reshape(B, heads * d, HWp)                                # free reshape


# ------------------------------------------------------- fused residual add + LayerNorm2 kernel
def _add_ln_kernel(a_ref, r_ref, w_ref, b_ref, sum_ref, y_ref, *, eps, use_mxu):
    s = a_ref[...].astype(jnp.float32) + r_ref[...].astype(jnp.float32)
    sum_ref[...] = s.astype(sum_ref.dtype)
    y_ref[...] = _ln_cf_math(s, w_ref[...].astype(jnp.float32),
                             b_ref[...].astype(jnp.float32),
                             eps=eps, use_mxu=use_mxu).astype(y_ref.dtype)


def _add_layernorm(a, r, w, b, eps, tile):
    B, C, HWp = a.shape
    kernel = functools.partial(_add_ln_kernel, eps=eps, use_mxu=(C >= _MXU_C_THRESHOLD))
    blk = pl.BlockSpec((pl.Squeezed(), C, tile), lambda n, t: (n, 0, t))
    nb = C * tile * 4
    return pl.pallas_call(
        kernel,
        out_shape=(jax.ShapeDtypeStruct((B, C, HWp), a.dtype),
                   jax.ShapeDtypeStruct((B, C, HWp), a.dtype)),
        grid_spec=pltpu.PrefetchScalarGridSpec(
            num_scalar_prefetch=0, grid=(B, HWp // tile),
            in_specs=[blk, blk,
                      pl.BlockSpec((C, 1), lambda n, t: (0, 0)),
                      pl.BlockSpec((C, 1), lambda n, t: (0, 0))],
            out_specs=[blk, blk]),
        compiler_params=_cparams(("parallel", "parallel"), nb, nb, nb, nb),
    )(a, r, w, b)


# ----------------------------------------- fused MLP tail: depthwise pos conv + GELUs + residual
def _mlp_tail_kernel(h_ref, res_ref, w9_ref, b_ref, rc_ref, o_ref, *, H, W):
    h = h_ref[...].astype(jnp.float32)                           # (c_tile, HWp)
    row = rc_ref[0:1, :]
    col = rc_ref[1:2, :]
    pos = _dw_flat_accum(h, w9_ref[...].astype(jnp.float32), row, col, H=H, W=W)
    pos = pos + b_ref[...].astype(jnp.float32)
    out = _gelu(h + _gelu(pos)) + res_ref[...].astype(jnp.float32)
    o_ref[...] = out.astype(o_ref.dtype)


def _mlp_tail(h, res, w9, b, rowcol, H, W, c_tile):
    B, C, HWp = h.shape
    kernel = functools.partial(_mlp_tail_kernel, H=H, W=W)
    blk = pl.BlockSpec((pl.Squeezed(), c_tile, HWp), lambda n, c: (n, c, 0))
    nb = c_tile * HWp * 4
    return pl.pallas_call(
        kernel,
        out_shape=jax.ShapeDtypeStruct((B, C, HWp), h.dtype),
        grid_spec=pltpu.PrefetchScalarGridSpec(
            num_scalar_prefetch=0, grid=(B, C // c_tile),
            in_specs=[blk, blk,
                      pl.BlockSpec((c_tile, 9), lambda n, c: (c, 0)),
                      pl.BlockSpec((c_tile, 1), lambda n, c: (c, 0)),
                      pl.BlockSpec((2, HWp), lambda n, c: (0, 0))],
            out_specs=blk),
        compiler_params=_cparams(("parallel", "parallel"), nb, nb, nb),
    )(h, res, w9, b, rowcol)


# ------------------------------------------------------------------------------------ full block
def basic_transformer_block(x, p, *, heads, dim_head, eps=1e-6):
    """Forward pass of BasicTransformerBlock. x: (B, C, H, W) with C == heads * dim_head."""
    B, C, H, W = x.shape
    assert C == heads * dim_head
    HW = H * W
    HWp, tile = _choose_hw_tiling(HW)
    c_tile = _pick_c_tile(C, HWp)
    dtype = x.dtype
    scale = float(dim_head) ** -0.5

    ln1_w = p["ln1_w"].reshape(C, 1).astype(jnp.float32)
    ln1_b = p["ln1_b"].reshape(C, 1).astype(jnp.float32)
    ln2_w = p["ln2_w"].reshape(C, 1).astype(jnp.float32)
    ln2_b = p["ln2_b"].reshape(C, 1).astype(jnp.float32)
    dw_qkv_w = p["dw_qkv_w"].reshape(C, 9).astype(jnp.float32)
    pw_qkv_w = p["pw_qkv_w"].reshape(3 * C, C).astype(jnp.bfloat16)   # MXU operand
    fc1_w = p["fc1_w"].reshape(C, C).astype(jnp.bfloat16)             # MXU operand
    fc1_b = p["fc1_b"].reshape(C, 1).astype(jnp.float32)
    pos_w = p["pos_w"].reshape(C, 9).astype(jnp.float32)
    pos_b = p["pos_b"].reshape(C, 1).astype(jnp.float32)

    xf = x.reshape(B, C, HW)
    if HWp != HW:
        xf = jnp.pad(xf, ((0, 0), (0, 0), (0, HWp - HW)))

    pos_idx = jnp.arange(HWp, dtype=jnp.int32)
    rowcol = jnp.stack([pos_idx // W, pos_idx % W])                    # (2, HWp) int32

    # ---- attention branch: fused [LN1 + depthwise 3x3] -> 1x1 QKV proj -> flash attention
    dwq = _ln1_dwconv(xf, ln1_w, ln1_b, dw_qkv_w, rowcol, H, W, eps)   # (B, C, HWp)
    qkv = _pointwise(dwq, pw_qkv_w, None, tile)                        # (B, 3C, HWp), no bias
    attn = _attention(qkv, heads, dim_head, HW, HWp, scale, dtype)     # (B, C, HWp)

    # ---- residual + second PreNorm fused: out1 = attn + x ; y = LN2(out1)
    out1, y = _add_layernorm(attn, xf, ln2_w, ln2_b, eps, tile)

    # ---- MLP: fc1 1x1 conv + GELU, then fused [dw pos conv + bias + GELUs + residual] tail
    h = _pointwise(y, fc1_w, fc1_b, tile, act="gelu")                  # (B, C, HWp)
    out = _mlp_tail(h, out1, pos_w, pos_b, rowcol, H, W, c_tile)       # (B, C, HWp)

    if HWp != HW:
        out = out[:, :, :HW]
    return out.reshape(B, C, H, W)


# ----------------------------------------------------------------------- pure-JAX reference
def _reference_block(x, p, *, heads, dim_head, eps=1e-6):
    B, C, H, W = x.shape
    HP = jax.lax.Precision.HIGHEST

    def ln_cf(t, w, b):
        u = jnp.mean(t, axis=1, keepdims=True)
        s = jnp.mean((t - u) ** 2, axis=1, keepdims=True)
        tn = (t - u) / jnp.sqrt(s + eps)
        return w[None, :, None, None] * tn + b[None, :, None, None]

    def dwconv(t, w, b=None):
        out = jax.lax.conv_general_dilated(
            t, w, window_strides=(1, 1), padding=((1, 1), (1, 1)),
            dimension_numbers=("NCHW", "OIHW", "NCHW"),
            feature_group_count=C, precision=HP)
        if b is not None:
            out = out + b[None, :, None, None]
        return out

    def pwconv(t, w, b=None):
        out = jnp.einsum("oc,bchw->bohw", w[:, :, 0, 0], t, precision=HP)
        if b is not None:
            out = out + b[None, :, None, None]
        return out

    gelu = lambda t: jax.nn.gelu(t, approximate=False)

    xn = ln_cf(x, p["ln1_w"], p["ln1_b"])
    qkv = pwconv(dwconv(xn, p["dw_qkv_w"]), p["pw_qkv_w"])
    q, k, v = jnp.split(qkv, 3, axis=1)

    def to_heads(t):
        return t.reshape(B, heads, dim_head, H * W).transpose(0, 1, 3, 2)

    q, k, v = map(to_heads, (q, k, v))
    dots = jnp.einsum("bhqd,bhkd->bhqk", q, k, precision=HP) * (dim_head ** -0.5)
    attn = jax.nn.softmax(dots, axis=-1)
    o = jnp.einsum("bhqk,bhkd->bhqd", attn, v, precision=HP)
    o = o.transpose(0, 1, 3, 2).reshape(B, C, H, W)

    out1 = o + x
    y = ln_cf(out1, p["ln2_w"], p["ln2_b"])
    h = gelu(pwconv(y, p["fc1_w"], p["fc1_b"]))
    h2 = h + gelu(dwconv(h, p["pos_w"], p["pos_b"]))
    return gelu(h2) + out1


if __name__ == "__main__":
    B, heads, dim_head, H, W = 2, 2, 8, 8, 8
    C = heads * dim_head  # rearrange in BasicAttention requires C == heads * dim_head
    # H*W = 64 < 128 also exercises the padded-column / masked-kv paths.

    key = jax.random.PRNGKey(0)
    ks = jax.random.split(key, 11)
    x = jax.random.normal(ks[0], (B, C, H, W), jnp.float32)
    params = {
        "ln1_w": 1.0 + 0.1 * jax.random.normal(ks[1], (C,), jnp.float32),
        "ln1_b": 0.1 * jax.random.normal(ks[2], (C,), jnp.float32),
        "dw_qkv_w": 0.3 * jax.random.normal(ks[3], (C, 1, 3, 3), jnp.float32),
        "pw_qkv_w": 0.3 * jax.random.normal(ks[4], (3 * C, C, 1, 1), jnp.float32),
        "ln2_w": 1.0 + 0.1 * jax.random.normal(ks[5], (C,), jnp.float32),
        "ln2_b": 0.1 * jax.random.normal(ks[6], (C,), jnp.float32),
        "fc1_w": 0.3 * jax.random.normal(ks[7], (C, C, 1, 1), jnp.float32),
        "fc1_b": 0.1 * jax.random.normal(ks[8], (C,), jnp.float32),
        "pos_w": 0.3 * jax.random.normal(ks[9], (C, 1, 3, 3), jnp.float32),
        "pos_b": 0.1 * jax.random.normal(ks[10], (C,), jnp.float32),
    }

    fwd = jax.jit(lambda xx, pp: basic_transformer_block(
        xx, pp, heads=heads, dim_head=dim_head))
    y = jax.block_until_ready(fwd(x, params))

    y_ref = _reference_block(x, params, heads=heads, dim_head=dim_head)
    assert y.shape == (B, C, H, W)
    # bf16 MXU operands + tanh-form GELU (per perf feedback) loosen bit-exactness vs the
    # f32/erf reference; these tolerances still catch any structural/indexing bug.
    err_max = float(jnp.max(jnp.abs(y - y_ref)))
    err_rel = float(jnp.linalg.norm(y - y_ref) / jnp.linalg.norm(y_ref))
    assert err_max < 1e-1, f"max abs err {err_max}"
    assert err_rel < 3e-2, f"relative Frobenius err {err_rel}"

    print("KERNEL_OK")
</pallas_src>

<mosaic_0001>
module attributes {stable_mosaic.version = 11 : i64} {
  func.func @kernel(%arg0: i32, %arg1: i32, %arg2: memref<1x16x128xf32, #tpu.memory_space<vmem>>, %arg3: memref<48x16xbf16, #tpu.memory_space<vmem>>, %arg4: memref<1x48x128xf32, #tpu.memory_space<vmem>>) attributes {dimension_semantics = [#tpu.dimension_semantics<parallel>, #tpu.dimension_semantics<parallel>], iteration_bounds = array<i64: 2, 1>, scalar_prefetch = 0 : i64, scratch_operands = 0 : i64, tpu.core_type = #tpu.core_type<tc>, window_params = [{transform_indices = @transform_0, window_bounds = array<i64: 1, 16, 128>}, {pipeline_mode = #tpu.pipeline_mode<synchronous>, transform_indices = @transform_1, window_bounds = array<i64: 48, 16>}, {transform_indices = @transform_2, window_bounds = array<i64: 1, 48, 128>}]} {
    %c0 = arith.constant 0 : index
    %c0_0 = arith.constant 0 : index
    %c0_1 = arith.constant 0 : index
    %0 = vector.load %arg2[%c0, %c0_0, %c0_1] : memref<1x16x128xf32, #tpu.memory_space<vmem>>, vector<1x16x128xf32>
    %1 = vector.shape_cast %0 : vector<1x16x128xf32> to vector<16x128xf32>
    %2 = arith.truncf %1 : vector<16x128xf32> to vector<16x128xbf16>
    %c0_2 = arith.constant 0 : index
    %c0_3 = arith.constant 0 : index
    %3 = vector.load %arg3[%c0_2, %c0_3] : memref<48x16xbf16, #tpu.memory_space<vmem>>, vector<48x16xbf16>
    %cst = arith.constant dense<0.000000e+00> : vector<48x128xf32>
    %4 = tpu.matmul %3, %2, %cst {dimension_numbers = #tpu.dot_dimension_numbers<[1], [0], [0], [1], [0, 0, 1, 1], [], []>} : vector<48x16xbf16>, vector<16x128xbf16>, vector<48x128xf32> -> vector<48x128xf32>
    %c0_4 = arith.constant 0 : index
    %c0_5 = arith.constant 0 : index
    %c0_6 = arith.constant 0 : index
    %5 = vector.load %arg4[%c0_4, %c0_5, %c0_6] : memref<1x48x128xf32, #tpu.memory_space<vmem>>, vector<1x48x128xf32>
    %6 = vector.shape_cast %5 : vector<1x48x128xf32> to vector<48x128xf32>
    %7 = vector.shape_cast %4 : vector<48x128xf32> to vector<1x48x128xf32>
    tpu.vector_store %arg4[%c0_4, %c0_5, %c0_6], %7 {strides = array<i32>} : memref<1x48x128xf32, #tpu.memory_space<vmem>>, vector<1x48x128xf32>,
    return
  }
  func.func @transform_0(%arg0: i32, %arg1: i32) -> (i32, i32, i32) {
    %c0_i32 = arith.constant 0 : i32
    %c0_i32_0 = arith.constant 0 : i32
    return %arg0, %c0_i32, %arg1 : i32, i32, i32
  }
  func.func @transform_1(%arg0: i32, %arg1: i32) -> (i32, i32) {
    %c0_i32 = arith.constant 0 : i32
    %c0_i32_0 = arith.constant 0 : i32
    %c0_i32_1 = arith.constant 0 : i32
    return %c0_i32, %c0_i32_0 : i32, i32
  }
  func.func @transform_2(%arg0: i32, %arg1: i32) -> (i32, i32, i32) {
    %c0_i32 = arith.constant 0 : i32
    %c0_i32_0 = arith.constant 0 : i32
    return %arg0, %c0_i32, %arg1 : i32, i32, i32
  }
}

module attributes {stable_mosaic.version = 11 : i64} {
  func.func @_flash_attn_kernel(%arg0: i32, %arg1: i32, %arg2: i32, %arg3: i32, %arg4: memref<1x1x8x128xf32, #tpu.memory_space<vmem>>, %arg5: memref<1x1x8x128xf32, #tpu.memory_space<vmem>>, %arg6: memref<1x1x8x128xf32, #tpu.memory_space<vmem>>, %arg7: memref<1x1x8x128xf32, #tpu.memory_space<vmem>>, %arg8: memref<1x128xf32, #tpu.memory_space<vmem>>, %arg9: memref<1x128xf32, #tpu.memory_space<vmem>>, %arg10: memref<8x128xf32, #tpu.memory_space<vmem>>) attributes {dimension_semantics = [#tpu.dimension_semantics<parallel>, #tpu.dimension_semantics<parallel>, #tpu.dimension_semantics<parallel>, #tpu.dimension_semantics<arbitrary>], iteration_bounds = array<i64: 2, 2, 1, 1>, scalar_prefetch = 0 : i64, scratch_operands = 3 : i64, tpu.core_type = #tpu.core_type<tc>, window_params = [{transform_indices = @transform_0, window_bounds = array<i64: 1, 1, 8, 128>}, {transform_indices = @transform_1, window_bounds = array<i64: 1, 1, 8, 128>}, {transform_indices = @transform_2, window_bounds = array<i64: 1, 1, 8, 128>}, {transform_indices = @transform_3, window_bounds = array<i64: 1, 1, 8, 128>}]} {
    %c0_i32 = arith.constant 0 : i32
    %0 = arith.cmpi eq, %arg3, %c0_i32 : i32
    %1 = arith.extui %0 : i1 to i32
    %c0_i32_0 = arith.constant 0 : i32
    %2 = arith.cmpi ne, %1, %c0_i32_0 : i32
    scf.if %2 {
      %cst_33 = arith.constant 0xFF800000 : f32
      %52 = vector.broadcast %cst_33 : f32 to vector<1x128xf32>
      %c0_34 = arith.constant 0 : index
      %c0_35 = arith.constant 0 : index
      %53 = vector.load %arg8[%c0_34, %c0_35] : memref<1x128xf32, #tpu.memory_space<vmem>>, vector<1x128xf32>
      tpu.vector_store %arg8[%c0_34, %c0_35], %52 {strides = array<i32>} : memref<1x128xf32, #tpu.memory_space<vmem>>, vector<1x128xf32>,
      %cst_36 = arith.constant 0.000000e+00 : f32
      %54 = vector.broadcast %cst_36 : f32 to vector<1x128xf32>
      %c0_37 = arith.constant 0 : index
      %c0_38 = arith.constant 0 : index
      %55 = vector.load %arg9[%c0_37, %c0_38] : memref<1x128xf32, #tpu.memory_space<vmem>>, vector<1x128xf32>
      tpu.vector_store %arg9[%c0_37, %c0_38], %54 {strides = array<i32>} : memref<1x128xf32, #tpu.memory_space<vmem>>, vector<1x128xf32>,
      %cst_39 = arith.constant 0.000000e+00 : f32
      %56 = vector.broadcast %cst_39 : f32 to vector<8x128xf32>
      %c0_40 = arith.constant 0 : index
      %c0_41 = arith.constant 0 : index
      %57 = vector.load %arg10[%c0_40, %c0_41] : memref<8x128xf32, #tpu.memory_space<vmem>>, vector<8x128xf32>
      tpu.vector_store %arg10[%c0_40, %c0_41], %56 {strides = array<i32>} : memref<8x128xf32, #tpu.memory_space<vmem>>, vector<8x128xf32>,
    } else {
    }
    %c0 = arith.constant 0 : index
    %c0_1 = arith.constant 0 : index
    %c0_2 = arith.constant 0 : index
    %c0_3 = arith.constant 0 : index
    %3 = vector.load %arg4[%c0, %c0_1, %c0_2, %c0_3] : memref<1x1x8x128xf32, #tpu.memory_space<vmem>>, vector<1x1x8x128xf32>
    %4 = vector.shape_cast %3 : vector<1x1x8x128xf32> to vector<8x128xf32>
    %cst = arith.constant 0.353553385 : f32
    %5 = vector.broadcast %cst : f32 to vector<8x128xf32>
    %6 = arith.mulf %4, %5 : vector<8x128xf32>
    %7 = arith.truncf %6 : vector<8x128xf32> to vector<8x128xbf16>
    %c0_4 = arith.constant 0 : index
    %c0_5 = arith.constant 0 : index
    %c0_6 = arith.constant 0 : index
    %c0_7 = arith.constant 0 : index
    %8 = vector.load %arg5[%c0_4, %c0_5, %c0_6, %c0_7] : memref<1x1x8x128xf32, #tpu.memory_space<vmem>>, vector<1x1x8x128xf32>
    %9 = vector.shape_cast %8 : vector<1x1x8x128xf32> to vector<8x128xf32>
    %10 = arith.truncf %9 : vector<8x128xf32> to vector<8x128xbf16>
    %c0_8 = arith.constant 0 : index
    %c0_9 = arith.constant 0 : index
    %c0_10 = arith.constant 0 : index
    %c0_11 = arith.constant 0 : index
    %11 = vector.load %arg6[%c0_8, %c0_9, %c0_10, %c0_11] : memref<1x1x8x128xf32, #tpu.memory_space<vmem>>, vector<1x1x8x128xf32>
    %12 = vector.shape_cast %11 : vector<1x1x8x128xf32> to vector<8x128xf32>
    %13 = arith.truncf %12 : vector<8x128xf32> to vector<8x128xbf16>
    %cst_12 = arith.constant dense<0.000000e+00> : vector<128x128xf32>
    %14 = tpu.matmul %10, %7, %cst_12 {dimension_numbers = #tpu.dot_dimension_numbers<[0], [0], [1], [1], [0, 1, 1, 1], [], []>} : vector<8x128xbf16>, vector<8x128xbf16>, vector<128x128xf32> -> vector<128x128xf32>
    %c128_i32 = arith.constant 128 : i32
    %15 = arith.muli %arg3, %c128_i32 : i32
    %16 = tpu.iota {dimensions = array<i32: 0>} : vector<128x1xi32>
    %17 = vector.broadcast %15 : i32 to vector<128x1xi32>
    %18 = arith.addi %17, %16 : vector<128x1xi32>
    %c64_i32 = arith.constant 64 : i32
    %19 = vector.broadcast %c64_i32 : i32 to vector<128x1xi32>
    %20 = arith.cmpi slt, %18, %19 : vector<128x1xi32>
    %cst_13 = arith.constant -1.000000e+30 : f32
    %21 = vector.shape_cast %20 : vector<128x1xi1> to vector<128x1xi1>
    %22 = vector.broadcast %21 : vector<128x1xi1> to vector<128x128xi1>
    %23 = vector.broadcast %cst_13 : f32 to vector<128x128xf32>
    %24 = arith.select %22, %14, %23 : vector<128x128xi1>, vector<128x128xf32>
    %c0_14 = arith.constant 0 : index
    %c0_15 = arith.constant 0 : index
    %25 = vector.load %arg8[%c0_14, %c0_15] : memref<1x128xf32, #tpu.memory_space<vmem>>, vector<1x128xf32>
    %cst_16 = arith.constant dense<0xFF800000> : vector<128xf32>
    %26 = vector.multi_reduction <maximumf>, %24, %cst_16 [0] : vector<128x128xf32> to vector<128xf32>
    %27 = vector.shape_cast %26 : vector<128xf32> to vector<1x128xf32>
    %28 = arith.maximumf %25, %27 : vector<1x128xf32>
    %c0_17 = arith.constant 0 : index
    %c0_18 = arith.constant 0 : index
    %29 = vector.load %arg8[%c0_17, %c0_18] : memref<1x128xf32, #tpu.memory_space<vmem>>, vector<1x128xf32>
    %30 = arith.subf %29, %28 : vector<1x128xf32>
    %31 = math.exp %30 : vector<1x128xf32>
    %32 = vector.broadcast %28 : vector<1x128xf32> to vector<128x128xf32>
    %33 = arith.subf %24, %32 : vector<128x128xf32>
    %34 = math.exp %33 : vector<128x128xf32>
    %c0_19 = arith.constant 0 : index
    %c0_20 = arith.constant 0 : index
    %35 = vector.load %arg9[%c0_19, %c0_20] : memref<1x128xf32, #tpu.memory_space<vmem>>, vector<1x128xf32>
    %36 = arith.mulf %31, %35 : vector<1x128xf32>
    %cst_21 = arith.constant dense<0.000000e+00> : vector<128xf32>
    %37 = vector.multi_reduction <add>, %34, %cst_21 [0] : vector<128x128xf32> to vector<128xf32>
    %38 = vector.shape_cast %37 : vector<128xf32> to vector<1x128xf32>
    %39 = arith.addf %36, %38 : vector<1x128xf32>
    %c0_22 = arith.constant 0 : index
    %c0_23 = arith.constant 0 : index
    %40 = vector.load %arg9[%c0_22, %c0_23] : memref<1x128xf32, #tpu.memory_space<vmem>>, vector<1x128xf32>
    tpu.vector_store %arg9[%c0_22, %c0_23], %39 {strides = array<i32>} : memref<1x128xf32, #tpu.memory_space<vmem>>, vector<1x128xf32>,
    %c0_24 = arith.constant 0 : index
    %c0_25 = arith.constant 0 : index
    %41 = vector.load %arg10[%c0_24, %c0_25] : memref<8x128xf32, #tpu.memory_space<vmem>>, vector<8x128xf32>
    %42 = vector.broadcast %31 : vector<1x128xf32> to vector<8x128xf32>
    %43 = arith.mulf %42, %41 : vector<8x128xf32>
    %44 = arith.truncf %34 : vector<128x128xf32> to vector<128x128xbf16>
    %cst_26 = arith.constant dense<0.000000e+00> : vector<8x128xf32>
    %45 = tpu.matmul %13, %44, %cst_26 {dimension_numbers = #tpu.dot_dimension_numbers<[1], [0], [0], [1], [0, 0, 1, 1], [], []>} : vector<8x128xbf16>, vector<128x128xbf16>, vector<8x128xf32> -> vector<8x128xf32>
    %46 = arith.addf %43, %45 : vector<8x128xf32>
    %c0_27 = arith.constant 0 : index
    %c0_28 = arith.constant 0 : index
    %47 = vector.load %arg10[%c0_27, %c0_28] : memref<8x128xf32, #tpu.memory_space<vmem>>, vector<8x128xf32>
    tpu.vector_store %arg10[%c0_27, %c0_28], %46 {strides = array<i32>} : memref<8x128xf32, #tpu.memory_space<vmem>>, vector<8x128xf32>,
    %c0_29 = arith.constant 0 : index
    %c0_30 = arith.constant 0 : index
    %48 = vector.load %arg8[%c0_29, %c0_30] : memref<1x128xf32, #tpu.memory_space<vmem>>, vector<1x128xf32>
    tpu.vector_store %arg8[%c0_29, %c0_30], %28 {strides = array<i32>} : memref<1x128xf32, #tpu.memory_space<vmem>>, vector<1x128xf32>,
    %c0_i32_31 = arith.constant 0 : i32
    %49 = arith.cmpi eq, %arg3, %c0_i32_31 : i32
    %50 = arith.extui %49 : i1 to i32
    %c0_i32_32 = arith.constant 0 : i32
    %51 = arith.cmpi ne, %50, %c0_i32_32 : i32
    scf.if %51 {
      %c0_33 = arith.constant 0 : index
      %c0_34 = arith.constant 0 : index
      %52 = vector.load %arg10[%c0_33, %c0_34] : memref<8x128xf32, #tpu.memory_space<vmem>>, vector<8x128xf32>
      %c0_35 = arith.constant 0 : index
      %c0_36 = arith.constant 0 : index
      %53 = vector.load %arg9[%c0_35, %c0_36] : memref<1x128xf32, #tpu.memory_space<vmem>>, vector<1x128xf32>
      %54 = tpu.reciprocal %53 {approx = true} : vector<1x128xf32> -> vector<1x128xf32>
      %55 = vector.broadcast %54 : vector<1x128xf32> to vector<8x128xf32>
      %56 = arith.mulf %52, %55 : vector<8x128xf32>
      %c0_37 = arith.constant 0 : index
      %c0_38 = arith.constant 0 : index
      %c0_39 = arith.constant 0 : index
      %c0_40 = arith.constant 0 : index
      %57 = vector.load %arg7[%c0_37, %c0_38, %c0_39, %c0_40] : memref<1x1x8x128xf32, #tpu.memory_space<vmem>>, vector<1x1x8x128xf32>
      %58 = vector.shape_cast %57 : vector<1x1x8x128xf32> to vector<8x128xf32>
      %59 = vector.shape_cast %56 : vector<8x128xf32> to vector<1x1x8x128xf32>
      tpu.vector_store %arg7[%c0_37, %c0_38, %c0_39, %c0_40], %59 {strides = array<i32>} : memref<1x1x8x128xf32, #tpu.memory_space<vmem>>, vector<1x1x8x128xf32>,
    } else {
    }
    return
  }
  func.func @transform_0(%arg0: i32, %arg1: i32, %arg2: i32, %arg3: i32) -> (i32, i32, i32, i32) {
    %c0_i32 = arith.constant 0 : i32
    %c0_i32_0 = arith.constant 0 : i32
    return %arg0, %arg1, %c0_i32, %arg2 : i32, i32, i32, i32
  }
  func.func @transform_1(%arg0: i32, %arg1: i32, %arg2: i32, %arg3: i32) -> (i32, i32, i32, i32) {
    %c2_i32 = arith.constant 2 : i32
    %0 = arith.addi %c2_i32, %arg1 : i32
    %c0_i32 = arith.constant 0 : i32
    %c0_i32_0 = arith.constant 0 : i32
    return %arg0, %0, %c0_i32, %arg3 : i32, i32, i32, i32
  }
  func.func @transform_2(%arg0: i32, %arg1: i32, %arg2: i32, %arg3: i32) -> (i32, i32, i32, i32) {
    %c4_i32 = arith.constant 4 : i32
    %0 = arith.addi %c4_i32, %arg1 : i32
    %c0_i32 = arith.constant 0 : i32
    %c0_i32_0 = arith.constant 0 : i32
    return %arg0, %0, %c0_i32, %arg3 : i32, i32, i32, i32
  }
  func.func @transform_3(%arg0: i32, %arg1: i32, %arg2: i32, %arg3: i32) -> (i32, i32, i32, i32) {
    %c0_i32 = arith.constant 0 : i32
    %c0_i32_0 = arith.constant 0 : i32
    return %arg0, %arg1, %c0_i32, %arg2 : i32, i32, i32, i32
  }
}

module attributes {stable_mosaic.version = 11 : i64} {
  func.func @_ln_dw_kernel(%arg0: i32, %arg1: memref<1x16x128xf32, #tpu.memory_space<vmem>>, %arg2: memref<16x1xf32, #tpu.memory_space<vmem>>, %arg3: memref<16x1xf32, #tpu.memory_space<vmem>>, %arg4: memref<16x9xf32, #tpu.memory_space<vmem>>, %arg5: memref<2x128xi32, #tpu.memory_space<vmem>>, %arg6: memref<1x16x128xf32, #tpu.memory_space<vmem>>) attributes {dimension_semantics = [#tpu.dimension_semantics<parallel>], iteration_bounds = array<i64: 2>, scalar_prefetch = 0 : i64, scratch_operands = 0 : i64, tpu.core_type = #tpu.core_type<tc>, window_params = [{transform_indices = @transform_0, window_bounds = array<i64: 1, 16, 128>}, {pipeline_mode = #tpu.pipeline_mode<synchronous>, transform_indices = @transform_1, window_bounds = array<i64: 16, 1>}, {pipeline_mode = #tpu.pipeline_mode<synchronous>, transform_indices = @transform_2, window_bounds = array<i64: 16, 1>}, {pipeline_mode = #tpu.pipeline_mode<synchronous>, transform_indices = @transform_3, window_bounds = array<i64: 16, 9>}, {pipeline_mode = #tpu.pipeline_mode<synchronous>, transform_indices = @transform_4, window_bounds = array<i64: 2, 128>}, {transform_indices = @transform_5, window_bounds = array<i64: 1, 16, 128>}]} {
    %c0 = arith.constant 0 : index
    %c0_0 = arith.constant 0 : index
    %c0_1 = arith.constant 0 : index
    %0 = vector.load %arg1[%c0, %c0_0, %c0_1] : memref<1x16x128xf32, #tpu.memory_space<vmem>>, vector<1x16x128xf32>
    %1 = vector.shape_cast %0 : vector<1x16x128xf32> to vector<16x128xf32>
    %c0_2 = arith.constant 0 : index
    %c0_3 = arith.constant 0 : index
    %2 = vector.load %arg2[%c0_2, %c0_3] : memref<16x1xf32, #tpu.memory_space<vmem>>, vector<16x1xf32>
    %c0_4 = arith.constant 0 : index
    %c0_5 = arith.constant 0 : index
    %3 = vector.load %arg3[%c0_4, %c0_5] : memref<16x1xf32, #tpu.memory_space<vmem>>, vector<16x1xf32>
    %cst = arith.constant dense<0.000000e+00> : vector<128xf32>
    %4 = vector.multi_reduction <add>, %1, %cst [0] : vector<16x128xf32> to vector<128xf32>
    %5 = vector.shape_cast %4 : vector<128xf32> to vector<1x128xf32>
    %cst_6 = arith.constant 1.600000e+01 : f32
    %6 = vector.broadcast %cst_6 : f32 to vector<1x128xf32>
    %7 = arith.divf %5, %6 : vector<1x128xf32>
    %8 = vector.broadcast %7 : vector<1x128xf32> to vector<16x128xf32>
    %9 = arith.subf %1, %8 : vector<16x128xf32>
    %10 = arith.mulf %9, %9 : vector<16x128xf32>
    %cst_7 = arith.constant dense<0.000000e+00> : vector<128xf32>
    %11 = vector.multi_reduction <add>, %10, %cst_7 [0] : vector<16x128xf32> to vector<128xf32>
    %12 = vector.shape_cast %11 : vector<128xf32> to vector<1x128xf32>
    %cst_8 = arith.constant 1.600000e+01 : f32
    %13 = vector.broadcast %cst_8 : f32 to vector<1x128xf32>
    %14 = arith.divf %12, %13 : vector<1x128xf32>
    %cst_9 = arith.constant 9.99999997E-7 : f32
    %15 = vector.broadcast %cst_9 : f32 to vector<1x128xf32>
    %16 = arith.addf %14, %15 : vector<1x128xf32>
    %17 = math.rsqrt %16 : vector<1x128xf32>
    %18 = vector.broadcast %17 : vector<1x128xf32> to vector<16x128xf32>
    %19 = arith.mulf %9, %18 : vector<16x128xf32>
    %20 = vector.broadcast %2 : vector<16x1xf32> to vector<16x128xf32>
    %21 = arith.mulf %20, %19 : vector<16x128xf32>
    %22 = vector.broadcast %3 : vector<16x1xf32> to vector<16x128xf32>
    %23 = arith.addf %21, %22 : vector<16x128xf32>
    %c0_10 = arith.constant 0 : index
    %c0_11 = arith.constant 0 : index
    %24 = vector.load %arg5[%c0_10, %c0_11] : memref<2x128xi32, #tpu.memory_space<vmem>>, vector<1x128xi32>
    %c1 = arith.constant 1 : index
    %c0_12 = arith.constant 0 : index
    %25 = vector.load %arg5[%c1, %c0_12] : memref<2x128xi32, #tpu.memory_space<vmem>>, vector<1x128xi32>
    %c0_13 = arith.constant 0 : index
    %c0_14 = arith.constant 0 : index
    %26 = vector.load %arg4[%c0_13, %c0_14] : memref<16x9xf32, #tpu.memory_space<vmem>>, vector<16x9xf32>
    %27 = vector.extract_strided_slice %26 {offsets = [0, 4], sizes = [16, 1], strides = [1, 1]} : vector<16x9xf32> to vector<16x1xf32>
    %28 = vector.broadcast %27 : vector<16x1xf32> to vector<16x128xf32>
    %29 = arith.mulf %23, %28 : vector<16x128xf32>
    %c9_i32 = arith.constant 9 : i32
    %30 = tpu.dynamic_rotate %23 by %c9_i32 dim 1 : vector<16x128xf32>, i32 -> vector<16x128xf32>
    %c0_i32 = arith.constant 0 : i32
    %31 = vector.broadcast %c0_i32 : i32 to vector<1x128xi32>
    %32 = arith.cmpi sgt, %25, %31 : vector<1x128xi32>
    %c0_i32_15 = arith.constant 0 : i32
    %33 = vector.broadcast %c0_i32_15 : i32 to vector<1x128xi32>
    %34 = arith.cmpi sgt, %24, %33 : vector<1x128xi32>
    %35 = arith.andi %32, %34 : vector<1x128xi1>
    %cst_16 = arith.constant 0.000000e+00 : f32
    %36 = vector.shape_cast %35 : vector<1x128xi1> to vector<1x128xi1>
    %37 = vector.broadcast %36 : vector<1x128xi1> to vector<16x128xi1>
    %38 = vector.broadcast %cst_16 : f32 to vector<16x128xf32>
    %39 = arith.select %37, %30, %38 : vector<16x128xi1>, vector<16x128xf32>
    %40 = vector.extract_strided_slice %26 {offsets = [0, 0], sizes = [16, 1], strides = [1, 1]} : vector<16x9xf32> to vector<16x1xf32>
    %41 = vector.broadcast %40 : vector<16x1xf32> to vector<16x128xf32>
    %42 = arith.mulf %39, %41 : vector<16x128xf32>
    %43 = arith.addf %29, %42 : vector<16x128xf32>
    %c8_i32 = arith.constant 8 : i32
    %44 = tpu.dynamic_rotate %23 by %c8_i32 dim 1 : vector<16x128xf32>, i32 -> vector<16x128xf32>
    %c0_i32_17 = arith.constant 0 : i32
    %45 = vector.broadcast %c0_i32_17 : i32 to vector<1x128xi32>
    %46 = arith.cmpi sgt, %24, %45 : vector<1x128xi32>
    %cst_18 = arith.constant 0.000000e+00 : f32
    %47 = vector.shape_cast %46 : vector<1x128xi1> to vector<1x128xi1>
    %48 = vector.broadcast %47 : vector<1x128xi1> to vector<16x128xi1>
    %49 = vector.broadcast %cst_18 : f32 to vector<16x128xf32>
    %50 = arith.select %48, %44, %49 : vector<16x128xi1>, vector<16x128xf32>
    %51 = vector.extract_strided_slice %26 {offsets = [0, 1], sizes = [16, 1], strides = [1, 1]} : vector<16x9xf32> to vector<16x1xf32>
    %52 = vector.broadcast %51 : vector<16x1xf32> to vector<16x128xf32>
    %53 = arith.mulf %50, %52 : vector<16x128xf32>
    %54 = arith.addf %43, %53 : vector<16x128xf32>
    %c7_i32 = arith.constant 7 : i32
    %55 = tpu.dynamic_rotate %23 by %c7_i32 dim 1 : vector<16x128xf32>, i32 -> vector<16x128xf32>
    %c7_i32_19 = arith.constant 7 : i32
    %56 = vector.broadcast %c7_i32_19 : i32 to vector<1x128xi32>
    %57 = arith.cmpi slt, %25, %56 : vector<1x128xi32>
    %c0_i32_20 = arith.constant 0 : i32
    %58 = vector.broadcast %c0_i32_20 : i32 to vector<1x128xi32>
    %59 = arith.cmpi sgt, %24, %58 : vector<1x128xi32>
    %60 = arith.andi %57, %59 : vector<1x128xi1>
    %cst_21 = arith.constant 0.000000e+00 : f32
    %61 = vector.shape_cast %60 : vector<1x128xi1> to vector<1x128xi1>
    %62 = vector.broadcast %61 : vector<1x128xi1> to vector<16x128xi1>
    %63 = vector.broadcast %cst_21 : f32 to vector<16x128xf32>
    %64 = arith.select %62, %55, %63 : vector<16x128xi1>, vector<16x128xf32>
    %65 = vector.extract_strided_slice %26 {offsets = [0, 2], sizes = [16, 1], strides = [1, 1]} : vector<16x9xf32> to vector<16x1xf32>
    %66 = vector.broadcast %65 : vector<16x1xf32> to vector<16x128xf32>
    %67 = arith.mulf %64, %66 : vector<16x128xf32>
    %68 = arith.addf %54, %67 : vector<16x128xf32>
    %c1_i32 = arith.constant 1 : i32
    %69 = tpu.dynamic_rotate %23 by %c1_i32 dim 1 : vector<16x128xf32>, i32 -> vector<16x128xf32>
    %c0_i32_22 = arith.constant 0 : i32
    %70 = vector.broadcast %c0_i32_22 : i32 to vector<1x128xi32>
    %71 = arith.cmpi sgt, %25, %70 : vector<1x128xi32>
    %cst_23 = arith.constant 0.000000e+00 : f32
    %72 = vector.shape_cast %71 : vector<1x128xi1> to vector<1x128xi1>
    %73 = vector.broadcast %72 : vector<1x128xi1> to vector<16x128xi1>
    %74 = vector.broadcast %cst_23 : f32 to vector<16x128xf32>
    %75 = arith.select %73, %69, %74 : vector<16x128xi1>, vector<16x128xf32>
    %76 = vector.extract_strided_slice %26 {offsets = [0, 3], sizes = [16, 1], strides = [1, 1]} : vector<16x9xf32> to vector<16x1xf32>
    %77 = vector.broadcast %76 : vector<16x1xf32> to vector<16x128xf32>
    %78 = arith.mulf %75, %77 : vector<16x128xf32>
    %79 = arith.addf %68, %78 : vector<16x128xf32>
    %c127_i32 = arith.constant 127 : i32
    %80 = tpu.dynamic_rotate %23 by %c127_i32 dim 1 : vector<16x128xf32>, i32 -> vector<16x128xf32>
    %c7_i32_24 = arith.constant 7 : i32
    %81 = vector.broadcast %c7_i32_24 : i32 to vector<1x128xi32>
    %82 = arith.cmpi slt, %25, %81 : vector<1x128xi32>
    %cst_25 = arith.constant 0.000000e+00 : f32
    %83 = vector.shape_cast %82 : vector<1x128xi1> to vector<1x128xi1>
    %84 = vector.broadcast %83 : vector<1x128xi1> to vector<16x128xi1>
    %85 = vector.broadcast %cst_25 : f32 to vector<16x128xf32>
    %86 = arith.select %84, %80, %85 : vector<16x128xi1>, vector<16x128xf32>
    %87 = vector.extract_strided_slice %26 {offsets = [0, 5], sizes = [16, 1], strides = [1, 1]} : vector<16x9xf32> to vector<16x1xf32>
    %88 = vector.broadcast %87 : vector<16x1xf32> to vector<16x128xf32>
    %89 = arith.mulf %86, %88 : vector<16x128xf32>
    %90 = arith.addf %79, %89 : vector<16x128xf32>
    %c121_i32 = arith.constant 121 : i32
    %91 = tpu.dynamic_rotate %23 by %c121_i32 dim 1 : vector<16x128xf32>, i32 -> vector<16x128xf32>
    %c0_i32_26 = arith.constant 0 : i32
    %92 = vector.broadcast %c0_i32_26 : i32 to vector<1x128xi32>
    %93 = arith.cmpi sgt, %25, %92 : vector<1x128xi32>
    %c7_i32_27 = arith.constant 7 : i32
    %94 = vector.broadcast %c7_i32_27 : i32 to vector<1x128xi32>
    %95 = arith.cmpi slt, %24, %94 : vector<1x128xi32>
    %96 = arith.andi %93, %95 : vector<1x128xi1>
    %cst_28 = arith.constant 0.000000e+00 : f32
    %97 = vector.shape_cast %96 : vector<1x128xi1> to vector<1x128xi1>
    %98 = vector.broadcast %97 : vector<1x128xi1> to vector<16x128xi1>
    %99 = vector.broadcast %cst_28 : f32 to vector<16x128xf32>
    %100 = arith.select %98, %91, %99 : vector<16x128xi1>, vector<16x128xf32>
    %101 = vector.extract_strided_slice %26 {offsets = [0, 6], sizes = [16, 1], strides = [1, 1]} : vector<16x9xf32> to vector<16x1xf32>
    %102 = vector.broadcast %101 : vector<16x1xf32> to vector<16x128xf32>
    %103 = arith.mulf %100, %102 : vector<16x128xf32>
    %104 = arith.addf %90, %103 : vector<16x128xf32>
    %c120_i32 = arith.constant 120 : i32
    %105 = tpu.dynamic_rotate %23 by %c120_i32 dim 1 : vector<16x128xf32>, i32 -> vector<16x128xf32>
    %c7_i32_29 = arith.constant 7 : i32
    %106 = vector.broadcast %c7_i32_29 : i32 to vector<1x128xi32>
    %107 = arith.cmpi slt, %24, %106 : vector<1x128xi32>
    %cst_30 = arith.constant 0.000000e+00 : f32
    %108 = vector.shape_cast %107 : vector<1x128xi1> to vector<1x128xi1>
    %109 = vector.broadcast %108 : vector<1x128xi1> to vector<16x128xi1>
    %110 = vector.broadcast %cst_30 : f32 to vector<16x128xf32>
    %111 = arith.select %109, %105, %110 : vector<16x128xi1>, vector<16x128xf32>
    %112 = vector.extract_strided_slice %26 {offsets = [0, 7], sizes = [16, 1], strides = [1, 1]} : vector<16x9xf32> to vector<16x1xf32>
    %113 = vector.broadcast %112 : vector<16x1xf32> to vector<16x128xf32>
    %114 = arith.mulf %111, %113 : vector<16x128xf32>
    %115 = arith.addf %104, %114 : vector<16x128xf32>
    %c119_i32 = arith.constant 119 : i32
    %116 = tpu.dynamic_rotate %23 by %c119_i32 dim 1 : vector<16x128xf32>, i32 -> vector<16x128xf32>
    %c7_i32_31 = arith.constant 7 : i32
    %117 = vector.broadcast %c7_i32_31 : i32 to vector<1x128xi32>
    %118 = arith.cmpi slt, %25, %117 : vector<1x128xi32>
    %c7_i32_32 = arith.constant 7 : i32
    %119 = vector.broadcast %c7_i32_32 : i32 to vector<1x128xi32>
    %120 = arith.cmpi slt, %24, %119 : vector<1x128xi32>
    %121 = arith.andi %118, %120 : vector<1x128xi1>
    %cst_33 = arith.constant 0.000000e+00 : f32
    %122 = vector.shape_cast %121 : vector<1x128xi1> to vector<1x128xi1>
    %123 = vector.broadcast %122 : vector<1x128xi1> to vector<16x128xi1>
    %124 = vector.broadcast %cst_33 : f32 to vector<16x128xf32>
    %125 = arith.select %123, %116, %124 : vector<16x128xi1>, vector<16x128xf32>
    %126 = vector.extract_strided_slice %26 {offsets = [0, 8], sizes = [16, 1], strides = [1, 1]} : vector<16x9xf32> to vector<16x1xf32>
    %127 = vector.broadcast %126 : vector<16x1xf32> to vector<16x128xf32>
    %128 = arith.mulf %125, %127 : vector<16x128xf32>
    %129 = arith.addf %115, %128 : vector<16x128xf32>
    %c0_34 = arith.constant 0 : index
    %c0_35 = arith.constant 0 : index
    %c0_36 = arith.constant 0 : index
    %130 = vector.load %arg6[%c0_34, %c0_35, %c0_36] : memref<1x16x128xf32, #tpu.memory_space<vmem>>, vector<1x16x128xf32>
    %131 = vector.shape_cast %130 : vector<1x16x128xf32> to vector<16x128xf32>
    %132 = vector.shape_cast %129 : vector<16x128xf32> to vector<1x16x128xf32>
    tpu.vector_store %arg6[%c0_34, %c0_35, %c0_36], %132 {strides = array<i32>} : memref<1x16x128xf32, #tpu.memory_space<vmem>>, vector<1x16x128xf32>,
    return
  }
  func.func @transform_0(%arg0: i32) -> (i32, i32, i32) {
    %c0_i32 = arith.constant 0 : i32
    %c0_i32_0 = arith.constant 0 : i32
    %c0_i32_1 = arith.constant 0 : i32
    return %arg0, %c0_i32, %c0_i32_0 : i32, i32, i32
  }
  func.func @transform_1(%arg0: i32) -> (i32, i32) {
    %c0_i32 = arith.constant 0 : i32
    %c0_i32_0 = arith.constant 0 : i32
    %c0_i32_1 = arith.constant 0 : i32
    return %c0_i32, %c0_i32_0 : i32, i32
  }
  func.func @transform_2(%arg0: i32) -> (i32, i32) {
    %c0_i32 = arith.constant 0 : i32
    %c0_i32_0 = arith.constant 0 : i32
    %c0_i32_1 = arith.constant 0 : i32
    return %c0_i32, %c0_i32_0 : i32, i32
  }
  func.func @transform_3(%arg0: i32) -> (i32, i32) {
    %c0_i32 = arith.constant 0 : i32
    %c0_i32_0 = arith.constant 0 : i32
    %c0_i32_1 = arith.constant 0 : i32
    return %c0_i32, %c0_i32_0 : i32, i32
  }
  func.func @transform_4(%arg0: i32) -> (i32, i32) {
    %c0_i32 = arith.constant 0 : i32
    %c0_i32_0 = arith.constant 0 : i32
    %c0_i32_1 = arith.constant 0 : i32
    return %c0_i32, %c0_i32_0 : i32, i32
  }
  func.func @transform_5(%arg0: i32) -> (i32, i32, i32) {
    %c0_i32 = arith.constant 0 : i32
    %c0_i32_0 = arith.constant 0 : i32
    %c0_i32_1 = arith.constant 0 : i32
    return %arg0, %c0_i32, %c0_i32_0 : i32, i32, i32
  }
}

module attributes {stable_mosaic.version = 11 : i64} {
  func.func @_add_ln_kernel(%arg0: i32, %arg1: i32, %arg2: memref<1x16x128xf32, #tpu.memory_space<vmem>>, %arg3: memref<1x16x128xf32, #tpu.memory_space<vmem>>, %arg4: memref<16x1xf32, #tpu.memory_space<vmem>>, %arg5: memref<16x1xf32, #tpu.memory_space<vmem>>, %arg6: memref<1x16x128xf32, #tpu.memory_space<vmem>>, %arg7: memref<1x16x128xf32, #tpu.memory_space<vmem>>) attributes {dimension_semantics = [#tpu.dimension_semantics<parallel>, #tpu.dimension_semantics<parallel>], iteration_bounds = array<i64: 2, 1>, scalar_prefetch = 0 : i64, scratch_operands = 0 : i64, tpu.core_type = #tpu.core_type<tc>, window_params = [{transform_indices = @transform_0, window_bounds = array<i64: 1, 16, 128>}, {transform_indices = @transform_1, window_bounds = array<i64: 1, 16, 128>}, {pipeline_mode = #tpu.pipeline_mode<synchronous>, transform_indices = @transform_2, window_bounds = array<i64: 16, 1>}, {pipeline_mode = #tpu.pipeline_mode<synchronous>, transform_indices = @transform_3, window_bounds = array<i64: 16, 1>}, {transform_indices = @transform_4, window_bounds = array<i64: 1, 16, 128>}, {transform_indices = @transform_5, window_bounds = array<i64: 1, 16, 128>}]} {
    %c0 = arith.constant 0 : index
    %c0_0 = arith.constant 0 : index
    %c0_1 = arith.constant 0 : index
    %0 = vector.load %arg2[%c0, %c0_0, %c0_1] : memref<1x16x128xf32, #tpu.memory_space<vmem>>, vector<1x16x128xf32>
    %1 = vector.shape_cast %0 : vector<1x16x128xf32> to vector<16x128xf32>
    %c0_2 = arith.constant 0 : index
    %c0_3 = arith.constant 0 : index
    %c0_4 = arith.constant 0 : index
    %2 = vector.load %arg3[%c0_2, %c0_3, %c0_4] : memref<1x16x128xf32, #tpu.memory_space<vmem>>, vector<1x16x128xf32>
    %3 = vector.shape_cast %2 : vector<1x16x128xf32> to vector<16x128xf32>
    %4 = arith.addf %1, %3 : vector<16x128xf32>
    %c0_5 = arith.constant 0 : index
    %c0_6 = arith.constant 0 : index
    %c0_7 = arith.constant 0 : index
    %5 = vector.load %arg6[%c0_5, %c0_6, %c0_7] : memref<1x16x128xf32, #tpu.memory_space<vmem>>, vector<1x16x128xf32>
    %6 = vector.shape_cast %5 : vector<1x16x128xf32> to vector<16x128xf32>
    %7 = vector.shape_cast %4 : vector<16x128xf32> to vector<1x16x128xf32>
    tpu.vector_store %arg6[%c0_5, %c0_6, %c0_7], %7 {strides = array<i32>} : memref<1x16x128xf32, #tpu.memory_space<vmem>>, vector<1x16x128xf32>,
    %c0_8 = arith.constant 0 : index
    %c0_9 = arith.constant 0 : index
    %8 = vector.load %arg4[%c0_8, %c0_9] : memref<16x1xf32, #tpu.memory_space<vmem>>, vector<16x1xf32>
    %c0_10 = arith.constant 0 : index
    %c0_11 = arith.constant 0 : index
    %9 = vector.load %arg5[%c0_10, %c0_11] : memref<16x1xf32, #tpu.memory_space<vmem>>, vector<16x1xf32>
    %cst = arith.constant dense<0.000000e+00> : vector<128xf32>
    %10 = vector.multi_reduction <add>, %4, %cst [0] : vector<16x128xf32> to vector<128xf32>
    %11 = vector.shape_cast %10 : vector<128xf32> to vector<1x128xf32>
    %cst_12 = arith.constant 1.600000e+01 : f32
    %12 = vector.broadcast %cst_12 : f32 to vector<1x128xf32>
    %13 = arith.divf %11, %12 : vector<1x128xf32>
    %14 = vector.broadcast %13 : vector<1x128xf32> to vector<16x128xf32>
    %15 = arith.subf %4, %14 : vector<16x128xf32>
    %16 = arith.mulf %15, %15 : vector<16x128xf32>
    %cst_13 = arith.constant dense<0.000000e+00> : vector<128xf32>
    %17 = vector.multi_reduction <add>, %16, %cst_13 [0] : vector<16x128xf32> to vector<128xf32>
    %18 = vector.shape_cast %17 : vector<128xf32> to vector<1x128xf32>
    %cst_14 = arith.constant 1.600000e+01 : f32
    %19 = vector.broadcast %cst_14 : f32 to vector<1x128xf32>
    %20 = arith.divf %18, %19 : vector<1x128xf32>
    %cst_15 = arith.constant 9.99999997E-7 : f32
    %21 = vector.broadcast %cst_15 : f32 to vector<1x128xf32>
    %22 = arith.addf %20, %21 : vector<1x128xf32>
    %23 = math.rsqrt %22 : vector<1x128xf32>
    %24 = vector.broadcast %23 : vector<1x128xf32> to vector<16x128xf32>
    %25 = arith.mulf %15, %24 : vector<16x128xf32>
    %26 = vector.broadcast %8 : vector<16x1xf32> to vector<16x128xf32>
    %27 = arith.mulf %26, %25 : vector<16x128xf32>
    %28 = vector.broadcast %9 : vector<16x1xf32> to vector<16x128xf32>
    %29 = arith.addf %27, %28 : vector<16x128xf32>
    %c0_16 = arith.constant 0 : index
    %c0_17 = arith.constant 0 : index
    %c0_18 = arith.constant 0 : index
    %30 = vector.load %arg7[%c0_16, %c0_17, %c0_18] : memref<1x16x128xf32, #tpu.memory_space<vmem>>, vector<1x16x128xf32>
    %31 = vector.shape_cast %30 : vector<1x16x128xf32> to vector<16x128xf32>
    %32 = vector.shape_cast %29 : vector<16x128xf32> to vector<1x16x128xf32>
    tpu.vector_store %arg7[%c0_16, %c0_17, %c0_18], %32 {strides = array<i32>} : memref<1x16x128xf32, #tpu.memory_space<vmem>>, vector<1x16x128xf32>,
    return
  }
  func.func @transform_0(%arg0: i32, %arg1: i32) -> (i32, i32, i32) {
    %c0_i32 = arith.constant 0 : i32
    %c0_i32_0 = arith.constant 0 : i32
    return %arg0, %c0_i32, %arg1 : i32, i32, i32
  }
  func.func @transform_1(%arg0: i32, %arg1: i32) -> (i32, i32, i32) {
    %c0_i32 = arith.constant 0 : i32
    %c0_i32_0 = arith.constant 0 : i32
    return %arg0, %c0_i32, %arg1 : i32, i32, i32
  }
  func.func @transform_2(%arg0: i32, %arg1: i32) -> (i32, i32) {
    %c0_i32 = arith.constant 0 : i32
    %c0_i32_0 = arith.constant 0 : i32
    %c0_i32_1 = arith.constant 0 : i32
    return %c0_i32, %c0_i32_0 : i32, i32
  }
  func.func @transform_3(%arg0: i32, %arg1: i32) -> (i32, i32) {
    %c0_i32 = arith.constant 0 : i32
    %c0_i32_0 = arith.constant 0 : i32
    %c0_i32_1 = arith.constant 0 : i32
    return %c0_i32, %c0_i32_0 : i32, i32
  }
  func.func @transform_4(%arg0: i32, %arg1: i32) -> (i32, i32, i32) {
    %c0_i32 = arith.constant 0 : i32
    %c0_i32_0 = arith.constant 0 : i32
    return %arg0, %c0_i32, %arg1 : i32, i32, i32
  }
  func.func @transform_5(%arg0: i32, %arg1: i32) -> (i32, i32, i32) {
    %c0_i32 = arith.constant 0 : i32
    %c0_i32_0 = arith.constant 0 : i32
    return %arg0, %c0_i32, %arg1 : i32, i32, i32
  }
}

module attributes {stable_mosaic.version = 11 : i64} {
  func.func @kernel(%arg0: i32, %arg1: i32, %arg2: memref<1x16x128xf32, #tpu.memory_space<vmem>>, %arg3: memref<16x16xbf16, #tpu.memory_space<vmem>>, %arg4: memref<16x1xf32, #tpu.memory_space<vmem>>, %arg5: memref<1x16x128xf32, #tpu.memory_space<vmem>>) attributes {dimension_semantics = [#tpu.dimension_semantics<parallel>, #tpu.dimension_semantics<parallel>], iteration_bounds = array<i64: 2, 1>, scalar_prefetch = 0 : i64, scratch_operands = 0 : i64, tpu.core_type = #tpu.core_type<tc>, window_params = [{transform_indices = @transform_0, window_bounds = array<i64: 1, 16, 128>}, {pipeline_mode = #tpu.pipeline_mode<synchronous>, transform_indices = @transform_1, window_bounds = array<i64: 16, 16>}, {pipeline_mode = #tpu.pipeline_mode<synchronous>, transform_indices = @transform_2, window_bounds = array<i64: 16, 1>}, {transform_indices = @transform_3, window_bounds = array<i64: 1, 16, 128>}]} {
    %c0 = arith.constant 0 : index
    %c0_0 = arith.constant 0 : index
    %c0_1 = arith.constant 0 : index
    %0 = vector.load %arg2[%c0, %c0_0, %c0_1] : memref<1x16x128xf32, #tpu.memory_space<vmem>>, vector<1x16x128xf32>
    %1 = vector.shape_cast %0 : vector<1x16x128xf32> to vector<16x128xf32>
    %2 = arith.truncf %1 : vector<16x128xf32> to vector<16x128xbf16>
    %c0_2 = arith.constant 0 : index
    %c0_3 = arith.constant 0 : index
    %3 = vector.load %arg3[%c0_2, %c0_3] : memref<16x16xbf16, #tpu.memory_space<vmem>>, vector<16x16xbf16>
    %cst = arith.constant dense<0.000000e+00> : vector<16x128xf32>
    %4 = tpu.matmul %3, %2, %cst {dimension_numbers = #tpu.dot_dimension_numbers<[1], [0], [0], [1], [0, 0, 1, 1], [], []>} : vector<16x16xbf16>, vector<16x128xbf16>, vector<16x128xf32> -> vector<16x128xf32>
    %c0_4 = arith.constant 0 : index
    %c0_5 = arith.constant 0 : index
    %5 = vector.load %arg4[%c0_4, %c0_5] : memref<16x1xf32, #tpu.memory_space<vmem>>, vector<16x1xf32>
    %6 = vector.broadcast %5 : vector<16x1xf32> to vector<16x128xf32>
    %7 = arith.addf %4, %6 : vector<16x128xf32>
    %cst_6 = arith.constant 5.000000e-01 : f32
    %8 = vector.broadcast %cst_6 : f32 to vector<16x128xf32>
    %9 = arith.mulf %8, %7 : vector<16x128xf32>
    %cst_7 = arith.constant 4.471500e-02 : f32
    %10 = vector.broadcast %cst_7 : f32 to vector<16x128xf32>
    %11 = arith.mulf %10, %7 : vector<16x128xf32>
    %12 = arith.mulf %11, %7 : vector<16x128xf32>
    %13 = arith.mulf %12, %7 : vector<16x128xf32>
    %14 = arith.addf %7, %13 : vector<16x128xf32>
    %cst_8 = arith.constant 0.797884583 : f32
    %15 = vector.broadcast %cst_8 : f32 to vector<16x128xf32>
    %16 = arith.mulf %15, %14 : vector<16x128xf32>
    %17 = math.tanh %16 : vector<16x128xf32>
    %cst_9 = arith.constant 1.000000e+00 : f32
    %18 = vector.broadcast %cst_9 : f32 to vector<16x128xf32>
    %19 = arith.addf %18, %17 : vector<16x128xf32>
    %20 = arith.mulf %9, %19 : vector<16x128xf32>
    %c0_10 = arith.constant 0 : index
    %c0_11 = arith.constant 0 : index
    %c0_12 = arith.constant 0 : index
    %21 = vector.load %arg5[%c0_10, %c0_11, %c0_12] : memref<1x16x128xf32, #tpu.memory_space<vmem>>, vector<1x16x128xf32>
    %22 = vector.shape_cast %21 : vector<1x16x128xf32> to vector<16x128xf32>
    %23 = vector.shape_cast %20 : vector<16x128xf32> to vector<1x16x128xf32>
    tpu.vector_store %arg5[%c0_10, %c0_11, %c0_12], %23 {strides = array<i32>} : memref<1x16x128xf32, #tpu.memory_space<vmem>>, vector<1x16x128xf32>,
    return
  }
  func.func @transform_0(%arg0: i32, %arg1: i32) -> (i32, i32, i32) {
    %c0_i32 = arith.constant 0 : i32
    %c0_i32_0 = arith.constant 0 : i32
    return %arg0, %c0_i32, %arg1 : i32, i32, i32
  }
  func.func @transform_1(%arg0: i32, %arg1: i32) -> (i32, i32) {
    %c0_i32 = arith.constant 0 : i32
    %c0_i32_0 = arith.constant 0 : i32
    %c0_i32_1 = arith.constant 0 : i32
    return %c0_i32, %c0_i32_0 : i32, i32
  }
  func.func @transform_2(%arg0: i32, %arg1: i32) -> (i32, i32) {
    %c0_i32 = arith.constant 0 : i32
    %c0_i32_0 = arith.constant 0 : i32
    %c0_i32_1 = arith.constant 0 : i32
    return %c0_i32, %c0_i32_0 : i32, i32
  }
  func.func @transform_3(%arg0: i32, %arg1: i32) -> (i32, i32, i32) {
    %c0_i32 = arith.constant 0 : i32
    %c0_i32_0 = arith.constant 0 : i32
    return %arg0, %c0_i32, %arg1 : i32, i32, i32
  }
}

module attributes {stable_mosaic.version = 11 : i64} {
  func.func @_mlp_tail_kernel(%arg0: i32, %arg1: i32, %arg2: memref<1x16x128xf32, #tpu.memory_space<vmem>>, %arg3: memref<1x16x128xf32, #tpu.memory_space<vmem>>, %arg4: memref<16x9xf32, #tpu.memory_space<vmem>>, %arg5: memref<16x1xf32, #tpu.memory_space<vmem>>, %arg6: memref<2x128xi32, #tpu.memory_space<vmem>>, %arg7: memref<1x16x128xf32, #tpu.memory_space<vmem>>) attributes {dimension_semantics = [#tpu.dimension_semantics<parallel>, #tpu.dimension_semantics<parallel>], iteration_bounds = array<i64: 2, 1>, scalar_prefetch = 0 : i64, scratch_operands = 0 : i64, tpu.core_type = #tpu.core_type<tc>, window_params = [{transform_indices = @transform_0, window_bounds = array<i64: 1, 16, 128>}, {transform_indices = @transform_1, window_bounds = array<i64: 1, 16, 128>}, {transform_indices = @transform_2, window_bounds = array<i64: 16, 9>}, {transform_indices = @transform_3, window_bounds = array<i64: 16, 1>}, {pipeline_mode = #tpu.pipeline_mode<synchronous>, transform_indices = @transform_4, window_bounds = array<i64: 2, 128>}, {transform_indices = @transform_5, window_bounds = array<i64: 1, 16, 128>}]} {
    %c0 = arith.constant 0 : index
    %c0_0 = arith.constant 0 : index
    %c0_1 = arith.constant 0 : index
    %0 = vector.load %arg2[%c0, %c0_0, %c0_1] : memref<1x16x128xf32, #tpu.memory_space<vmem>>, vector<1x16x128xf32>
    %1 = vector.shape_cast %0 : vector<1x16x128xf32> to vector<16x128xf32>
    %c0_2 = arith.constant 0 : index
    %c0_3 = arith.constant 0 : index
    %2 = vector.load %arg6[%c0_2, %c0_3] : memref<2x128xi32, #tpu.memory_space<vmem>>, vector<1x128xi32>
    %c1 = arith.constant 1 : index
    %c0_4 = arith.constant 0 : index
    %3 = vector.load %arg6[%c1, %c0_4] : memref<2x128xi32, #tpu.memory_space<vmem>>, vector<1x128xi32>
    %c0_5 = arith.constant 0 : index
    %c0_6 = arith.constant 0 : index
    %4 = vector.load %arg4[%c0_5, %c0_6] : memref<16x9xf32, #tpu.memory_space<vmem>>, vector<16x9xf32>
    %5 = vector.extract_strided_slice %4 {offsets = [0, 4], sizes = [16, 1], strides = [1, 1]} : vector<16x9xf32> to vector<16x1xf32>
    %6 = vector.broadcast %5 : vector<16x1xf32> to vector<16x128xf32>
    %7 = arith.mulf %1, %6 : vector<16x128xf32>
    %c9_i32 = arith.constant 9 : i32
    %8 = tpu.dynamic_rotate %1 by %c9_i32 dim 1 : vector<16x128xf32>, i32 -> vector<16x128xf32>
    %c0_i32 = arith.constant 0 : i32
    %9 = vector.broadcast %c0_i32 : i32 to vector<1x128xi32>
    %10 = arith.cmpi sgt, %3, %9 : vector<1x128xi32>
    %c0_i32_7 = arith.constant 0 : i32
    %11 = vector.broadcast %c0_i32_7 : i32 to vector<1x128xi32>
    %12 = arith.cmpi sgt, %2, %11 : vector<1x128xi32>
    %13 = arith.andi %10, %12 : vector<1x128xi1>
    %cst = arith.constant 0.000000e+00 : f32
    %14 = vector.shape_cast %13 : vector<1x128xi1> to vector<1x128xi1>
    %15 = vector.broadcast %14 : vector<1x128xi1> to vector<16x128xi1>
    %16 = vector.broadcast %cst : f32 to vector<16x128xf32>
    %17 = arith.select %15, %8, %16 : vector<16x128xi1>, vector<16x128xf32>
    %18 = vector.extract_strided_slice %4 {offsets = [0, 0], sizes = [16, 1], strides = [1, 1]} : vector<16x9xf32> to vector<16x1xf32>
    %19 = vector.broadcast %18 : vector<16x1xf32> to vector<16x128xf32>
    %20 = arith.mulf %17, %19 : vector<16x128xf32>
    %21 = arith.addf %7, %20 : vector<16x128xf32>
    %c8_i32 = arith.constant 8 : i32
    %22 = tpu.dynamic_rotate %1 by %c8_i32 dim 1 : vector<16x128xf32>, i32 -> vector<16x128xf32>
    %c0_i32_8 = arith.constant 0 : i32
    %23 = vector.broadcast %c0_i32_8 : i32 to vector<1x128xi32>
    %24 = arith.cmpi sgt, %2, %23 : vector<1x128xi32>
    %cst_9 = arith.constant 0.000000e+00 : f32
    %25 = vector.shape_cast %24 : vector<1x128xi1> to vector<1x128xi1>
    %26 = vector.broadcast %25 : vector<1x128xi1> to vector<16x128xi1>
    %27 = vector.broadcast %cst_9 : f32 to vector<16x128xf32>
    %28 = arith.select %26, %22, %27 : vector<16x128xi1>, vector<16x128xf32>
    %29 = vector.extract_strided_slice %4 {offsets = [0, 1], sizes = [16, 1], strides = [1, 1]} : vector<16x9xf32> to vector<16x1xf32>
    %30 = vector.broadcast %29 : vector<16x1xf32> to vector<16x128xf32>
    %31 = arith.mulf %28, %30 : vector<16x128xf32>
    %32 = arith.addf %21, %31 : vector<16x128xf32>
    %c7_i32 = arith.constant 7 : i32
    %33 = tpu.dynamic_rotate %1 by %c7_i32 dim 1 : vector<16x128xf32>, i32 -> vector<16x128xf32>
    %c7_i32_10 = arith.constant 7 : i32
    %34 = vector.broadcast %c7_i32_10 : i32 to vector<1x128xi32>
    %35 = arith.cmpi slt, %3, %34 : vector<1x128xi32>
    %c0_i32_11 = arith.constant 0 : i32
    %36 = vector.broadcast %c0_i32_11 : i32 to vector<1x128xi32>
    %37 = arith.cmpi sgt, %2, %36 : vector<1x128xi32>
    %38 = arith.andi %35, %37 : vector<1x128xi1>
    %cst_12 = arith.constant 0.000000e+00 : f32
    %39 = vector.shape_cast %38 : vector<1x128xi1> to vector<1x128xi1>
    %40 = vector.broadcast %39 : vector<1x128xi1> to vector<16x128xi1>
    %41 = vector.broadcast %cst_12 : f32 to vector<16x128xf32>
    %42 = arith.select %40, %33, %41 : vector<16x128xi1>, vector<16x128xf32>
    %43 = vector.extract_strided_slice %4 {offsets = [0, 2], sizes = [16, 1], strides = [1, 1]} : vector<16x9xf32> to vector<16x1xf32>
    %44 = vector.broadcast %43 : vector<16x1xf32> to vector<16x128xf32>
    %45 = arith.mulf %42, %44 : vector<16x128xf32>
    %46 = arith.addf %32, %45 : vector<16x128xf32>
    %c1_i32 = arith.constant 1 : i32
    %47 = tpu.dynamic_rotate %1 by %c1_i32 dim 1 : vector<16x128xf32>, i32 -> vector<16x128xf32>
    %c0_i32_13 = arith.constant 0 : i32
    %48 = vector.broadcast %c0_i32_13 : i32 to vector<1x128xi32>
    %49 = arith.cmpi sgt, %3, %48 : vector<1x128xi32>
    %cst_14 = arith.constant 0.000000e+00 : f32
    %50 = vector.shape_cast %49 : vector<1x128xi1> to vector<1x128xi1>
    %51 = vector.broadcast %50 : vector<1x128xi1> to vector<16x128xi1>
    %52 = vector.broadcast %cst_14 : f32 to vector<16x128xf32>
    %53 = arith.select %51, %47, %52 : vector<16x128xi1>, vector<16x128xf32>
    %54 = vector.extract_strided_slice %4 {offsets = [0, 3], sizes = [16, 1], strides = [1, 1]} : vector<16x9xf32> to vector<16x1xf32>
    %55 = vector.broadcast %54 : vector<16x1xf32> to vector<16x128xf32>
    %56 = arith.mulf %53, %55 : vector<16x128xf32>
    %57 = arith.addf %46, %56 : vector<16x128xf32>
    %c127_i32 = arith.constant 127 : i32
    %58 = tpu.dynamic_rotate %1 by %c127_i32 dim 1 : vector<16x128xf32>, i32 -> vector<16x128xf32>
    %c7_i32_15 = arith.constant 7 : i32
    %59 = vector.broadcast %c7_i32_15 : i32 to vector<1x128xi32>
    %60 = arith.cmpi slt, %3, %59 : vector<1x128xi32>
    %cst_16 = arith.constant 0.000000e+00 : f32
    %61 = vector.shape_cast %60 : vector<1x128xi1> to vector<1x128xi1>
    %62 = vector.broadcast %61 : vector<1x128xi1> to vector<16x128xi1>
    %63 = vector.broadcast %cst_16 : f32 to vector<16x128xf32>
    %64 = arith.select %62, %58, %63 : vector<16x128xi1>, vector<16x128xf32>
    %65 = vector.extract_strided_slice %4 {offsets = [0, 5], sizes = [16, 1], strides = [1, 1]} : vector<16x9xf32> to vector<16x1xf32>
    %66 = vector.broadcast %65 : vector<16x1xf32> to vector<16x128xf32>
    %67 = arith.mulf %64, %66 : vector<16x128xf32>
    %68 = arith.addf %57, %67 : vector<16x128xf32>
    %c121_i32 = arith.constant 121 : i32
    %69 = tpu.dynamic_rotate %1 by %c121_i32 dim 1 : vector<16x128xf32>, i32 -> vector<16x128xf32>
    %c0_i32_17 = arith.constant 0 : i32
    %70 = vector.broadcast %c0_i32_17 : i32 to vector<1x128xi32>
    %71 = arith.cmpi sgt, %3, %70 : vector<1x128xi32>
    %c7_i32_18 = arith.constant 7 : i32
    %72 = vector.broadcast %c7_i32_18 : i32 to vector<1x128xi32>
    %73 = arith.cmpi slt, %2, %72 : vector<1x128xi32>
    %74 = arith.andi %71, %73 : vector<1x128xi1>
    %cst_19 = arith.constant 0.000000e+00 : f32
    %75 = vector.shape_cast %74 : vector<1x128xi1> to vector<1x128xi1>
    %76 = vector.broadcast %75 : vector<1x128xi1> to vector<16x128xi1>
    %77 = vector.broadcast %cst_19 : f32 to vector<16x128xf32>
    %78 = arith.select %76, %69, %77 : vector<16x128xi1>, vector<16x128xf32>
    %79 = vector.extract_strided_slice %4 {offsets = [0, 6], sizes = [16, 1], strides = [1, 1]} : vector<16x9xf32> to vector<16x1xf32>
    %80 = vector.broadcast %79 : vector<16x1xf32> to vector<16x128xf32>
    %81 = arith.mulf %78, %80 : vector<16x128xf32>
    %82 = arith.addf %68, %81 : vector<16x128xf32>
    %c120_i32 = arith.constant 120 : i32
    %83 = tpu.dynamic_rotate %1 by %c120_i32 dim 1 : vector<16x128xf32>, i32 -> vector<16x128xf32>
    %c7_i32_20 = arith.constant 7 : i32
    %84 = vector.broadcast %c7_i32_20 : i32 to vector<1x128xi32>
    %85 = arith.cmpi slt, %2, %84 : vector<1x128xi32>
    %cst_21 = arith.constant 0.000000e+00 : f32
    %86 = vector.shape_cast %85 : vector<1x128xi1> to vector<1x128xi1>
    %87 = vector.broadcast %86 : vector<1x128xi1> to vector<16x128xi1>
    %88 = vector.broadcast %cst_21 : f32 to vector<16x128xf32>
    %89 = arith.select %87, %83, %88 : vector<16x128xi1>, vector<16x128xf32>
    %90 = vector.extract_strided_slice %4 {offsets = [0, 7], sizes = [16, 1], strides = [1, 1]} : vector<16x9xf32> to vector<16x1xf32>
    %91 = vector.broadcast %90 : vector<16x1xf32> to vector<16x128xf32>
    %92 = arith.mulf %89, %91 : vector<16x128xf32>
    %93 = arith.addf %82, %92 : vector<16x128xf32>
    %c119_i32 = arith.constant 119 : i32
    %94 = tpu.dynamic_rotate %1 by %c119_i32 dim 1 : vector<16x128xf32>, i32 -> vector<16x128xf32>
    %c7_i32_22 = arith.constant 7 : i32
    %95 = vector.broadcast %c7_i32_22 : i32 to vector<1x128xi32>
    %96 = arith.cmpi slt, %3, %95 : vector<1x128xi32>
    %c7_i32_23 = arith.constant 7 : i32
    %97 = vector.broadcast %c7_i32_23 : i32 to vector<1x128xi32>
    %98 = arith.cmpi slt, %2, %97 : vector<1x128xi32>
    %99 = arith.andi %96, %98 : vector<1x128xi1>
    %cst_24 = arith.constant 0.000000e+00 : f32
    %100 = vector.shape_cast %99 : vector<1x128xi1> to vector<1x128xi1>
    %101 = vector.broadcast %100 : vector<1x128xi1> to vector<16x128xi1>
    %102 = vector.broadcast %cst_24 : f32 to vector<16x128xf32>
    %103 = arith.select %101, %94, %102 : vector<16x128xi1>, vector<16x128xf32>
    %104 = vector.extract_strided_slice %4 {offsets = [0, 8], sizes = [16, 1], strides = [1, 1]} : vector<16x9xf32> to vector<16x1xf32>
    %105 = vector.broadcast %104 : vector<16x1xf32> to vector<16x128xf32>
    %106 = arith.mulf %103, %105 : vector<16x128xf32>
    %107 = arith.addf %93, %106 : vector<16x128xf32>
    %c0_25 = arith.constant 0 : index
    %c0_26 = arith.constant 0 : index
    %108 = vector.load %arg5[%c0_25, %c0_26] : memref<16x1xf32, #tpu.memory_space<vmem>>, vector<16x1xf32>
    %109 = vector.broadcast %108 : vector<16x1xf32> to vector<16x128xf32>
    %110 = arith.addf %107, %109 : vector<16x128xf32>
    %cst_27 = arith.constant 5.000000e-01 : f32
    %111 = vector.broadcast %cst_27 : f32 to vector<16x128xf32>
    %112 = arith.mulf %111, %110 : vector<16x128xf32>
    %cst_28 = arith.constant 4.471500e-02 : f32
    %113 = vector.broadcast %cst_28 : f32 to vector<16x128xf32>
    %114 = arith.mulf %113, %110 : vector<16x128xf32>
    %115 = arith.mulf %114, %110 : vector<16x128xf32>
    %116 = arith.mulf %115, %110 : vector<16x128xf32>
    %117 = arith.addf %110, %116 : vector<16x128xf32>
    %cst_29 = arith.constant 0.797884583 : f32
    %118 = vector.broadcast %cst_29 : f32 to vector<16x128xf32>
    %119 = arith.mulf %118, %117 : vector<16x128xf32>
    %120 = math.tanh %119 : vector<16x128xf32>
    %cst_30 = arith.constant 1.000000e+00 : f32
    %121 = vector.broadcast %cst_30 : f32 to vector<16x128xf32>
    %122 = arith.addf %121, %120 : vector<16x128xf32>
    %123 = arith.mulf %112, %122 : vector<16x128xf32>
    %124 = arith.addf %1, %123 : vector<16x128xf32>
    %cst_31 = arith.constant 5.000000e-01 : f32
    %125 = vector.broadcast %cst_31 : f32 to vector<16x128xf32>
    %126 = arith.mulf %125, %124 : vector<16x128xf32>
    %cst_32 = arith.constant 4.471500e-02 : f32
    %127 = vector.broadcast %cst_32 : f32 to vector<16x128xf32>
    %128 = arith.mulf %127, %124 : vector<16x128xf32>
    %129 = arith.mulf %128, %124 : vector<16x128xf32>
    %130 = arith.mulf %129, %124 : vector<16x128xf32>
    %131 = arith.addf %124, %130 : vector<16x128xf32>
    %cst_33 = arith.constant 0.797884583 : f32
    %132 = vector.broadcast %cst_33 : f32 to vector<16x128xf32>
    %133 = arith.mulf %132, %131 : vector<16x128xf32>
    %134 = math.tanh %133 : vector<16x128xf32>
    %cst_34 = arith.constant 1.000000e+00 : f32
    %135 = vector.broadcast %cst_34 : f32 to vector<16x128xf32>
    %136 = arith.addf %135, %134 : vector<16x128xf32>
    %137 = arith.mulf %126, %136 : vector<16x128xf32>
    %c0_35 = arith.constant 0 : index
    %c0_36 = arith.constant 0 : index
    %c0_37 = arith.constant 0 : index
    %138 = vector.load %arg3[%c0_35, %c0_36, %c0_37] : memref<1x16x128xf32, #tpu.memory_space<vmem>>, vector<1x16x128xf32>
    %139 = vector.shape_cast %138 : vector<1x16x128xf32> to vector<16x128xf32>
    %140 = arith.addf %137, %139 : vector<16x128xf32>
    %c0_38 = arith.constant 0 : index
    %c0_39 = arith.constant 0 : index
    %c0_40 = arith.constant 0 : index
    %141 = vector.load %arg7[%c0_38, %c0_39, %c0_40] : memref<1x16x128xf32, #tpu.memory_space<vmem>>, vector<1x16x128xf32>
    %142 = vector.shape_cast %141 : vector<1x16x128xf32> to vector<16x128xf32>
    %143 = vector.shape_cast %140 : vector<16x128xf32> to vector<1x16x128xf32>
    tpu.vector_store %arg7[%c0_38, %c0_39, %c0_40], %143 {strides = array<i32>} : memref<1x16x128xf32, #tpu.memory_space<vmem>>, vector<1x16x128xf32>,
    return
  }
  func.func @transform_0(%arg0: i32, %arg1: i32) -> (i32, i32, i32) {
    %c0_i32 = arith.constant 0 : i32
    %c0_i32_0 = arith.constant 0 : i32
    return %arg0, %arg1, %c0_i32 : i32, i32, i32
  }
  func.func @transform_1(%arg0: i32, %arg1: i32) -> (i32, i32, i32) {
    %c0_i32 = arith.constant 0 : i32
    %c0_i32_0 = arith.constant 0 : i32
    return %arg0, %arg1, %c0_i32 : i32, i32, i32
  }
  func.func @transform_2(%arg0: i32, %arg1: i32) -> (i32, i32) {
    %c0_i32 = arith.constant 0 : i32
    %c0_i32_0 = arith.constant 0 : i32
    return %arg1, %c0_i32 : i32, i32
  }
  func.func @transform_3(%arg0: i32, %arg1: i32) -> (i32, i32) {
    %c0_i32 = arith.constant 0 : i32
    %c0_i32_0 = arith.constant 0 : i32
    return %arg1, %c0_i32 : i32, i32
  }
  func.func @transform_4(%arg0: i32, %arg1: i32) -> (i32, i32) {
    %c0_i32 = arith.constant 0 : i32
    %c0_i32_0 = arith.constant 0 : i32
    %c0_i32_1 = arith.constant 0 : i32
    return %c0_i32, %c0_i32_0 : i32, i32
  }
  func.func @transform_5(%arg0: i32, %arg1: i32) -> (i32, i32, i32) {
    %c0_i32 = arith.constant 0 : i32
    %c0_i32_0 = arith.constant 0 : i32
    return %arg0, %arg1, %c0_i32 : i32, i32, i32
  }
}

</mosaic_0001>

<llo_original>
// kernel: _lambda_.9
$region0: #{_lambda_.9}
  #allocation0 [shape = 'u32[]', space=smem, size = 0x4, offset = 0x4, fixed_abs, tag = 'smem constant byte address 0x4 - core index']
  #allocation1 [shape = 'u32[144,128]{1,0:T(1,128)}', space=vmem, size = 0x12000, scoped, tag = 'internal scratch']
  %s0 = inlined_call_operand.vmem [shape: f32[2,16,128], index: 0, kind: input, shape index: {}]
  %s1 = inlined_call_operand.vmem [shape: f32[2,16,128], index: 1, kind: input, shape index: {}]
  %s2 = inlined_call_operand.vmem [shape: f32[16,1], index: 2, kind: input, shape index: {}]
  %s3 = inlined_call_operand.vmem [shape: f32[16,1], index: 3, kind: input, shape index: {}]
  %s4 = inlined_call_operand.vmem [shape: f32[2,16,128], index: 4, kind: output, shape index: {0}]
  %s5 = inlined_call_operand.vmem [shape: f32[2,16,128], index: 5, kind: output, shape index: {1}]
  %6 = xla_tuple %s4, %s5
  %s7 = sld [smem:[#allocation0]]
  $region57: #{_lambda_.9} parent=0
    _
  %s9 = ssub.s32 1, %s7
  %s10 = scalar_select 0, %s9, %s7
  loop: start=0, step=1, limit=4
  $region2: #{_lambda_.9} parent=0 // loop_pre_header
    _
  $region3: #{_lambda_.9} parent=0 // loop_header
    %s12 = sphi 0, %s16
    %p13 = scmp.ge.s32.totalorder %s12, 4
    %s19 = sphi 0, %s31
    %s20 = sphi 0, %s27
    %s21 = sphi 0, %s19
    %s22 = sphi 0, %s20
    %s23 = sphi 0, %s21
    %s24 = sphi 0, %s22
    %s36 = sphi 0, %s38
    %s39 = sphi 0, %s36
    %s40 = sphi 0, %s39
    %s56 = sphi 0, %s40
    %s64 = sphi 0, %s66
    %s67 = sphi 0, %s64
    %s68 = sphi 0, %s67
    %s84 = sphi 0, %s68
    %s88 = sphi 0, %s88
    %s90 = sphi 0, %s88
    %s91 = sphi 0, %s90
    %s105 = sphi 0, %s91
    %s109 = sphi 0, %s109
    %s111 = sphi 0, %s109
    %s112 = sphi 0, %s111
    %s126 = sphi 0, %s112
    %s134 = sphi 0, %s136
    %s137 = sphi 0, %s134
    %s138 = sphi 0, %s137
    %s154 = sphi 0, %s138
    %s162 = sphi 0, %s164
    %s165 = sphi 0, %s162
    %s166 = sphi 0, %s165
    %s182 = sphi 0, %s166
  $region4: #{_lambda_.9} parent=0 // loop_header_branch
    %15 = sbr.rel (%p13) target = $region8
  $region5: #{_lambda_.9} parent=0 // loop_body
    %s17 = ssub.s32 %s12, 1
    %s18 = ssub.s32 %s12, 2
    %s25 = sadd.s32 1, %s20
    %p26 = scmp.ge.s32.totalorder %s25, 1
    %s27 = scalar_select %p26, 0, %s25
    %s28 = sadd.s32 1, %s19
    %s29 = scalar_select %p26, %s28, %s19
    %p30 = scmp.ge.s32.totalorder %s29, 2
    %s31 = scalar_select %p30, 0, %s29
    %s32 = ssub.s32 %s19, %s31
    %s33 = ssub.s32 %s20, %s27
    %s34 = sor.u32 %s32, %s33
    %p35 = scmp.eq.s32.totalorder %s34, 0
    %s37 = sadd.s32 %s36, 1
    %s38 = scalar_select %p35, %s36, %s37
    %p41 = pneg %p35
    %p42 = scmp.eq.s32.totalorder %s12, 1
    %p43 = por %p41, %p42
    %p44 = scmp.ne.s32.totalorder %s36, %s39
    %p45 = scmp.eq.s32.totalorder %s12, 0
    %p46 = por %p44, %p45
    %p47 = scmp.ne.s32.totalorder %s36, %s39
    %p48 = scmp.eq.s32.totalorder %s17, 1
    %p49 = por %p47, %p48
    %p50 = scmp.ne.s32.totalorder %s39, %s40
    %p51 = scmp.eq.s32.totalorder %s17, 0
    %p52 = por %p50, %p51
    %p53 = scmp.ne.s32.totalorder %s39, %s40
    %p54 = scmp.eq.s32.totalorder %s18, 1
    %p55 = por %p53, %p54
    %p57 = scmp.ne.s32.totalorder %s40, %s56
    %p58 = scmp.eq.s32.totalorder %s18, 0
    %p59 = por %p57, %p58
    %s60 = ssub.s32 %s19, %s31
    %s61 = ssub.s32 %s20, %s27
    %s62 = sor.u32 %s60, %s61
    %p63 = scmp.eq.s32.totalorder %s62, 0
    %s65 = sadd.s32 %s64, 1
    %s66 = scalar_select %p63, %s64, %s65
    %p69 = pneg %p63
    %p70 = scmp.eq.s32.totalorder %s12, 1
    %p71 = por %p69, %p70
    %p72 = scmp.ne.s32.totalorder %s64, %s67
    %p73 = scmp.eq.s32.totalorder %s12, 0
    %p74 = por %p72, %p73
    %p75 = scmp.ne.s32.totalorder %s64, %s67
    %p76 = scmp.eq.s32.totalorder %s17, 1
    %p77 = por %p75, %p76
    %p78 = scmp.ne.s32.totalorder %s67, %s68
    %p79 = scmp.eq.s32.totalorder %s17, 0
    %p80 = por %p78, %p79
    %p81 = scmp.ne.s32.totalorder %s67, %s68
    %p82 = scmp.eq.s32.totalorder %s18, 1
    %p83 = por %p81, %p82
    %p85 = scmp.ne.s32.totalorder %s68, %s84
    %p86 = scmp.eq.s32.totalorder %s18, 0
    %p87 = por %p85, %p86
    %s89 = sadd.s32 %s88, 1
    %p92 = scmp.eq.s32.totalorder %s12, 1
    %p93 = scmp.ne.s32.totalorder %s88, %s90
    %p94 = scmp.eq.s32.totalorder %s12, 0
    %p95 = por %p93, %p94
    %p96 = scmp.ne.s32.totalorder %s88, %s90
    %p97 = scmp.eq.s32.totalorder %s17, 1
    %p98 = por %p96, %p97
    %p99 = scmp.ne.s32.totalorder %s90, %s91
    %p100 = scmp.eq.s32.totalorder %s17, 0
    %p101 = por %p99, %p100
    %p102 = scmp.ne.s32.totalorder %s90, %s91
    %p103 = scmp.eq.s32.totalorder %s18, 1
    %p104 = por %p102, %p103
    %p106 = scmp.ne.s32.totalorder %s91, %s105
    %p107 = scmp.eq.s32.totalorder %s18, 0
    %p108 = por %p106, %p107
    %s110 = sadd.s32 %s109, 1
    %p113 = scmp.eq.s32.totalorder %s12, 1
    %p114 = scmp.ne.s32.totalorder %s109, %s111
    %p115 = scmp.eq.s32.totalorder %s12, 0
    %p116 = por %p114, %p115
    %p117 = scmp.ne.s32.totalorder %s109, %s111
    %p118 = scmp.eq.s32.totalorder %s17, 1
    %p119 = por %p117, %p118
    %p120 = scmp.ne.s32.totalorder %s111, %s112
    %p121 = scmp.eq.s32.totalorder %s17, 0
    %p122 = por %p120, %p121
    %p123 = scmp.ne.s32.totalorder %s111, %s112
    %p124 = scmp.eq.s32.totalorder %s18, 1
    %p125 = por %p123, %p124
    %p127 = scmp.ne.s32.totalorder %s112, %s126
    %p128 = scmp.eq.s32.totalorder %s18, 0
    %p129 = por %p127, %p128
    %s130 = ssub.s32 %s19, %s31
    %s131 = ssub.s32 %s20, %s27
    %s132 = sor.u32 %s130, %s131
    %p133 = scmp.eq.s32.totalorder %s132, 0
    %s135 = sadd.s32 %s134, 1
    %s136 = scalar_select %p133, %s134, %s135
    %p139 = pneg %p133
    %p140 = scmp.eq.s32.totalorder %s12, 1
    %p141 = por %p139, %p140
    %p142 = scmp.ne.s32.totalorder %s134, %s137
    %p143 = scmp.eq.s32.totalorder %s12, 0
    %p144 = por %p142, %p143
    %p145 = scmp.ne.s32.totalorder %s134, %s137
    %p146 = scmp.eq.s32.totalorder %s17, 1
    %p147 = por %p145, %p146
    %p148 = scmp.ne.s32.totalorder %s137, %s138
    %p149 = scmp.eq.s32.totalorder %s17, 0
    %p150 = por %p148, %p149
    %p151 = scmp.ne.s32.totalorder %s137, %s138
    %p152 = scmp.eq.s32.totalorder %s18, 1
    %p153 = por %p151, %p152
    %p155 = scmp.ne.s32.totalorder %s138, %s154
    %p156 = scmp.eq.s32.totalorder %s18, 0
    %p157 = por %p155, %p156
    %s158 = ssub.s32 %s19, %s31
    %s159 = ssub.s32 %s20, %s27
    %s160 = sor.u32 %s158, %s159
    %p161 = scmp.eq.s32.totalorder %s160, 0
    %s163 = sadd.s32 %s162, 1
    %s164 = scalar_select %p161, %s162, %s163
    %p167 = pneg %p161
    %p168 = scmp.eq.s32.totalorder %s12, 1
    %p169 = por %p167, %p168
    %p170 = scmp.ne.s32.totalorder %s162, %s165
    %p171 = scmp.eq.s32.totalorder %s12, 0
    %p172 = por %p170, %p171
    %p173 = scmp.ne.s32.totalorder %s162, %s165
    %p174 = scmp.eq.s32.totalorder %s17, 1
    %p175 = por %p173, %p174
    %p176 = scmp.ne.s32.totalorder %s165, %s166
    %p177 = scmp.eq.s32.totalorder %s17, 0
    %p178 = por %p176, %p177
    %p179 = scmp.ne.s32.totalorder %s165, %s166
    %p180 = scmp.eq.s32.totalorder %s18, 1
    %p181 = por %p179, %p180
    %p183 = scmp.ne.s32.totalorder %s166, %s182
    %p184 = scmp.eq.s32.totalorder %s18, 0
    %p185 = por %p183, %p184
    %p186 = scmp.le.s32.totalorder 1, %s12
    %p187 = scmp.lt.s32.totalorder %s12, 3
    %p188 = pnand %p186, %p187
    %p189 = pneg %p188
    // Predicated region
    $region9: #{_lambda_.9} parent=5 // pred_check
      _
    $region10: #{_lambda_.9} parent=5 // pred_check_branch
      %191 = sbr.rel (%p188) target = $region12
    $region11: #{_lambda_.9} parent=5 // pred_region
      %s192 = ssub.s32 %s12, 1
      // Predicated region
      $region13: #{_lambda_.9} parent=11 // pred_check
        %p193 = pneg %p101
      $region14: #{_lambda_.9} parent=11 // pred_check_branch
        %195 = sbr.rel (%p193) target = $region16
      $region15: #{_lambda_.9} parent=11 // pred_region
        _
      $region16: #{_lambda_.9} parent=11 // pred_fallthru
        _
      // Predicated region
      $region17: #{_lambda_.9} parent=11 // pred_check
        %p196 = pneg %p122
      $region18: #{_lambda_.9} parent=11 // pred_check_branch
        %198 = sbr.rel (%p196) target = $region20
      $region19: #{_lambda_.9} parent=11 // pred_region
        _
      $region20: #{_lambda_.9} parent=11 // pred_fallthru
        _
    $region12: #{_lambda_.9} parent=5 // pred_fallthru
      _
    %p199 = scmp.lt.s32.totalorder %s12, 2
    // Predicated region
    $region21: #{_lambda_.9} parent=5 // pred_check
      %p200 = pneg %p199
    $region22: #{_lambda_.9} parent=5 // pred_check_branch
      %202 = sbr.rel (%p200) target = $region24
    $region23: #{_lambda_.9} parent=5 // pred_region
      // Predicated region
      $region25: #{_lambda_.9} parent=23 // pred_check
        %p203 = pneg %p46
      $region26: #{_lambda_.9} parent=23 // pred_check_branch
        %205 = sbr.rel (%p203) target = $region28
      $region27: #{_lambda_.9} parent=23 // pred_region
        %p206 = scmp.lt.s32.totalorder %s19, 1
        %s207 = scalar_select %p206, %s19, 1
        %p208 = scmp.lt.s32.totalorder %s20, 0
        %s209 = scalar_select %p208, %s20, 0
        %s210 = smul.addr %s207, 2
        %s211 = sadd.s32 %s209, %s210
        %s212 = smul.addr %s211, 8
        %s213 = scalar_lea.vmem %s0, %s212
      $region28: #{_lambda_.9} parent=23 // pred_fallthru
        _
      // Predicated region
      $region29: #{_lambda_.9} parent=23 // pred_check
        %p214 = pneg %p74
      $region30: #{_lambda_.9} parent=23 // pred_check_branch
        %216 = sbr.rel (%p214) target = $region32
      $region31: #{_lambda_.9} parent=23 // pred_region
        %p217 = scmp.lt.s32.totalorder %s19, 1
        %s218 = scalar_select %p217, %s19, 1
        %p219 = scmp.lt.s32.totalorder %s20, 0
        %s220 = scalar_select %p219, %s20, 0
        %s221 = smul.addr %s218, 2
        %s222 = sadd.s32 %s220, %s221
        %s223 = smul.addr %s222, 8
        %s224 = scalar_lea.vmem %s1, %s223
      $region32: #{_lambda_.9} parent=23 // pred_fallthru
        _
    $region24: #{_lambda_.9} parent=5 // pred_fallthru
      _
    %p225 = scmp.le.s32.totalorder 1, %s12
    %p226 = scmp.lt.s32.totalorder %s12, 3
    %p227 = pnand %p225, %p226
    %p228 = pneg %p227
    // Predicated region
    $region33: #{_lambda_.9} parent=5 // pred_check
      _
    $region34: #{_lambda_.9} parent=5 // pred_check_branch
      %230 = sbr.rel (%p227) target = $region36
    $region35: #{_lambda_.9} parent=5 // pred_region
      %s231 = ssub.s32 %s12, 1
      %p232 = scmp.lt.s32.totalorder %s21, 1
      %s233 = scalar_select %p232, %s21, 1
      %p234 = scmp.lt.s32.totalorder %s22, 0
      %s235 = scalar_select %p234, %s22, 0
      %s236 = smul.addr %s233, 2
      %s237 = sadd.s32 %s235, %s236
      %s238 = smul.addr %s237, 8
      %s239 = scalar_lea.vmem %s0, %s238
      %p240 = pneg %p52
      %p241 = pneg %p49
      %p242 = scmp.lt.s32.totalorder %s21, 1
      %s243 = scalar_select %p242, %s21, 1
      %p244 = scmp.lt.s32.totalorder %s22, 0
      %s245 = scalar_select %p244, %s22, 0
      %s246 = smul.addr %s243, 2
      %s247 = sadd.s32 %s245, %s246
      %s248 = smul.addr %s247, 8
      %s249 = scalar_lea.vmem %s1, %s248
      %p250 = pneg %p80
      %p251 = pneg %p77
      %p252 = pneg %p101
      %p253 = pneg %p98
      %p254 = pneg %p122
      %p255 = pneg %p119
      %p256 = pneg %p150
      %p257 = pneg %p147
      %p258 = scmp.lt.s32.totalorder %s21, 1
      %s259 = scalar_select %p258, %s21, 1
      %p260 = scmp.lt.s32.totalorder %s22, 0
      %s261 = scalar_select %p260, %s22, 0
      %s262 = smul.addr %s259, 2
      %s263 = sadd.s32 %s261, %s262
      %s264 = smul.addr %s263, 8
      %s265 = scalar_lea.vmem %s4, %s264
      %p266 = pneg %p178
      %p267 = pneg %p175
      %p268 = scmp.lt.s32.totalorder %s21, 1
      %s269 = scalar_select %p268, %s21, 1
      %p270 = scmp.lt.s32.totalorder %s22, 0
      %s271 = scalar_select %p270, %s22, 0
      %s272 = smul.addr %s269, 2
      %s273 = sadd.s32 %s271, %s272
      %s274 = smul.addr %s273, 8
      %s275 = scalar_lea.vmem %s5, %s274
      %p276 = scmp.lt.s32.totalorder %s21, 1
      %s277 = scalar_select %p276, %s21, 1
      %p278 = scmp.lt.s32.totalorder %s22, 0
      %s279 = scalar_select %p278, %s22, 0
      %s280 = smul.addr %s277, 2
      %s281 = sadd.s32 %s279, %s280
      %s282 = smul.addr %s281, 8
      %s283 = scalar_lea.vmem %s0, %s282
      %p284 = scmp.lt.s32.totalorder %s21, 1
      %s285 = scalar_select %p284, %s21, 1
      %p286 = scmp.lt.s32.totalorder %s22, 0
      %s287 = scalar_select %p286, %s22, 0
      %s288 = smul.addr %s285, 2
      %s289 = sadd.s32 %s287, %s288
      %s290 = smul.addr %s289, 8
      %s291 = scalar_lea.vmem %s1, %s290
      %p292 = scmp.lt.s32.totalorder %s21, 1
      %s293 = scalar_select %p292, %s21, 1
      %p294 = scmp.lt.s32.totalorder %s22, 0
      %s295 = scalar_select %p294, %s22, 0
      %s296 = smul.addr %s293, 2
      %s297 = sadd.s32 %s295, %s296
      %s298 = smul.addr %s297, 8
      %s299 = scalar_lea.vmem %s4, %s298
      %p300 = scmp.lt.s32.totalorder %s21, 1
      %s301 = scalar_select %p300, %s21, 1
      %p302 = scmp.lt.s32.totalorder %s22, 0
      %s303 = scalar_select %p302, %s22, 0
      %s304 = smul.addr %s301, 2
      %s305 = sadd.s32 %s303, %s304
      %s306 = smul.addr %s305, 8
      %s307 = scalar_lea.vmem %s5, %s306
      %v308 = vld [vmem:[%s283] sm:$0xff]
      %v309 = vld [vmem:[%s283 + $0x8] sm:$0xff]
      %v310 = vld [vmem:[%s291] sm:$0xff]
      %v311 = vld [vmem:[%s291 + $0x8] sm:$0xff]
      %v312 = vadd.f32 %v308, %v310
      %v313 = vadd.f32 %v309, %v311
      %314 = vst [vmem:[%s299] sm:$0xff] %v312
      %315 = vst [vmem:[%s299 + $0x8] sm:$0xff] %v313
      %v316 = vld [vmem:[%s2] sm:$0xff]
      %v317 = vld [vmem:[%s2 + $0x8] sm:$0xff]
      %v318 = vld [vmem:[%s3] sm:$0xff]
      %v319 = vld [vmem:[%s3 + $0x8] sm:$0xff]
      %v320 = vadd.f32 %v312, %v313
      %v321 = vrot.slane %v320, 4
      %v322 = vadd.f32 %v320, %v321
      %v323 = vrot.slane %v322, 2
      %v324 = vadd.f32 %v322, %v323
      %v325 = vrot.slane %v324, 1
      %v326 = vadd.f32 %v324, %v325
      %v327 = vrcp.pop 16.0
      %v328 = vmul.f32 %v326, %v327
      %v329 = vsub.f32 %v312, %v328
      %v330 = vsub.f32 %v313, %v328
      %v331 = vmul.f32 %v329, %v329
      %v332 = vmul.f32 %v330, %v330
      %v333 = vadd.f32 %v331, %v332
      %v334 = vrot.slane %v333, 4
      %v335 = vadd.f32 %v333, %v334
      %v336 = vrot.slane %v335, 2
      %v337 = vadd.f32 %v335, %v336
      %v338 = vrot.slane %v337, 1
      %v339 = vadd.f32 %v337, %v338
      %v340 = vmul.f32 %v339, %v327
      %v341 = vadd.f32 %v340, 1e-06
      %v342 = vrsqrt.pop %v341
      %v343 = vmul.f32 %v329, %v342
      %v344 = vmul.f32 %v330, %v342
      %346 = vset.pattern.permute.xlu0 0
      %347 = vperm.xlu0 %346, %v316
      %v348 = vpop.permute.xlu0 %347
      %351 = vset.pattern.permute.xlu0 0
      %352 = vperm.xlu0 %351, %v317
      %v353 = vpop.permute.xlu0 %352
      %v355 = vmul.f32 %v348, %v343
      %v356 = vmul.f32 %v353, %v344
      %358 = vset.pattern.permute.xlu0 0
      %359 = vperm.xlu0 %358, %v318
      %v360 = vpop.permute.xlu0 %359
      %363 = vset.pattern.permute.xlu0 0
      %364 = vperm.xlu0 %363, %v319
      %v365 = vpop.permute.xlu0 %364
      %v367 = vadd.f32 %v355, %v360
      %v368 = vadd.f32 %v356, %v365
      %369 = vst [vmem:[%s307] sm:$0xff] %v367
      %370 = vst [vmem:[%s307 + $0x8] sm:$0xff] %v368
      %p371 = scmp.lt.s32.totalorder %s21, 1
      %s372 = scalar_select %p371, %s21, 1
      %p373 = scmp.lt.s32.totalorder %s22, 0
      %s374 = scalar_select %p373, %s22, 0
      %s375 = smul.addr %s372, 2
      %s376 = sadd.s32 %s374, %s375
      %s377 = smul.addr %s376, 8
      %s378 = scalar_lea.vmem %s4, %s377
      %p379 = scmp.lt.s32.totalorder %s21, 1
      %s380 = scalar_select %p379, %s21, 1
      %p381 = scmp.lt.s32.totalorder %s22, 0
      %s382 = scalar_select %p381, %s22, 0
      %s383 = smul.addr %s380, 2
      %s384 = sadd.s32 %s382, %s383
      %s385 = smul.addr %s384, 8
      %s386 = scalar_lea.vmem %s5, %s385
      // Predicated region
      $region37: #{_lambda_.9} parent=35 // pred_check
        %p387 = pneg %p147
      $region38: #{_lambda_.9} parent=35 // pred_check_branch
        %389 = sbr.rel (%p387) target = $region40
      $region39: #{_lambda_.9} parent=35 // pred_region
        _
      $region40: #{_lambda_.9} parent=35 // pred_fallthru
        _
      // Predicated region
      $region41: #{_lambda_.9} parent=35 // pred_check
        %p390 = pneg %p175
      $region42: #{_lambda_.9} parent=35 // pred_check_branch
        %392 = sbr.rel (%p390) target = $region44
      $region43: #{_lambda_.9} parent=35 // pred_region
        _
      $region44: #{_lambda_.9} parent=35 // pred_fallthru
        _
    $region36: #{_lambda_.9} parent=5 // pred_fallthru
      _
    %p393 = scmp.le.s32.totalorder 2, %s12
    // Predicated region
    $region45: #{_lambda_.9} parent=5 // pred_check
      %p394 = pneg %p393
    $region46: #{_lambda_.9} parent=5 // pred_check_branch
      %396 = sbr.rel (%p394) target = $region48
    $region47: #{_lambda_.9} parent=5 // pred_region
      %s397 = ssub.s32 %s12, 2
      // Predicated region
      $region49: #{_lambda_.9} parent=47 // pred_check
        %p398 = pneg %p153
      $region50: #{_lambda_.9} parent=47 // pred_check_branch
        %400 = sbr.rel (%p398) target = $region52
      $region51: #{_lambda_.9} parent=47 // pred_region
        %p401 = scmp.lt.s32.totalorder %s23, 1
        %s402 = scalar_select %p401, %s23, 1
        %p403 = scmp.lt.s32.totalorder %s24, 0
        %s404 = scalar_select %p403, %s24, 0
        %s405 = smul.addr %s402, 2
        %s406 = sadd.s32 %s404, %s405
        %s407 = smul.addr %s406, 8
        %s408 = scalar_lea.vmem %s4, %s407
      $region52: #{_lambda_.9} parent=47 // pred_fallthru
        _
      // Predicated region
      $region53: #{_lambda_.9} parent=47 // pred_check
        %p409 = pneg %p181
      $region54: #{_lambda_.9} parent=47 // pred_check_branch
        %411 = sbr.rel (%p409) target = $region56
      $region55: #{_lambda_.9} parent=47 // pred_region
        %p412 = scmp.lt.s32.totalorder %s23, 1
        %s413 = scalar_select %p412, %s23, 1
        %p414 = scmp.lt.s32.totalorder %s24, 0
        %s415 = scalar_select %p414, %s24, 0
        %s416 = smul.addr %s413, 2
        %s417 = sadd.s32 %s415, %s416
        %s418 = smul.addr %s417, 8
        %s419 = scalar_lea.vmem %s5, %s418
      $region56: #{_lambda_.9} parent=47 // pred_fallthru
        _
    $region48: #{_lambda_.9} parent=5 // pred_fallthru
      _
  $region6: #{_lambda_.9} parent=0 // loop_footer
    %s16 = sadd.s32 1, %s12
  $region7: #{_lambda_.9} parent=0 // loop_footer_branch
    %11 = sbr.rel target = $region3
  $region8: #{_lambda_.9} parent=0 // loop_exit
    _

// kernel: _lambda_.7
$region0: #{_lambda_.7}
  #allocation0 [shape = 'u32[]', space=smem, size = 0x4, offset = 0x4, fixed_abs, tag = 'smem constant byte address 0x4 - core index']
  #allocation1 [shape = 'u32[144,128]{1,0:T(1,128)}', space=vmem, size = 0x12000, scoped, tag = 'internal scratch']
  %s0 = inlined_call_operand.vmem [shape: f32[2,16,128], index: 0, kind: input, shape index: {}]
  %s1 = inlined_call_operand.vmem [shape: bf16[48,16], index: 1, kind: input, shape index: {}]
  %s2 = inlined_call_operand.vmem [shape: f32[2,48,128], index: 2, kind: output, shape index: {}]
  %s3 = sld [smem:[#allocation0]]
  $region41: #{_lambda_.7} parent=0
    _
  %s5 = ssub.s32 1, %s3
  %s6 = scalar_select 0, %s5, %s3
  loop: start=0, step=1, limit=4
  $region2: #{_lambda_.7} parent=0 // loop_pre_header
    _
  $region3: #{_lambda_.7} parent=0 // loop_header
    %s8 = sphi 0, %s12
    %p9 = scmp.ge.s32.totalorder %s8, 4
    %s15 = sphi 0, %s27
    %s16 = sphi 0, %s23
    %s17 = sphi 0, %s15
    %s18 = sphi 0, %s16
    %s19 = sphi 0, %s17
    %s20 = sphi 0, %s18
    %s32 = sphi 0, %s34
    %s35 = sphi 0, %s32
    %s36 = sphi 0, %s35
    %s52 = sphi 0, %s36
    %s56 = sphi 0, %s56
    %s58 = sphi 0, %s56
    %s59 = sphi 0, %s58
    %s73 = sphi 0, %s59
    %s81 = sphi 0, %s83
    %s84 = sphi 0, %s81
    %s85 = sphi 0, %s84
    %s101 = sphi 0, %s85
  $region4: #{_lambda_.7} parent=0 // loop_header_branch
    %11 = sbr.rel (%p9) target = $region8
  $region5: #{_lambda_.7} parent=0 // loop_body
    %s13 = ssub.s32 %s8, 1
    %s14 = ssub.s32 %s8, 2
    %s21 = sadd.s32 1, %s16
    %p22 = scmp.ge.s32.totalorder %s21, 1
    %s23 = scalar_select %p22, 0, %s21
    %s24 = sadd.s32 1, %s15
    %s25 = scalar_select %p22, %s24, %s15
    %p26 = scmp.ge.s32.totalorder %s25, 2
    %s27 = scalar_select %p26, 0, %s25
    %s28 = ssub.s32 %s15, %s27
    %s29 = ssub.s32 %s16, %s23
    %s30 = sor.u32 %s28, %s29
    %p31 = scmp.eq.s32.totalorder %s30, 0
    %s33 = sadd.s32 %s32, 1
    %s34 = scalar_select %p31, %s32, %s33
    %p37 = pneg %p31
    %p38 = scmp.eq.s32.totalorder %s8, 1
    %p39 = por %p37, %p38
    %p40 = scmp.ne.s32.totalorder %s32, %s35
    %p41 = scmp.eq.s32.totalorder %s8, 0
    %p42 = por %p40, %p41
    %p43 = scmp.ne.s32.totalorder %s32, %s35
    %p44 = scmp.eq.s32.totalorder %s13, 1
    %p45 = por %p43, %p44
    %p46 = scmp.ne.s32.totalorder %s35, %s36
    %p47 = scmp.eq.s32.totalorder %s13, 0
    %p48 = por %p46, %p47
    %p49 = scmp.ne.s32.totalorder %s35, %s36
    %p50 = scmp.eq.s32.totalorder %s14, 1
    %p51 = por %p49, %p50
    %p53 = scmp.ne.s32.totalorder %s36, %s52
    %p54 = scmp.eq.s32.totalorder %s14, 0
    %p55 = por %p53, %p54
    %s57 = sadd.s32 %s56, 1
    %p60 = scmp.eq.s32.totalorder %s8, 1
    %p61 = scmp.ne.s32.totalorder %s56, %s58
    %p62 = scmp.eq.s32.totalorder %s8, 0
    %p63 = por %p61, %p62
    %p64 = scmp.ne.s32.totalorder %s56, %s58
    %p65 = scmp.eq.s32.totalorder %s13, 1
    %p66 = por %p64, %p65
    %p67 = scmp.ne.s32.totalorder %s58, %s59
    %p68 = scmp.eq.s32.totalorder %s13, 0
    %p69 = por %p67, %p68
    %p70 = scmp.ne.s32.totalorder %s58, %s59
    %p71 = scmp.eq.s32.totalorder %s14, 1
    %p72 = por %p70, %p71
    %p74 = scmp.ne.s32.totalorder %s59, %s73
    %p75 = scmp.eq.s32.totalorder %s14, 0
    %p76 = por %p74, %p75
    %s77 = ssub.s32 %s15, %s27
    %s78 = ssub.s32 %s16, %s23
    %s79 = sor.u32 %s77, %s78
    %p80 = scmp.eq.s32.totalorder %s79, 0
    %s82 = sadd.s32 %s81, 1
    %s83 = scalar_select %p80, %s81, %s82
    %p86 = pneg %p80
    %p87 = scmp.eq.s32.totalorder %s8, 1
    %p88 = por %p86, %p87
    %p89 = scmp.ne.s32.totalorder %s81, %s84
    %p90 = scmp.eq.s32.totalorder %s8, 0
    %p91 = por %p89, %p90
    %p92 = scmp.ne.s32.totalorder %s81, %s84
    %p93 = scmp.eq.s32.totalorder %s13, 1
    %p94 = por %p92, %p93
    %p95 = scmp.ne.s32.totalorder %s84, %s85
    %p96 = scmp.eq.s32.totalorder %s13, 0
    %p97 = por %p95, %p96
    %p98 = scmp.ne.s32.totalorder %s84, %s85
    %p99 = scmp.eq.s32.totalorder %s14, 1
    %p100 = por %p98, %p99
    %p102 = scmp.ne.s32.totalorder %s85, %s101
    %p103 = scmp.eq.s32.totalorder %s14, 0
    %p104 = por %p102, %p103
    %p105 = scmp.le.s32.totalorder 1, %s8
    %p106 = scmp.lt.s32.totalorder %s8, 3
    %p107 = pnand %p105, %p106
    %p108 = pneg %p107
    // Predicated region
    $region9: #{_lambda_.7} parent=5 // pred_check
      _
    $region10: #{_lambda_.7} parent=5 // pred_check_branch
      %110 = sbr.rel (%p107) target = $region12
    $region11: #{_lambda_.7} parent=5 // pred_region
      %s111 = ssub.s32 %s8, 1
      // Predicated region
      $region13: #{_lambda_.7} parent=11 // pred_check
        %p112 = pneg %p69
      $region14: #{_lambda_.7} parent=11 // pred_check_branch
        %114 = sbr.rel (%p112) target = $region16
      $region15: #{_lambda_.7} parent=11 // pred_region
        _
      $region16: #{_lambda_.7} parent=11 // pred_fallthru
        _
    $region12: #{_lambda_.7} parent=5 // pred_fallthru
      _
    %p115 = scmp.lt.s32.totalorder %s8, 2
    // Predicated region
    $region17: #{_lambda_.7} parent=5 // pred_check
      %p116 = pneg %p115
    $region18: #{_lambda_.7} parent=5 // pred_check_branch
      %118 = sbr.rel (%p116) target = $region20
    $region19: #{_lambda_.7} parent=5 // pred_region
      // Predicated region
      $region21: #{_lambda_.7} parent=19 // pred_check
        %p119 = pneg %p42
      $region22: #{_lambda_.7} parent=19 // pred_check_branch
        %121 = sbr.rel (%p119) target = $region24
      $region23: #{_lambda_.7} parent=19 // pred_region
        %p122 = scmp.lt.s32.totalorder %s15, 1
        %s123 = scalar_select %p122, %s15, 1
        %p124 = scmp.lt.s32.totalorder %s16, 0
        %s125 = scalar_select %p124, %s16, 0
        %s126 = smul.addr %s123, 2
        %s127 = sadd.s32 %s125, %s126
        %s128 = smul.addr %s127, 8
        %s129 = scalar_lea.vmem %s0, %s128
      $region24: #{_lambda_.7} parent=19 // pred_fallthru
        _
    $region20: #{_lambda_.7} parent=5 // pred_fallthru
      _
    %p130 = scmp.le.s32.totalorder 1, %s8
    %p131 = scmp.lt.s32.totalorder %s8, 3
    %p132 = pnand %p130, %p131
    %p133 = pneg %p132
    // Predicated region
    $region25: #{_lambda_.7} parent=5 // pred_check
      _
    $region26: #{_lambda_.7} parent=5 // pred_check_branch
      %135 = sbr.rel (%p132) target = $region28
    $region27: #{_lambda_.7} parent=5 // pred_region
      %s136 = ssub.s32 %s8, 1
      %p137 = scmp.lt.s32.totalorder %s17, 1
      %s138 = scalar_select %p137, %s17, 1
      %p139 = scmp.lt.s32.totalorder %s18, 0
      %s140 = scalar_select %p139, %s18, 0
      %s141 = smul.addr %s138, 2
      %s142 = sadd.s32 %s140, %s141
      %s143 = smul.addr %s142, 8
      %s144 = scalar_lea.vmem %s0, %s143
      %p145 = pneg %p48
      %p146 = pneg %p45
      %p147 = pneg %p69
      %p148 = pneg %p66
      %p149 = pneg %p97
      %p150 = pneg %p94
      %p151 = scmp.lt.s32.totalorder %s17, 1
      %s152 = scalar_select %p151, %s17, 1
      %p153 = scmp.lt.s32.totalorder %s18, 0
      %s154 = scalar_select %p153, %s18, 0
      %s155 = smul.addr %s152, 6
      %s156 = sadd.s32 %s154, %s155
      %s157 = smul.addr %s156, 8
      %s158 = scalar_lea.vmem %s2, %s157
      %p159 = scmp.lt.s32.totalorder %s17, 1
      %s160 = scalar_select %p159, %s17, 1
      %p161 = scmp.lt.s32.totalorder %s18, 0
      %s162 = scalar_select %p161, %s18, 0
      %s163 = smul.addr %s160, 2
      %s164 = sadd.s32 %s162, %s163
      %s165 = smul.addr %s164, 8
      %s166 = scalar_lea.vmem %s0, %s165
      %p167 = scmp.lt.s32.totalorder %s17, 1
      %s168 = scalar_select %p167, %s17, 1
      %p169 = scmp.lt.s32.totalorder %s18, 0
      %s170 = scalar_select %p169, %s18, 0
      %s171 = smul.addr %s168, 6
      %s172 = sadd.s32 %s170, %s171
      %s173 = smul.addr %s172, 8
      %s174 = scalar_lea.vmem %s2, %s173
      %v176 = vld [vmem:[%s166] sm:$0xff]
      %v177 = vld [vmem:[%s166 + $0x8] sm:$0xff]
      %v178 = vpack.c.bf16 %v177, %v176
      %v179 = vld [vmem:[%s1] sm:$0xf]
      %v180 = vld [vmem:[%s1 + $0x4] sm:$0xf]
      %v181 = vld [vmem:[%s1 + $0x8] sm:$0xf]
      %v182 = vld [vmem:[%s1 + $0xc] sm:$0xf]
      %v183 = vld [vmem:[%s1 + $0x10] sm:$0xf]
      %v184 = vld [vmem:[%s1 + $0x14] sm:$0xf]
      %v191 = vunpack.c.l.b16 %v179
      %v192 = vunpack.c.l.b16 %v180
      %v193 = vunpack.c.l.b16 %v181
      %v194 = vunpack.c.l.b16 %v182
      %v195 = vunpack.c.l.b16 %v183
      %v196 = vunpack.c.l.b16 %v184
      %v197 = vpack.c.b16 %v192, %v191
      %v198 = vpack.c.b16 %v194, %v193
      %v199 = vpack.c.b16 %v196, %v195
      %vm200 = vcmask 130048
      %v202 = vsel %vm200, %v197, 0
      %v205 = vsel %vm200, %v198, 0
      %v208 = vsel %vm200, %v199, 0
      %210 = vmatprep.subr.bf16.mxu0 0
      %211 = vmatpush1.bf16.msra.mxu0 %v178
      %212 = vmatprep.subr.bf16.mxu0 0
      %213 = vmatpush1.bf16.msra.mxu0 0
      %214 = vmatprep.subr.bf16.mxu0 0
      %215 = vmatpush1.bf16.msra.mxu0 0
      %216 = vmatprep.subr.bf16.mxu0 0
      %217 = vmatpush1.bf16.msra.mxu0 0
      %218 = vmatprep.subr.bf16.mxu0 0
      %219 = vmatpush1.bf16.msra.mxu0 0
      %220 = vmatprep.subr.bf16.mxu0 0
      %221 = vmatpush1.bf16.msra.mxu0 0
      %222 = vmatprep.subr.bf16.mxu0 0
      %223 = vmatpush1.bf16.msra.mxu0 0
      %224 = vmatprep.subr.bf16.mxu0 0
      %225 = vmatpush1.bf16.msra.mxu0 0
      %226 = vmatprep.subr.bf16.mxu0 0
      %227 = vmatpush1.bf16.msra.mxu0 0
      %228 = vmatprep.subr.bf16.mxu0 0
      %229 = vmatpush1.bf16.msra.mxu0 0
      %230 = vmatprep.subr.bf16.mxu0 0
      %231 = vmatpush1.bf16.msra.mxu0 0
      %232 = vmatprep.subr.bf16.mxu0 0
      %233 = vmatpush1.bf16.msra.mxu0 0
      %234 = vmatprep.subr.bf16.mxu0 0
      %235 = vmatpush1.bf16.msra.mxu0 0
      %236 = vmatprep.subr.bf16.mxu0 0
      %237 = vmatpush1.bf16.msra.mxu0 0
      %238 = vmatprep.subr.bf16.mxu0 0
      %239 = vmatpush1.bf16.msra.mxu0 0
      %240 = vmatprep.subr.bf16.mxu0 0
      %241 = vmatpush1.bf16.msra.mxu0 0
      %242 = vmatprep.mubr.bf16.mxu0 0
      %243 = vmatmul.mubr.bf16.gmra.mrb[0].mxu0 %v202
      %v244 = vpop.f32.mrb[0].mxu0
      %v245 = vadd.f32 0.0, %v244
      %v246 = vpop.f32.mrb[0].mxu0
      %v247 = vpop.f32.mrb[0].mxu0
      %v248 = vadd.f32 0.0, %v247
      %v249 = vpop.f32.mrb[0].mxu0
      %250 = vmatprep.mubr.bf16.mxu0 0
      %251 = vmatmul.mubr.bf16.gmra.mrb[0].mxu0 %v205
      %v252 = vpop.f32.mrb[0].mxu0
      %v253 = vadd.f32 0.0, %v252
      %v254 = vpop.f32.mrb[0].mxu0
      %v255 = vpop.f32.mrb[0].mxu0
      %v256 = vadd.f32 0.0, %v255
      %v257 = vpop.f32.mrb[0].mxu0
      %258 = vmatprep.mubr.bf16.mxu0 0
      %259 = vmatmul.mubr.bf16.gmra.mrb[0].mxu0 %v208
      %v260 = vpop.f32.mrb[0].mxu0
      %v261 = vadd.f32 0.0, %v260
      %v262 = vpop.f32.mrb[0].mxu0
      %v263 = vpop.f32.mrb[0].mxu0
      %v264 = vadd.f32 0.0, %v263
      %v265 = vpop.f32.mrb[0].mxu0
      %266 = vdwg.mxu0
      %267 = vst [vmem:[%s174] sm:$0xff] %v245
      %268 = vst [vmem:[%s174 + $0x8] sm:$0xff] %v248
      %269 = vst [vmem:[%s174 + $0x10] sm:$0xff] %v253
      %270 = vst [vmem:[%s174 + $0x18] sm:$0xff] %v256
      %271 = vst [vmem:[%s174 + $0x20] sm:$0xff] %v261
      %272 = vst [vmem:[%s174 + $0x28] sm:$0xff] %v264
      %p273 = scmp.lt.s32.totalorder %s17, 1
      %s274 = scalar_select %p273, %s17, 1
      %p275 = scmp.lt.s32.totalorder %s18, 0
      %s276 = scalar_select %p275, %s18, 0
      %s277 = smul.addr %s274, 6
      %s278 = sadd.s32 %s276, %s277
      %s279 = smul.addr %s278, 8
      %s280 = scalar_lea.vmem %s2, %s279
      // Predicated region
      $region29: #{_lambda_.7} parent=27 // pred_check
        %p281 = pneg %p94
      $region30: #{_lambda_.7} parent=27 // pred_check_branch
        %283 = sbr.rel (%p281) target = $region32
      $region31: #{_lambda_.7} parent=27 // pred_region
        _
      $region32: #{_lambda_.7} parent=27 // pred_fallthru
        _
    $region28: #{_lambda_.7} parent=5 // pred_fallthru
      _
    %p284 = scmp.le.s32.totalorder 2, %s8
    // Predicated region
    $region33: #{_lambda_.7} parent=5 // pred_check
      %p285 = pneg %p284
    $region34: #{_lambda_.7} parent=5 // pred_check_branch
      %287 = sbr.rel (%p285) target = $region36
    $region35: #{_lambda_.7} parent=5 // pred_region
      %s288 = ssub.s32 %s8, 2
      // Predicated region
      $region37: #{_lambda_.7} parent=35 // pred_check
        %p289 = pneg %p100
      $region38: #{_lambda_.7} parent=35 // pred_check_branch
        %291 = sbr.rel (%p289) target = $region40
      $region39: #{_lambda_.7} parent=35 // pred_region
        %p292 = scmp.lt.s32.totalorder %s19, 1
        %s293 = scalar_select %p292, %s19, 1
        %p294 = scmp.lt.s32.totalorder %s20, 0
        %s295 = scalar_select %p294, %s20, 0
        %s296 = smul.addr %s293, 6
        %s297 = sadd.s32 %s295, %s296
        %s298 = smul.addr %s297, 8
        %s299 = scalar_lea.vmem %s2, %s298
      $region40: #{_lambda_.7} parent=35 // pred_fallthru
        _
    $region36: #{_lambda_.7} parent=5 // pred_fallthru
      _
  $region6: #{_lambda_.7} parent=0 // loop_footer
    %s12 = sadd.s32 1, %s8
  $region7: #{_lambda_.7} parent=0 // loop_footer_branch
    %7 = sbr.rel target = $region3
  $region8: #{_lambda_.7} parent=0 // loop_exit
    _

// kernel: _lambda_.6
$region0: #{_lambda_.6}
  #allocation0 [shape = 'u32[]', space=smem, size = 0x4, offset = 0x4, fixed_abs, tag = 'smem constant byte address 0x4 - core index']
  #allocation1 [shape = 'u32[144,128]{1,0:T(1,128)}', space=vmem, size = 0x12000, scoped, tag = 'internal scratch']
  %s0 = inlined_call_operand.vmem [shape: f32[2,16,128], index: 0, kind: input, shape index: {}]
  %s1 = inlined_call_operand.vmem [shape: f32[16,1], index: 1, kind: input, shape index: {}]
  %s2 = inlined_call_operand.vmem [shape: f32[16,1], index: 2, kind: input, shape index: {}]
  %s3 = inlined_call_operand.vmem [shape: f32[16,9], index: 3, kind: input, shape index: {}]
  %s4 = inlined_call_operand.vmem [shape: s32[2,128], index: 4, kind: input, shape index: {}]
  %s5 = inlined_call_operand.vmem [shape: f32[2,16,128], index: 5, kind: output, shape index: {}]
  %s6 = sld [smem:[#allocation0]]
  $region53: #{_lambda_.6} parent=0
    _
  %s8 = ssub.s32 1, %s6
  %s9 = scalar_select 0, %s8, %s6
  loop: start=0, step=1, limit=4
  $region2: #{_lambda_.6} parent=0 // loop_pre_header
    _
  $region3: #{_lambda_.6} parent=0 // loop_header
    %s11 = sphi 0, %s15
    %p12 = scmp.ge.s32.totalorder %s11, 4
    %s21 = sphi 0, %s23
    %s24 = sphi 0, %s21
    %s25 = sphi 0, %s24
    %s41 = sphi 0, %s25
    %s45 = sphi 0, %s45
    %s47 = sphi 0, %s45
    %s48 = sphi 0, %s47
    %s62 = sphi 0, %s48
    %s66 = sphi 0, %s66
    %s68 = sphi 0, %s66
    %s69 = sphi 0, %s68
    %s83 = sphi 0, %s69
    %s87 = sphi 0, %s87
    %s89 = sphi 0, %s87
    %s90 = sphi 0, %s89
    %s104 = sphi 0, %s90
    %s108 = sphi 0, %s108
    %s110 = sphi 0, %s108
    %s111 = sphi 0, %s110
    %s125 = sphi 0, %s111
    %s131 = sphi 0, %s133
    %s134 = sphi 0, %s131
    %s135 = sphi 0, %s134
    %s151 = sphi 0, %s135
  $region4: #{_lambda_.6} parent=0 // loop_header_branch
    %14 = sbr.rel (%p12) target = $region8
  $region5: #{_lambda_.6} parent=0 // loop_body
    %s16 = ssub.s32 %s11, 1
    %s17 = ssub.s32 %s11, 2
    %s18 = sadd.s32 %s11, 1
    %s19 = ssub.s32 %s11, %s18
    %p20 = scmp.eq.s32.totalorder %s19, 0
    %s22 = sadd.s32 %s21, 1
    %s23 = scalar_select %p20, %s21, %s22
    %p26 = pneg %p20
    %p27 = scmp.eq.s32.totalorder %s11, 1
    %p28 = por %p26, %p27
    %p29 = scmp.ne.s32.totalorder %s21, %s24
    %p30 = scmp.eq.s32.totalorder %s11, 0
    %p31 = por %p29, %p30
    %p32 = scmp.ne.s32.totalorder %s21, %s24
    %p33 = scmp.eq.s32.totalorder %s16, 1
    %p34 = por %p32, %p33
    %p35 = scmp.ne.s32.totalorder %s24, %s25
    %p36 = scmp.eq.s32.totalorder %s16, 0
    %p37 = por %p35, %p36
    %p38 = scmp.ne.s32.totalorder %s24, %s25
    %p39 = scmp.eq.s32.totalorder %s17, 1
    %p40 = por %p38, %p39
    %p42 = scmp.ne.s32.totalorder %s25, %s41
    %p43 = scmp.eq.s32.totalorder %s17, 0
    %p44 = por %p42, %p43
    %s46 = sadd.s32 %s45, 1
    %p49 = scmp.eq.s32.totalorder %s11, 1
    %p50 = scmp.ne.s32.totalorder %s45, %s47
    %p51 = scmp.eq.s32.totalorder %s11, 0
    %p52 = por %p50, %p51
    %p53 = scmp.ne.s32.totalorder %s45, %s47
    %p54 = scmp.eq.s32.totalorder %s16, 1
    %p55 = por %p53, %p54
    %p56 = scmp.ne.s32.totalorder %s47, %s48
    %p57 = scmp.eq.s32.totalorder %s16, 0
    %p58 = por %p56, %p57
    %p59 = scmp.ne.s32.totalorder %s47, %s48
    %p60 = scmp.eq.s32.totalorder %s17, 1
    %p61 = por %p59, %p60
    %p63 = scmp.ne.s32.totalorder %s48, %s62
    %p64 = scmp.eq.s32.totalorder %s17, 0
    %p65 = por %p63, %p64
    %s67 = sadd.s32 %s66, 1
    %p70 = scmp.eq.s32.totalorder %s11, 1
    %p71 = scmp.ne.s32.totalorder %s66, %s68
    %p72 = scmp.eq.s32.totalorder %s11, 0
    %p73 = por %p71, %p72
    %p74 = scmp.ne.s32.totalorder %s66, %s68
    %p75 = scmp.eq.s32.totalorder %s16, 1
    %p76 = por %p74, %p75
    %p77 = scmp.ne.s32.totalorder %s68, %s69
    %p78 = scmp.eq.s32.totalorder %s16, 0
    %p79 = por %p77, %p78
    %p80 = scmp.ne.s32.totalorder %s68, %s69
    %p81 = scmp.eq.s32.totalorder %s17, 1
    %p82 = por %p80, %p81
    %p84 = scmp.ne.s32.totalorder %s69, %s83
    %p85 = scmp.eq.s32.totalorder %s17, 0
    %p86 = por %p84, %p85
    %s88 = sadd.s32 %s87, 1
    %p91 = scmp.eq.s32.totalorder %s11, 1
    %p92 = scmp.ne.s32.totalorder %s87, %s89
    %p93 = scmp.eq.s32.totalorder %s11, 0
    %p94 = por %p92, %p93
    %p95 = scmp.ne.s32.totalorder %s87, %s89
    %p96 = scmp.eq.s32.totalorder %s16, 1
    %p97 = por %p95, %p96
    %p98 = scmp.ne.s32.totalorder %s89, %s90
    %p99 = scmp.eq.s32.totalorder %s16, 0
    %p100 = por %p98, %p99
    %p101 = scmp.ne.s32.totalorder %s89, %s90
    %p102 = scmp.eq.s32.totalorder %s17, 1
    %p103 = por %p101, %p102
    %p105 = scmp.ne.s32.totalorder %s90, %s104
    %p106 = scmp.eq.s32.totalorder %s17, 0
    %p107 = por %p105, %p106
    %s109 = sadd.s32 %s108, 1
    %p112 = scmp.eq.s32.totalorder %s11, 1
    %p113 = scmp.ne.s32.totalorder %s108, %s110
    %p114 = scmp.eq.s32.totalorder %s11, 0
    %p115 = por %p113, %p114
    %p116 = scmp.ne.s32.totalorder %s108, %s110
    %p117 = scmp.eq.s32.totalorder %s16, 1
    %p118 = por %p116, %p117
    %p119 = scmp.ne.s32.totalorder %s110, %s111
    %p120 = scmp.eq.s32.totalorder %s16, 0
    %p121 = por %p119, %p120
    %p122 = scmp.ne.s32.totalorder %s110, %s111
    %p123 = scmp.eq.s32.totalorder %s17, 1
    %p124 = por %p122, %p123
    %p126 = scmp.ne.s32.totalorder %s111, %s125
    %p127 = scmp.eq.s32.totalorder %s17, 0
    %p128 = por %p126, %p127
    %s129 = ssub.s32 %s11, %s18
    %p130 = scmp.eq.s32.totalorder %s129, 0
    %s132 = sadd.s32 %s131, 1
    %s133 = scalar_select %p130, %s131, %s132
    %p136 = pneg %p130
    %p137 = scmp.eq.s32.totalorder %s11, 1
    %p138 = por %p136, %p137
    %p139 = scmp.ne.s32.totalorder %s131, %s134
    %p140 = scmp.eq.s32.totalorder %s11, 0
    %p141 = por %p139, %p140
    %p142 = scmp.ne.s32.totalorder %s131, %s134
    %p143 = scmp.eq.s32.totalorder %s16, 1
    %p144 = por %p142, %p143
    %p145 = scmp.ne.s32.totalorder %s134, %s135
    %p146 = scmp.eq.s32.totalorder %s16, 0
    %p147 = por %p145, %p146
    %p148 = scmp.ne.s32.totalorder %s134, %s135
    %p149 = scmp.eq.s32.totalorder %s17, 1
    %p150 = por %p148, %p149
    %p152 = scmp.ne.s32.totalorder %s135, %s151
    %p153 = scmp.eq.s32.totalorder %s17, 0
    %p154 = por %p152, %p153
    %p155 = scmp.le.s32.totalorder 1, %s11
    %p156 = scmp.lt.s32.totalorder %s11, 3
    %p157 = pnand %p155, %p156
    %p158 = pneg %p157
    // Predicated region
    $region9: #{_lambda_.6} parent=5 // pred_check
      _
    $region10: #{_lambda_.6} parent=5 // pred_check_branch
      %160 = sbr.rel (%p157) target = $region12
    $region11: #{_lambda_.6} parent=5 // pred_region
      %s161 = ssub.s32 %s11, 1
      // Predicated region
      $region13: #{_lambda_.6} parent=11 // pred_check
        %p162 = pneg %p58
      $region14: #{_lambda_.6} parent=11 // pred_check_branch
        %164 = sbr.rel (%p162) target = $region16
      $region15: #{_lambda_.6} parent=11 // pred_region
        _
      $region16: #{_lambda_.6} parent=11 // pred_fallthru
        _
      // Predicated region
      $region17: #{_lambda_.6} parent=11 // pred_check
        %p165 = pneg %p79
      $region18: #{_lambda_.6} parent=11 // pred_check_branch
        %167 = sbr.rel (%p165) target = $region20
      $region19: #{_lambda_.6} parent=11 // pred_region
        _
      $region20: #{_lambda_.6} parent=11 // pred_fallthru
        _
      // Predicated region
      $region21: #{_lambda_.6} parent=11 // pred_check
        %p168 = pneg %p100
      $region22: #{_lambda_.6} parent=11 // pred_check_branch
        %170 = sbr.rel (%p168) target = $region24
      $region23: #{_lambda_.6} parent=11 // pred_region
        _
      $region24: #{_lambda_.6} parent=11 // pred_fallthru
        _
      // Predicated region
      $region25: #{_lambda_.6} parent=11 // pred_check
        %p171 = pneg %p121
      $region26: #{_lambda_.6} parent=11 // pred_check_branch
        %173 = sbr.rel (%p171) target = $region28
      $region27: #{_lambda_.6} parent=11 // pred_region
        _
      $region28: #{_lambda_.6} parent=11 // pred_fallthru
        _
    $region12: #{_lambda_.6} parent=5 // pred_fallthru
      _
    %p174 = scmp.lt.s32.totalorder %s11, 2
    // Predicated region
    $region29: #{_lambda_.6} parent=5 // pred_check
      %p175 = pneg %p174
    $region30: #{_lambda_.6} parent=5 // pred_check_branch
      %177 = sbr.rel (%p175) target = $region32
    $region31: #{_lambda_.6} parent=5 // pred_region
      // Predicated region
      $region33: #{_lambda_.6} parent=31 // pred_check
        %p178 = pneg %p31
      $region34: #{_lambda_.6} parent=31 // pred_check_branch
        %180 = sbr.rel (%p178) target = $region36
      $region35: #{_lambda_.6} parent=31 // pred_region
        %p181 = scmp.lt.s32.totalorder %s11, 1
        %s182 = scalar_select %p181, %s11, 1
        %s183 = smul.addr %s182, 2
        %s184 = smul.addr %s183, 8
        %s185 = scalar_lea.vmem %s0, %s184
      $region36: #{_lambda_.6} parent=31 // pred_fallthru
        _
    $region32: #{_lambda_.6} parent=5 // pred_fallthru
      _
    %p186 = scmp.le.s32.totalorder 1, %s11
    %p187 = scmp.lt.s32.totalorder %s11, 3
    %p188 = pnand %p186, %p187
    %p189 = pneg %p188
    // Predicated region
    $region37: #{_lambda_.6} parent=5 // pred_check
      _
    $region38: #{_lambda_.6} parent=5 // pred_check_branch
      %191 = sbr.rel (%p188) target = $region40
    $region39: #{_lambda_.6} parent=5 // pred_region
      %s192 = ssub.s32 %s11, 1
      %p193 = scmp.lt.s32.totalorder %s16, 1
      %s194 = scalar_select %p193, %s16, 1
      %s195 = smul.addr %s194, 2
      %s196 = smul.addr %s195, 8
      %s197 = scalar_lea.vmem %s0, %s196
      %p198 = pneg %p37
      %p199 = pneg %p34
      %p200 = pneg %p58
      %p201 = pneg %p55
      %p202 = pneg %p79
      %p203 = pneg %p76
      %p204 = pneg %p100
      %p205 = pneg %p97
      %p206 = pneg %p121
      %p207 = pneg %p118
      %p208 = pneg %p147
      %p209 = pneg %p144
      %p210 = scmp.lt.s32.totalorder %s16, 1
      %s211 = scalar_select %p210, %s16, 1
      %s212 = smul.addr %s211, 2
      %s213 = smul.addr %s212, 8
      %s214 = scalar_lea.vmem %s5, %s213
      %p215 = scmp.lt.s32.totalorder %s16, 1
      %s216 = scalar_select %p215, %s16, 1
      %s217 = smul.addr %s216, 2
      %s218 = smul.addr %s217, 8
      %s219 = scalar_lea.vmem %s0, %s218
      %p220 = scmp.lt.s32.totalorder %s16, 1
      %s221 = scalar_select %p220, %s16, 1
      %s222 = smul.addr %s221, 2
      %s223 = smul.addr %s222, 8
      %s224 = scalar_lea.vmem %s5, %s223
      %v225 = vld [vmem:[%s219] sm:$0xff]
      %v226 = vld [vmem:[%s219 + $0x8] sm:$0xff]
      %v227 = vld [vmem:[%s1] sm:$0xff]
      %v228 = vld [vmem:[%s1 + $0x8] sm:$0xff]
      %v229 = vld [vmem:[%s2] sm:$0xff]
      %v230 = vld [vmem:[%s2 + $0x8] sm:$0xff]
      %v231 = vadd.f32 %v225, %v226
      %v232 = vrot.slane %v231, 4
      %v233 = vadd.f32 %v231, %v232
      %v234 = vrot.slane %v233, 2
      %v235 = vadd.f32 %v233, %v234
      %v236 = vrot.slane %v235, 1
      %v237 = vadd.f32 %v235, %v236
      %v238 = vrcp.pop 16.0
      %v239 = vmul.f32 %v237, %v238
      %v240 = vsub.f32 %v225, %v239
      %v241 = vsub.f32 %v226, %v239
      %v242 = vmul.f32 %v240, %v240
      %v243 = vmul.f32 %v241, %v241
      %v244 = vadd.f32 %v242, %v243
      %v245 = vrot.slane %v244, 4
      %v246 = vadd.f32 %v244, %v245
      %v247 = vrot.slane %v246, 2
      %v248 = vadd.f32 %v246, %v247
      %v249 = vrot.slane %v248, 1
      %v250 = vadd.f32 %v248, %v249
      %v251 = vmul.f32 %v250, %v238
      %v252 = vadd.f32 %v251, 1e-06
      %v253 = vrsqrt.pop %v252
      %v254 = vmul.f32 %v240, %v253
      %v255 = vmul.f32 %v241, %v253
      %257 = vset.pattern.permute.xlu0 0
      %258 = vperm.xlu0 %257, %v227
      %v259 = vpop.permute.xlu0 %258
      %262 = vset.pattern.permute.xlu0 0
      %263 = vperm.xlu0 %262, %v228
      %v264 = vpop.permute.xlu0 %263
      %v266 = vmul.f32 %v259, %v254
      %v267 = vmul.f32 %v264, %v255
      %269 = vset.pattern.permute.xlu0 0
      %270 = vperm.xlu0 %269, %v229
      %v271 = vpop.permute.xlu0 %270
      %274 = vset.pattern.permute.xlu0 0
      %275 = vperm.xlu0 %274, %v230
      %v276 = vpop.permute.xlu0 %275
      %v278 = vadd.f32 %v266, %v271
      %v279 = vadd.f32 %v267, %v276
      %v280 = vld [vmem:[%s4] sm:$0x1]
      %v281 = vld [vmem:[%s4 + $0x1] sm:$0x1]
      %v282 = vld [vmem:[%s3] sm:$0xff]
      %v283 = vld [vmem:[%s3 + $0x8] sm:$0xff]
      %285 = vset.pattern.permute.xlu0 4
      %286 = vperm.xlu0 %285, %v282
      %v287 = vpop.permute.xlu0 %286
      %290 = vset.pattern.permute.xlu0 4
      %291 = vperm.xlu0 %290, %v283
      %v292 = vpop.permute.xlu0 %291
      %v294 = vmul.f32 %v278, %v287
      %v295 = vmul.f32 %v279, %v292
      %296 = vrot.lane.b32.xlu0 %v278, 9
      %v297 = vpop.permute.xlu0 %296
      %298 = vrot.lane.b32.xlu0 %v279, 9
      %v299 = vpop.permute.xlu0 %298
      %vm300 = vcmp.gt.s32.totalorder %v281, 0
      %vm301 = vcmp.gt.s32.totalorder %v280, 0
      %vm302 = vmand %vm300, %vm301
      %v303 = vsel %vm302, 1, 0
      %v304 = vlaneseq
      %v305 = vshrl.u32 %v304, 7
      %v306 = vsub.s32 0, %v305
      %v307 = vrot.slane %v303, %v306
      %vm308 = vcmp.eq.s32.totalorder %v307, 1
      %v309 = vsel %vm308, %v297, 0.0
      %v310 = vsel %vm308, %v299, 0.0
      %311 = vset.pattern.permute.xlu0 0
      %312 = vperm.xlu0 %311, %v282
      %v313 = vpop.permute.xlu0 %312
      %315 = vset.pattern.permute.xlu0 0
      %316 = vperm.xlu0 %315, %v283
      %v317 = vpop.permute.xlu0 %316
      %v319 = vmul.f32 %v309, %v313
      %v320 = vmul.f32 %v310, %v317
      %v321 = vadd.f32 %v294, %v319
      %v322 = vadd.f32 %v295, %v320
      %323 = vrot.lane.b32.xlu0 %v278, 8
      %v324 = vpop.permute.xlu0 %323
      %325 = vrot.lane.b32.xlu0 %v279, 8
      %v326 = vpop.permute.xlu0 %325
      %v327 = vsel %vm301, 1, 0
      %v328 = vlaneseq
      %v329 = vshrl.u32 %v328, 7
      %v330 = vsub.s32 0, %v329
      %v331 = vrot.slane %v327, %v330
      %vm332 = vcmp.eq.s32.totalorder %v331, 1
      %v333 = vsel %vm332, %v324, 0.0
      %v334 = vsel %vm332, %v326, 0.0
      %335 = vset.pattern.permute.xlu0 1
      %336 = vperm.xlu0 %335, %v282
      %v337 = vpop.permute.xlu0 %336
      %339 = vset.pattern.permute.xlu0 1
      %340 = vperm.xlu0 %339, %v283
      %v341 = vpop.permute.xlu0 %340
      %v343 = vmul.f32 %v333, %v337
      %v344 = vmul.f32 %v334, %v341
      %v345 = vadd.f32 %v321, %v343
      %v346 = vadd.f32 %v322, %v344
      %347 = vrot.lane.b32.xlu0 %v278, 7
      %v348 = vpop.permute.xlu0 %347
      %349 = vrot.lane.b32.xlu0 %v279, 7
      %v350 = vpop.permute.xlu0 %349
      %vm351 = vcmp.lt.s32.totalorder %v281, 7
      %vm352 = vmand %vm351, %vm301
      %v353 = vsel %vm352, 1, 0
      %v354 = vlaneseq
      %v355 = vshrl.u32 %v354, 7
      %v356 = vsub.s32 0, %v355
      %v357 = vrot.slane %v353, %v356
      %vm358 = vcmp.eq.s32.totalorder %v357, 1
      %v359 = vsel %vm358, %v348, 0.0
      %v360 = vsel %vm358, %v350, 0.0
      %361 = vset.pattern.permute.xlu0 2
      %362 = vperm.xlu0 %361, %v282
      %v363 = vpop.permute.xlu0 %362
      %365 = vset.pattern.permute.xlu0 2
      %366 = vperm.xlu0 %365, %v283
      %v367 = vpop.permute.xlu0 %366
      %v369 = vmul.f32 %v359, %v363
      %v370 = vmul.f32 %v360, %v367
      %v371 = vadd.f32 %v345, %v369
      %v372 = vadd.f32 %v346, %v370
      %373 = vrot.lane.b32.xlu0 %v278, 1
      %v374 = vpop.permute.xlu0 %373
      %375 = vrot.lane.b32.xlu0 %v279, 1
      %v376 = vpop.permute.xlu0 %375
      %v377 = vsel %vm300, 1, 0
      %v378 = vlaneseq
      %v379 = vshrl.u32 %v378, 7
      %v380 = vsub.s32 0, %v379
      %v381 = vrot.slane %v377, %v380
      %vm382 = vcmp.eq.s32.totalorder %v381, 1
      %v383 = vsel %vm382, %v374, 0.0
      %v384 = vsel %vm382, %v376, 0.0
      %385 = vset.pattern.permute.xlu0 3
      %386 = vperm.xlu0 %385, %v282
      %v387 = vpop.permute.xlu0 %386
      %389 = vset.pattern.permute.xlu0 3
      %390 = vperm.xlu0 %389, %v283
      %v391 = vpop.permute.xlu0 %390
      %v393 = vmul.f32 %v383, %v387
      %v394 = vmul.f32 %v384, %v391
      %v395 = vadd.f32 %v371, %v393
      %v396 = vadd.f32 %v372, %v394
      %397 = vrot.lane.b32.xlu0 %v278, 127
      %v398 = vpop.permute.xlu0 %397
      %399 = vrot.lane.b32.xlu0 %v279, 127
      %v400 = vpop.permute.xlu0 %399
      %v401 = vsel %vm351, 1, 0
      %v402 = vlaneseq
      %v403 = vshrl.u32 %v402, 7
      %v404 = vsub.s32 0, %v403
      %v405 = vrot.slane %v401, %v404
      %vm406 = vcmp.eq.s32.totalorder %v405, 1
      %v407 = vsel %vm406, %v398, 0.0
      %v408 = vsel %vm406, %v400, 0.0
      %409 = vset.pattern.permute.xlu0 5
      %410 = vperm.xlu0 %409, %v282
      %v411 = vpop.permute.xlu0 %410
      %413 = vset.pattern.permute.xlu0 5
      %414 = vperm.xlu0 %413, %v283
      %v415 = vpop.permute.xlu0 %414
      %v417 = vmul.f32 %v407, %v411
      %v418 = vmul.f32 %v408, %v415
      %v419 = vadd.f32 %v395, %v417
      %v420 = vadd.f32 %v396, %v418
      %421 = vrot.lane.b32.xlu0 %v278, 121
      %v422 = vpop.permute.xlu0 %421
      %423 = vrot.lane.b32.xlu0 %v279, 121
      %v424 = vpop.permute.xlu0 %423
      %vm425 = vcmp.lt.s32.totalorder %v280, 7
      %vm426 = vmand %vm300, %vm425
      %v427 = vsel %vm426, 1, 0
      %v428 = vlaneseq
      %v429 = vshrl.u32 %v428, 7
      %v430 = vsub.s32 0, %v429
      %v431 = vrot.slane %v427, %v430
      %vm432 = vcmp.eq.s32.totalorder %v431, 1
      %v433 = vsel %vm432, %v422, 0.0
      %v434 = vsel %vm432, %v424, 0.0
      %435 = vset.pattern.permute.xlu0 6
      %436 = vperm.xlu0 %435, %v282
      %v437 = vpop.permute.xlu0 %436
      %439 = vset.pattern.permute.xlu0 6
      %440 = vperm.xlu0 %439, %v283
      %v441 = vpop.permute.xlu0 %440
      %v443 = vmul.f32 %v433, %v437
      %v444 = vmul.f32 %v434, %v441
      %v445 = vadd.f32 %v419, %v443
      %v446 = vadd.f32 %v420, %v444
      %447 = vrot.lane.b32.xlu0 %v278, 120
      %v448 = vpop.permute.xlu0 %447
      %449 = vrot.lane.b32.xlu0 %v279, 120
      %v450 = vpop.permute.xlu0 %449
      %v451 = vsel %vm425, 1, 0
      %v452 = vlaneseq
      %v453 = vshrl.u32 %v452, 7
      %v454 = vsub.s32 0, %v453
      %v455 = vrot.slane %v451, %v454
      %vm456 = vcmp.eq.s32.totalorder %v455, 1
      %v457 = vsel %vm456, %v448, 0.0
      %v458 = vsel %vm456, %v450, 0.0
      %459 = vset.pattern.permute.xlu0 7
      %460 = vperm.xlu0 %459, %v282
      %v461 = vpop.permute.xlu0 %460
      %463 = vset.pattern.permute.xlu0 7
      %464 = vperm.xlu0 %463, %v283
      %v465 = vpop.permute.xlu0 %464
      %v467 = vmul.f32 %v457, %v461
      %v468 = vmul.f32 %v458, %v465
      %v469 = vadd.f32 %v445, %v467
      %v470 = vadd.f32 %v446, %v468
      %471 = vrot.lane.b32.xlu0 %v278, 119
      %v472 = vpop.permute.xlu0 %471
      %473 = vrot.lane.b32.xlu0 %v279, 119
      %v474 = vpop.permute.xlu0 %473
      %vm475 = vmand %vm351, %vm425
      %v476 = vsel %vm475, 1, 0
      %v477 = vlaneseq
      %v478 = vshrl.u32 %v477, 7
      %v479 = vsub.s32 0, %v478
      %v480 = vrot.slane %v476, %v479
      %vm481 = vcmp.eq.s32.totalorder %v480, 1
      %v482 = vsel %vm481, %v472, 0.0
      %v483 = vsel %vm481, %v474, 0.0
      %484 = vset.pattern.permute.xlu0 8
      %485 = vperm.xlu0 %484, %v282
      %v486 = vpop.permute.xlu0 %485
      %488 = vset.pattern.permute.xlu0 8
      %489 = vperm.xlu0 %488, %v283
      %v490 = vpop.permute.xlu0 %489
      %v492 = vmul.f32 %v482, %v486
      %v493 = vmul.f32 %v483, %v490
      %v494 = vadd.f32 %v469, %v492
      %v495 = vadd.f32 %v470, %v493
      %496 = vst [vmem:[%s224] sm:$0xff] %v494
      %497 = vst [vmem:[%s224 + $0x8] sm:$0xff] %v495
      %p498 = scmp.lt.s32.totalorder %s16, 1
      %s499 = scalar_select %p498, %s16, 1
      %s500 = smul.addr %s499, 2
      %s501 = smul.addr %s500, 8
      %s502 = scalar_lea.vmem %s5, %s501
      // Predicated region
      $region41: #{_lambda_.6} parent=39 // pred_check
        %p503 = pneg %p144
      $region42: #{_lambda_.6} parent=39 // pred_check_branch
        %505 = sbr.rel (%p503) target = $region44
      $region43: #{_lambda_.6} parent=39 // pred_region
        _
      $region44: #{_lambda_.6} parent=39 // pred_fallthru
        _
    $region40: #{_lambda_.6} parent=5 // pred_fallthru
      _
    %p506 = scmp.le.s32.totalorder 2, %s11
    // Predicated region
    $region45: #{_lambda_.6} parent=5 // pred_check
      %p507 = pneg %p506
    $region46: #{_lambda_.6} parent=5 // pred_check_branch
      %509 = sbr.rel (%p507) target = $region48
    $region47: #{_lambda_.6} parent=5 // pred_region
      %s510 = ssub.s32 %s11, 2
      // Predicated region
      $region49: #{_lambda_.6} parent=47 // pred_check
        %p511 = pneg %p150
      $region50: #{_lambda_.6} parent=47 // pred_check_branch
        %513 = sbr.rel (%p511) target = $region52
      $region51: #{_lambda_.6} parent=47 // pred_region
        %p514 = scmp.lt.s32.totalorder %s17, 1
        %s515 = scalar_select %p514, %s17, 1
        %s516 = smul.addr %s515, 2
        %s517 = smul.addr %s516, 8
        %s518 = scalar_lea.vmem %s5, %s517
      $region52: #{_lambda_.6} parent=47 // pred_fallthru
        _
    $region48: #{_lambda_.6} parent=5 // pred_fallthru
      _
  $region6: #{_lambda_.6} parent=0 // loop_footer
    %s15 = sadd.s32 1, %s11
  $region7: #{_lambda_.6} parent=0 // loop_footer_branch
    %10 = sbr.rel target = $region3
  $region8: #{_lambda_.6} parent=0 // loop_exit
    _

// kernel: _lambda_.8
$region0: #{_lambda_.8}
  #allocation0 [shape = 'u32[]', space=smem, size = 0x4, offset = 0x4, fixed_abs, tag = 'smem constant byte address 0x4 - core index']
  #allocation1 [shape = 'u32[144,128]{1,0:T(1,128)}', space=vmem, size = 0x12000, scoped, tag = 'internal scratch']
  #allocation2 [shape = 'f32[1,128]{1,0:T(1,128)}', space=vmem, size = 0x200, scoped, tag = 'scratch operand']
  #allocation3 [shape = 'f32[1,128]{1,0:T(1,128)}', space=vmem, size = 0x200, scoped, tag = 'scratch operand']
  #allocation4 [shape = 'f32[8,128]{1,0:T(8,128)}', space=vmem, size = 0x1000, scoped, tag = 'scratch operand']
  %s0 = inlined_call_operand.vmem [shape: f32[2,6,8,128], index: 0, kind: input, shape index: {}, may-alias: {0,1,2}]
  %s1 = inlined_call_operand.vmem [shape: f32[2,6,8,128], index: 1, kind: input, shape index: {}, may-alias: {0,1,2}]
  %s2 = inlined_call_operand.vmem [shape: f32[2,6,8,128], index: 2, kind: input, shape index: {}, may-alias: {0,1,2}]
  %s3 = inlined_call_operand.vmem [shape: f32[2,2,8,128], index: 3, kind: output, shape index: {}]
  %s4 = sld [smem:[#allocation0]]
  $region53: #{_lambda_.8} parent=0
    _
  %s6 = ssub.s32 1, %s4
  %s7 = scalar_select 0, %s6, %s4
  loop: start=0, step=1, limit=6
  $region2: #{_lambda_.8} parent=0 // loop_pre_header
    _
  $region3: #{_lambda_.8} parent=0 // loop_header
    %s9 = sphi 0, %s13
    %p10 = scmp.ge.s32.totalorder %s9, 6
    %s16 = sphi 0, %s42
    %s17 = sphi 0, %s38
    %s18 = sphi 0, %s34
    %s19 = sphi 0, %s30
    %s20 = sphi 0, %s16
    %s21 = sphi 0, %s17
    %s22 = sphi 0, %s18
    %s23 = sphi 0, %s19
    %s24 = sphi 0, %s20
    %s25 = sphi 0, %s21
    %s26 = sphi 0, %s22
    %s27 = sphi 0, %s23
    %s49 = sphi 0, %s51
    %s52 = sphi 0, %s49
    %s53 = sphi 0, %s52
    %s69 = sphi 0, %s53
    %s81 = sphi 0, %s83
    %s84 = sphi 0, %s81
    %s85 = sphi 0, %s84
    %s101 = sphi 0, %s85
    %s113 = sphi 0, %s115
    %s116 = sphi 0, %s113
    %s117 = sphi 0, %s116
    %s133 = sphi 0, %s117
    %s143 = sphi 0, %s145
    %s146 = sphi 0, %s143
    %s147 = sphi 0, %s146
    %s163 = sphi 0, %s147
  $region4: #{_lambda_.8} parent=0 // loop_header_branch
    %12 = sbr.rel (%p10) target = $region8
  $region5: #{_lambda_.8} parent=0 // loop_body
    %s14 = ssub.s32 %s9, 1
    %s15 = ssub.s32 %s9, 2
    %s28 = sadd.s32 1, %s19
    %p29 = scmp.ge.s32.totalorder %s28, 1
    %s30 = scalar_select %p29, 0, %s28
    %s31 = sadd.s32 1, %s18
    %s32 = scalar_select %p29, %s31, %s18
    %p33 = scmp.ge.s32.totalorder %s32, 1
    %s34 = scalar_select %p33, 0, %s32
    %s35 = sadd.s32 1, %s17
    %s36 = scalar_select %p33, %s35, %s17
    %p37 = scmp.ge.s32.totalorder %s36, 2
    %s38 = scalar_select %p37, 0, %s36
    %s39 = sadd.s32 1, %s16
    %s40 = scalar_select %p37, %s39, %s16
    %p41 = scmp.ge.s32.totalorder %s40, 2
    %s42 = scalar_select %p41, 0, %s40
    %s43 = ssub.s32 %s16, %s42
    %s44 = ssub.s32 %s17, %s38
    %s45 = sor.u32 %s43, %s44
    %s46 = ssub.s32 %s18, %s34
    %s47 = sor.u32 %s45, %s46
    %p48 = scmp.eq.s32.totalorder %s47, 0
    %s50 = sadd.s32 %s49, 1
    %s51 = scalar_select %p48, %s49, %s50
    %p54 = pneg %p48
    %p55 = scmp.eq.s32.totalorder %s9, 3
    %p56 = por %p54, %p55
    %p57 = scmp.ne.s32.totalorder %s49, %s52
    %p58 = scmp.eq.s32.totalorder %s9, 0
    %p59 = por %p57, %p58
    %p60 = scmp.ne.s32.totalorder %s49, %s52
    %p61 = scmp.eq.s32.totalorder %s14, 3
    %p62 = por %p60, %p61
    %p63 = scmp.ne.s32.totalorder %s52, %s53
    %p64 = scmp.eq.s32.totalorder %s14, 0
    %p65 = por %p63, %p64
    %p66 = scmp.ne.s32.totalorder %s52, %s53
    %p67 = scmp.eq.s32.totalorder %s15, 3
    %p68 = por %p66, %p67
    %p70 = scmp.ne.s32.totalorder %s53, %s69
    %p71 = scmp.eq.s32.totalorder %s15, 0
    %p72 = por %p70, %p71
    %s73 = sadd.s32 %s17, 2
    %s74 = sadd.s32 %s38, 2
    %s75 = ssub.s32 %s16, %s42
    %s76 = ssub.s32 %s73, %s74
    %s77 = sor.u32 %s75, %s76
    %s78 = ssub.s32 %s19, %s30
    %s79 = sor.u32 %s77, %s78
    %p80 = scmp.eq.s32.totalorder %s79, 0
    %s82 = sadd.s32 %s81, 1
    %s83 = scalar_select %p80, %s81, %s82
    %p86 = pneg %p80
    %p87 = scmp.eq.s32.totalorder %s9, 3
    %p88 = por %p86, %p87
    %p89 = scmp.ne.s32.totalorder %s81, %s84
    %p90 = scmp.eq.s32.totalorder %s9, 0
    %p91 = por %p89, %p90
    %p92 = scmp.ne.s32.totalorder %s81, %s84
    %p93 = scmp.eq.s32.totalorder %s14, 3
    %p94 = por %p92, %p93
    %p95 = scmp.ne.s32.totalorder %s84, %s85
    %p96 = scmp.eq.s32.totalorder %s14, 0
    %p97 = por %p95, %p96
    %p98 = scmp.ne.s32.totalorder %s84, %s85
    %p99 = scmp.eq.s32.totalorder %s15, 3
    %p100 = por %p98, %p99
    %p102 = scmp.ne.s32.totalorder %s85, %s101
    %p103 = scmp.eq.s32.totalorder %s15, 0
    %p104 = por %p102, %p103
    %s105 = sadd.s32 %s17, 4
    %s106 = sadd.s32 %s38, 4
    %s107 = ssub.s32 %s16, %s42
    %s108 = ssub.s32 %s105, %s106
    %s109 = sor.u32 %s107, %s108
    %s110 = ssub.s32 %s19, %s30
    %s111 = sor.u32 %s109, %s110
    %p112 = scmp.eq.s32.totalorder %s111, 0
    %s114 = sadd.s32 %s113, 1
    %s115 = scalar_select %p112, %s113, %s114
    %p118 = pneg %p112
    %p119 = scmp.eq.s32.totalorder %s9, 3
    %p120 = por %p118, %p119
    %p121 = scmp.ne.s32.totalorder %s113, %s116
    %p122 = scmp.eq.s32.totalorder %s9, 0
    %p123 = por %p121, %p122
    %p124 = scmp.ne.s32.totalorder %s113, %s116
    %p125 = scmp.eq.s32.totalorder %s14, 3
    %p126 = por %p124, %p125
    %p127 = scmp.ne.s32.totalorder %s116, %s117
    %p128 = scmp.eq.s32.totalorder %s14, 0
    %p129 = por %p127, %p128
    %p130 = scmp.ne.s32.totalorder %s116, %s117
    %p131 = scmp.eq.s32.totalorder %s15, 3
    %p132 = por %p130, %p131
    %p134 = scmp.ne.s32.totalorder %s117, %s133
    %p135 = scmp.eq.s32.totalorder %s15, 0
    %p136 = por %p134, %p135
    %s137 = ssub.s32 %s16, %s42
    %s138 = ssub.s32 %s17, %s38
    %s139 = sor.u32 %s137, %s138
    %s140 = ssub.s32 %s18, %s34
    %s141 = sor.u32 %s139, %s140
    %p142 = scmp.eq.s32.totalorder %s141, 0
    %s144 = sadd.s32 %s143, 1
    %s145 = scalar_select %p142, %s143, %s144
    %p148 = pneg %p142
    %p149 = scmp.eq.s32.totalorder %s9, 3
    %p150 = por %p148, %p149
    %p151 = scmp.ne.s32.totalorder %s143, %s146
    %p152 = scmp.eq.s32.totalorder %s9, 0
    %p153 = por %p151, %p152
    %p154 = scmp.ne.s32.totalorder %s143, %s146
    %p155 = scmp.eq.s32.totalorder %s14, 3
    %p156 = por %p154, %p155
    %p157 = scmp.ne.s32.totalorder %s146, %s147
    %p158 = scmp.eq.s32.totalorder %s14, 0
    %p159 = por %p157, %p158
    %p160 = scmp.ne.s32.totalorder %s146, %s147
    %p161 = scmp.eq.s32.totalorder %s15, 3
    %p162 = por %p160, %p161
    %p164 = scmp.ne.s32.totalorder %s147, %s163
    %p165 = scmp.eq.s32.totalorder %s15, 0
    %p166 = por %p164, %p165
    %p167 = scmp.le.s32.totalorder 1, %s9
    %p168 = scmp.lt.s32.totalorder %s9, 5
    %p169 = pnand %p167, %p168
    %p170 = pneg %p169
    // Predicated region
    $region9: #{_lambda_.8} parent=5 // pred_check
      _
    $region10: #{_lambda_.8} parent=5 // pred_check_branch
      %172 = sbr.rel (%p169) target = $region12
    $region11: #{_lambda_.8} parent=5 // pred_region
      %s173 = ssub.s32 %s9, 1
    $region12: #{_lambda_.8} parent=5 // pred_fallthru
      _
    %p174 = scmp.lt.s32.totalorder %s9, 4
    // Predicated region
    $region13: #{_lambda_.8} parent=5 // pred_check
      %p175 = pneg %p174
    $region14: #{_lambda_.8} parent=5 // pred_check_branch
      %177 = sbr.rel (%p175) target = $region16
    $region15: #{_lambda_.8} parent=5 // pred_region
      // Predicated region
      $region17: #{_lambda_.8} parent=15 // pred_check
        %p178 = pneg %p59
      $region18: #{_lambda_.8} parent=15 // pred_check_branch
        %180 = sbr.rel (%p178) target = $region20
      $region19: #{_lambda_.8} parent=15 // pred_region
        %p181 = scmp.lt.s32.totalorder %s16, 1
        %s182 = scalar_select %p181, %s16, 1
        %p183 = scmp.lt.s32.totalorder %s17, 5
        %s184 = scalar_select %p183, %s17, 5
        %p185 = scmp.lt.s32.totalorder %s18, 0
        %s186 = scalar_select %p185, %s18, 0
        %s187 = sadd.s32 %s186, %s184
        %s188 = smul.addr %s182, 6
        %s189 = sadd.s32 %s187, %s188
        %s190 = smul.addr %s189, 8
        %s191 = scalar_lea.vmem %s0, %s190
      $region20: #{_lambda_.8} parent=15 // pred_fallthru
        _
      // Predicated region
      $region21: #{_lambda_.8} parent=15 // pred_check
        %p192 = pneg %p91
      $region22: #{_lambda_.8} parent=15 // pred_check_branch
        %194 = sbr.rel (%p192) target = $region24
      $region23: #{_lambda_.8} parent=15 // pred_region
        %s195 = sadd.s32 %s17, 2
        %p196 = scmp.lt.s32.totalorder %s16, 1
        %s197 = scalar_select %p196, %s16, 1
        %p198 = scmp.lt.s32.totalorder %s195, 5
        %s199 = scalar_select %p198, %s195, 5
        %p200 = scmp.lt.s32.totalorder %s19, 0
        %s201 = scalar_select %p200, %s19, 0
        %s202 = sadd.s32 %s201, %s199
        %s203 = smul.addr %s197, 6
        %s204 = sadd.s32 %s202, %s203
        %s205 = smul.addr %s204, 8
        %s206 = scalar_lea.vmem %s1, %s205
        %s207 = sadd.s32 %s17, 2
      $region24: #{_lambda_.8} parent=15 // pred_fallthru
        _
      // Predicated region
      $region25: #{_lambda_.8} parent=15 // pred_check
        %p208 = pneg %p123
      $region26: #{_lambda_.8} parent=15 // pred_check_branch
        %210 = sbr.rel (%p208) target = $region28
      $region27: #{_lambda_.8} parent=15 // pred_region
        %s211 = sadd.s32 %s17, 4
        %p212 = scmp.lt.s32.totalorder %s16, 1
        %s213 = scalar_select %p212, %s16, 1
        %p214 = scmp.lt.s32.totalorder %s211, 5
        %s215 = scalar_select %p214, %s211, 5
        %p216 = scmp.lt.s32.totalorder %s19, 0
        %s217 = scalar_select %p216, %s19, 0
        %s218 = sadd.s32 %s217, %s215
        %s219 = smul.addr %s213, 6
        %s220 = sadd.s32 %s218, %s219
        %s221 = smul.addr %s220, 8
        %s222 = scalar_lea.vmem %s2, %s221
        %s223 = sadd.s32 %s17, 4
      $region28: #{_lambda_.8} parent=15 // pred_fallthru
        _
    $region16: #{_lambda_.8} parent=5 // pred_fallthru
      _
    %p224 = scmp.le.s32.totalorder 1, %s9
    %p225 = scmp.lt.s32.totalorder %s9, 5
    %p226 = pnand %p224, %p225
    %p227 = pneg %p226
    // Predicated region
    $region29: #{_lambda_.8} parent=5 // pred_check
      _
    $region30: #{_lambda_.8} parent=5 // pred_check_branch
      %229 = sbr.rel (%p226) target = $region32
    $region31: #{_lambda_.8} parent=5 // pred_region
      %s230 = ssub.s32 %s9, 1
      %p231 = scmp.lt.s32.totalorder %s20, 1
      %s232 = scalar_select %p231, %s20, 1
      %p233 = scmp.lt.s32.totalorder %s21, 5
      %s234 = scalar_select %p233, %s21, 5
      %p235 = scmp.lt.s32.totalorder %s22, 0
      %s236 = scalar_select %p235, %s22, 0
      %s237 = sadd.s32 %s236, %s234
      %s238 = smul.addr %s232, 6
      %s239 = sadd.s32 %s237, %s238
      %s240 = smul.addr %s239, 8
      %s241 = scalar_lea.vmem %s0, %s240
      %p242 = pneg %p65
      %p243 = pneg %p62
      %s244 = sadd.s32 %s21, 2
      %p245 = scmp.lt.s32.totalorder %s20, 1
      %s246 = scalar_select %p245, %s20, 1
      %p247 = scmp.lt.s32.totalorder %s244, 5
      %s248 = scalar_select %p247, %s244, 5
      %p249 = scmp.lt.s32.totalorder %s23, 0
      %s250 = scalar_select %p249, %s23, 0
      %s251 = sadd.s32 %s250, %s248
      %s252 = smul.addr %s246, 6
      %s253 = sadd.s32 %s251, %s252
      %s254 = smul.addr %s253, 8
      %s255 = scalar_lea.vmem %s1, %s254
      %p256 = pneg %p97
      %p257 = pneg %p94
      %s258 = sadd.s32 %s21, 4
      %p259 = scmp.lt.s32.totalorder %s20, 1
      %s260 = scalar_select %p259, %s20, 1
      %p261 = scmp.lt.s32.totalorder %s258, 5
      %s262 = scalar_select %p261, %s258, 5
      %p263 = scmp.lt.s32.totalorder %s23, 0
      %s264 = scalar_select %p263, %s23, 0
      %s265 = sadd.s32 %s264, %s262
      %s266 = smul.addr %s260, 6
      %s267 = sadd.s32 %s265, %s266
      %s268 = smul.addr %s267, 8
      %s269 = scalar_lea.vmem %s2, %s268
      %p270 = pneg %p129
      %p271 = pneg %p126
      %p272 = pneg %p159
      %p273 = pneg %p156
      %p274 = scmp.lt.s32.totalorder %s20, 1
      %s275 = scalar_select %p274, %s20, 1
      %p276 = scmp.lt.s32.totalorder %s21, 1
      %s277 = scalar_select %p276, %s21, 1
      %p278 = scmp.lt.s32.totalorder %s22, 0
      %s279 = scalar_select %p278, %s22, 0
      %s280 = sadd.s32 %s279, %s277
      %s281 = smul.addr %s275, 2
      %s282 = sadd.s32 %s280, %s281
      %s283 = smul.addr %s282, 8
      %s284 = scalar_lea.vmem %s3, %s283
      %p285 = scmp.lt.s32.totalorder %s20, 1
      %s286 = scalar_select %p285, %s20, 1
      %p287 = scmp.lt.s32.totalorder %s21, 5
      %s288 = scalar_select %p287, %s21, 5
      %p289 = scmp.lt.s32.totalorder %s22, 0
      %s290 = scalar_select %p289, %s22, 0
      %s291 = sadd.s32 %s290, %s288
      %s292 = smul.addr %s286, 6
      %s293 = sadd.s32 %s291, %s292
      %s294 = smul.addr %s293, 8
      %s295 = scalar_lea.vmem %s0, %s294
      %s296 = sadd.s32 %s21, 2
      %p297 = scmp.lt.s32.totalorder %s20, 1
      %s298 = scalar_select %p297, %s20, 1
      %p299 = scmp.lt.s32.totalorder %s296, 5
      %s300 = scalar_select %p299, %s296, 5
      %p301 = scmp.lt.s32.totalorder %s23, 0
      %s302 = scalar_select %p301, %s23, 0
      %s303 = sadd.s32 %s302, %s300
      %s304 = smul.addr %s298, 6
      %s305 = sadd.s32 %s303, %s304
      %s306 = smul.addr %s305, 8
      %s307 = scalar_lea.vmem %s1, %s306
      %s308 = sadd.s32 %s21, 2
      %s309 = sadd.s32 %s21, 4
      %p310 = scmp.lt.s32.totalorder %s20, 1
      %s311 = scalar_select %p310, %s20, 1
      %p312 = scmp.lt.s32.totalorder %s309, 5
      %s313 = scalar_select %p312, %s309, 5
      %p314 = scmp.lt.s32.totalorder %s23, 0
      %s315 = scalar_select %p314, %s23, 0
      %s316 = sadd.s32 %s315, %s313
      %s317 = smul.addr %s311, 6
      %s318 = sadd.s32 %s316, %s317
      %s319 = smul.addr %s318, 8
      %s320 = scalar_lea.vmem %s2, %s319
      %s321 = sadd.s32 %s21, 4
      %p322 = scmp.lt.s32.totalorder %s20, 1
      %s323 = scalar_select %p322, %s20, 1
      %p324 = scmp.lt.s32.totalorder %s21, 1
      %s325 = scalar_select %p324, %s21, 1
      %p326 = scmp.lt.s32.totalorder %s22, 0
      %s327 = scalar_select %p326, %s22, 0
      %s328 = sadd.s32 %s327, %s325
      %s329 = smul.addr %s323, 2
      %s330 = sadd.s32 %s328, %s329
      %s331 = smul.addr %s330, 8
      %s332 = scalar_lea.vmem %s3, %s331
      %p334 = scmp.eq.s32.totalorder %s23, 0
      // Predicated region
      $region33: #{_lambda_.8} parent=31 // pred_check
        %p335 = pneg %p334
      $region34: #{_lambda_.8} parent=31 // pred_check_branch
        %337 = sbr.rel (%p335) target = $region36
      $region35: #{_lambda_.8} parent=31 // pred_region
        %338 = vst [vmem:[#allocation2] sm:$0x1] -inf
        %339 = vst [vmem:[#allocation3] sm:$0x1] 0.0
        %340 = vst [vmem:[#allocation4] sm:$0xff] 0.0
      $region36: #{_lambda_.8} parent=31 // pred_fallthru
        _
      %v341 = vld [vmem:[%s295] sm:$0xff]
      %v342 = vmul.f32 %v341, 0.35355338
      %v343 = vpack.c.bf16 %v342, %v342
      %v344 = vld [vmem:[%s307] sm:$0xff]
      %v345 = vpack.c.bf16 %v344, %v344
      %v346 = vld [vmem:[%s320] sm:$0xff]
      %v347 = vpack.c.bf16 %v346, %v346
      %348 = vxpose.xlu0.c.b16.start [1/8] %v345, 128
      %349 = vxpose.xlu0.c.b16.cont [2/8] 0, 128
      %350 = vxpose.xlu0.c.b16.cont [3/8] 0, 128
      %351 = vxpose.xlu0.c.b16.cont [4/8] 0, 128
      %352 = vxpose.xlu0.c.b16.cont [5/8] 0, 128
      %353 = vxpose.xlu0.c.b16.cont [6/8] 0, 128
      %354 = vxpose.xlu0.c.b16.cont [7/8] 0, 128
      %355 = vxpose.xlu0.c.b16.end [8/8] 0, 128
      %v356 = vpop.trf.xlu0
      %v357 = vpop.trf.xlu0
      %v358 = vpop.trf.xlu0
      %v359 = vpop.trf.xlu0
      %v360 = vpop.trf.xlu0
      %v361 = vpop.trf.xlu0
      %v362 = vpop.trf.xlu0
      %v363 = vpop.trf.xlu0
      %vm364 = vcmask 64512
      %v366 = vsel %vm364, %v356, 0
      %v369 = vsel %vm364, %v357, 0
      %v372 = vsel %vm364, %v358, 0
      %v375 = vsel %vm364, %v359, 0
      %v378 = vsel %vm364, %v360, 0
      %v381 = vsel %vm364, %v361, 0
      %v384 = vsel %vm364, %v362, 0
      %v387 = vsel %vm364, %v363, 0
      %vm389 = vcmask 1043456
      %v391 = vsel %vm389, %v343, 0
      %393 = vmatprep.subr.bf16.mxu0 0
      %394 = vmatpush1.bf16.msra.mxu0 %v391
      %395 = vmatprep.subr.bf16.mxu0 0
      %396 = vmatpush1.bf16.msra.mxu0 0
      %397 = vmatprep.subr.bf16.mxu0 0
      %398 = vmatpush1.bf16.msra.mxu0 0
      %399 = vmatprep.subr.bf16.mxu0 0
      %400 = vmatpush1.bf16.msra.mxu0 0
      %401 = vmatprep.subr.bf16.mxu0 0
      %402 = vmatpush1.bf16.msra.mxu0 0
      %403 = vmatprep.subr.bf16.mxu0 0
      %404 = vmatpush1.bf16.msra.mxu0 0
      %405 = vmatprep.subr.bf16.mxu0 0
      %406 = vmatpush1.bf16.msra.mxu0 0
      %407 = vmatprep.subr.bf16.mxu0 0
      %408 = vmatpush1.bf16.msra.mxu0 0
      %409 = vmatprep.subr.bf16.mxu0 0
      %410 = vmatpush1.bf16.msra.mxu0 0
      %411 = vmatprep.subr.bf16.mxu0 0
      %412 = vmatpush1.bf16.msra.mxu0 0
      %413 = vmatprep.subr.bf16.mxu0 0
      %414 = vmatpush1.bf16.msra.mxu0 0
      %415 = vmatprep.subr.bf16.mxu0 0
      %416 = vmatpush1.bf16.msra.mxu0 0
      %417 = vmatprep.subr.bf16.mxu0 0
      %418 = vmatpush1.bf16.msra.mxu0 0
      %419 = vmatprep.subr.bf16.mxu0 0
      %420 = vmatpush1.bf16.msra.mxu0 0
      %421 = vmatprep.subr.bf16.mxu0 0
      %422 = vmatpush1.bf16.msra.mxu0 0
      %423 = vmatprep.subr.bf16.mxu0 0
      %424 = vmatpush1.bf16.msra.mxu0 0
      %425 = vmatprep.mubr.bf16.mxu0 0
      %426 = vmatmul.mubr.bf16.gmra.mrb[0].mxu0 %v366
      %v427 = vpop.f32.mrb[0].mxu0
      %v428 = vadd.f32 0.0, %v427
      %v429 = vpop.f32.mrb[0].mxu0
      %v430 = vpop.f32.mrb[0].mxu0
      %v431 = vadd.f32 0.0, %v430
      %v432 = vpop.f32.mrb[0].mxu0
      %433 = vmatprep.mubr.bf16.mxu0 0
      %434 = vmatmul.mubr.bf16.gmra.mrb[0].mxu0 %v369
      %v435 = vpop.f32.mrb[0].mxu0
      %v436 = vadd.f32 0.0, %v435
      %v437 = vpop.f32.mrb[0].mxu0
      %v438 = vpop.f32.mrb[0].mxu0
      %v439 = vadd.f32 0.0, %v438
      %v440 = vpop.f32.mrb[0].mxu0
      %441 = vmatprep.mubr.bf16.mxu0 0
      %442 = vmatmul.mubr.bf16.gmra.mrb[0].mxu0 %v372
      %v443 = vpop.f32.mrb[0].mxu0
      %v444 = vadd.f32 0.0, %v443
      %v445 = vpop.f32.mrb[0].mxu0
      %v446 = vpop.f32.mrb[0].mxu0
      %v447 = vadd.f32 0.0, %v446
      %v448 = vpop.f32.mrb[0].mxu0
      %449 = vmatprep.mubr.bf16.mxu0 0
      %450 = vmatmul.mubr.bf16.gmra.mrb[0].mxu0 %v375
      %v451 = vpop.f32.mrb[0].mxu0
      %v452 = vadd.f32 0.0, %v451
      %v453 = vpop.f32.mrb[0].mxu0
      %v454 = vpop.f32.mrb[0].mxu0
      %v455 = vadd.f32 0.0, %v454
      %v456 = vpop.f32.mrb[0].mxu0
      %457 = vmatprep.mubr.bf16.mxu0 0
      %458 = vmatmul.mubr.bf16.gmra.mrb[0].mxu0 %v378
      %v459 = vpop.f32.mrb[0].mxu0
      %v460 = vadd.f32 0.0, %v459
      %v461 = vpop.f32.mrb[0].mxu0
      %v462 = vpop.f32.mrb[0].mxu0
      %v463 = vadd.f32 0.0, %v462
      %v464 = vpop.f32.mrb[0].mxu0
      %465 = vmatprep.mubr.bf16.mxu0 0
      %466 = vmatmul.mubr.bf16.gmra.mrb[0].mxu0 %v381
      %v467 = vpop.f32.mrb[0].mxu0
      %v468 = vadd.f32 0.0, %v467
      %v469 = vpop.f32.mrb[0].mxu0
      %v470 = vpop.f32.mrb[0].mxu0
      %v471 = vadd.f32 0.0, %v470
      %v472 = vpop.f32.mrb[0].mxu0
      %473 = vmatprep.mubr.bf16.mxu0 0
      %474 = vmatmul.mubr.bf16.gmra.mrb[0].mxu0 %v384
      %v475 = vpop.f32.mrb[0].mxu0
      %v476 = vadd.f32 0.0, %v475
      %v477 = vpop.f32.mrb[0].mxu0
      %v478 = vpop.f32.mrb[0].mxu0
      %v479 = vadd.f32 0.0, %v478
      %v480 = vpop.f32.mrb[0].mxu0
      %481 = vmatprep.mubr.bf16.mxu0 0
      %482 = vmatmul.mubr.bf16.gmra.mrb[0].mxu0 %v387
      %v483 = vpop.f32.mrb[0].mxu0
      %v484 = vadd.f32 0.0, %v483
      %v485 = vpop.f32.mrb[0].mxu0
      %v486 = vpop.f32.mrb[0].mxu0
      %v487 = vadd.f32 0.0, %v486
      %v488 = vpop.f32.mrb[0].mxu0
      %489 = vdwg.mxu0
      %s490 = smul.u32 %s23, 128
      %v491 = vlaneseq
      %v492 = vshrl.u32 %v491, 7
      %v493 = vadd.s32 %v492, 8
      %v494 = vadd.s32 %v492, 16
      %v495 = vadd.s32 %v492, 24
      %v496 = vadd.s32 %v492, 32
      %v497 = vadd.s32 %v492, 40
      %v498 = vadd.s32 %v492, 48
      %v499 = vadd.s32 %v492, 56
      %v500 = vadd.s32 %v492, 64
      %v501 = vadd.s32 %v492, 72
      %v502 = vadd.s32 %v492, 80
      %v503 = vadd.s32 %v492, 88
      %v504 = vadd.s32 %v492, 96
      %v505 = vadd.s32 %v492, 104
      %v506 = vadd.s32 %v492, 112
      %v507 = vadd.s32 %v492, 120
      %v508 = vstv %s490
      %v509 = vadd.s32 %v508, %v492
      %v510 = vadd.s32 %v508, %v493
      %v511 = vadd.s32 %v508, %v494
      %v512 = vadd.s32 %v508, %v495
      %v513 = vadd.s32 %v508, %v496
      %v514 = vadd.s32 %v508, %v497
      %v515 = vadd.s32 %v508, %v498
      %v516 = vadd.s32 %v508, %v499
      %v517 = vadd.s32 %v508, %v500
      %v518 = vadd.s32 %v508, %v501
      %v519 = vadd.s32 %v508, %v502
      %v520 = vadd.s32 %v508, %v503
      %v521 = vadd.s32 %v508, %v504
      %v522 = vadd.s32 %v508, %v505
      %v523 = vadd.s32 %v508, %v506
      %v524 = vadd.s32 %v508, %v507
      %vm525 = vcmp.lt.s32.totalorder %v509, 64
      %vm526 = vcmp.lt.s32.totalorder %v510, 64
      %vm527 = vcmp.lt.s32.totalorder %v511, 64
      %vm528 = vcmp.lt.s32.totalorder %v512, 64
      %vm529 = vcmp.lt.s32.totalorder %v513, 64
      %vm530 = vcmp.lt.s32.totalorder %v514, 64
      %vm531 = vcmp.lt.s32.totalorder %v515, 64
      %vm532 = vcmp.lt.s32.totalorder %v516, 64
      %vm533 = vcmp.lt.s32.totalorder %v517, 64
      %vm534 = vcmp.lt.s32.totalorder %v518, 64
      %vm535 = vcmp.lt.s32.totalorder %v519, 64
      %vm536 = vcmp.lt.s32.totalorder %v520, 64
      %vm537 = vcmp.lt.s32.totalorder %v521, 64
      %vm538 = vcmp.lt.s32.totalorder %v522, 64
      %vm539 = vcmp.lt.s32.totalorder %v523, 64
      %vm540 = vcmp.lt.s32.totalorder %v524, 64
      %v541 = vsel %vm525, 1, 0
      %v542 = vsel %vm526, 1, 0
      %v543 = vsel %vm527, 1, 0
      %v544 = vsel %vm528, 1, 0
      %v545 = vsel %vm529, 1, 0
      %v546 = vsel %vm530, 1, 0
      %v547 = vsel %vm531, 1, 0
      %v548 = vsel %vm532, 1, 0
      %v549 = vsel %vm533, 1, 0
      %v550 = vsel %vm534, 1, 0
      %v551 = vsel %vm535, 1, 0
      %v552 = vsel %vm536, 1, 0
      %v553 = vsel %vm537, 1, 0
      %v554 = vsel %vm538, 1, 0
      %v555 = vsel %vm539, 1, 0
      %v556 = vsel %vm540, 1, 0
      %vm557 = vcmp.eq.s32.totalorder %v541, 1
      %vm558 = vcmp.eq.s32.totalorder %v542, 1
      %vm559 = vcmp.eq.s32.totalorder %v543, 1
      %vm560 = vcmp.eq.s32.totalorder %v544, 1
      %vm561 = vcmp.eq.s32.totalorder %v545, 1
      %vm562 = vcmp.eq.s32.totalorder %v546, 1
      %vm563 = vcmp.eq.s32.totalorder %v547, 1
      %vm564 = vcmp.eq.s32.totalorder %v548, 1
      %vm565 = vcmp.eq.s32.totalorder %v549, 1
      %vm566 = vcmp.eq.s32.totalorder %v550, 1
      %vm567 = vcmp.eq.s32.totalorder %v551, 1
      %vm568 = vcmp.eq.s32.totalorder %v552, 1
      %vm569 = vcmp.eq.s32.totalorder %v553, 1
      %vm570 = vcmp.eq.s32.totalorder %v554, 1
      %vm571 = vcmp.eq.s32.totalorder %v555, 1
      %vm572 = vcmp.eq.s32.totalorder %v556, 1
      %v573 = vsel %vm557, %v428, -1e+30
      %v574 = vsel %vm558, %v431, -1e+30
      %v575 = vsel %vm559, %v436, -1e+30
      %v576 = vsel %vm560, %v439, -1e+30
      %v577 = vsel %vm561, %v444, -1e+30
      %v578 = vsel %vm562, %v447, -1e+30
      %v579 = vsel %vm563, %v452, -1e+30
      %v580 = vsel %vm564, %v455, -1e+30
      %v581 = vsel %vm565, %v460, -1e+30
      %v582 = vsel %vm566, %v463, -1e+30
      %v583 = vsel %vm567, %v468, -1e+30
      %v584 = vsel %vm568, %v471, -1e+30
      %v585 = vsel %vm569, %v476, -1e+30
      %v586 = vsel %vm570, %v479, -1e+30
      %v587 = vsel %vm571, %v484, -1e+30
      %v588 = vsel %vm572, %v487, -1e+30
      %v589 = vld [vmem:[#allocation2] sm:$0x1]
      %v590 = vmax.f32 %v573, %v577
      %v591 = vmax.f32 %v574, %v578
      %v592 = vmax.f32 %v575, %v579
      %v593 = vmax.f32 %v576, %v580
      %v594 = vmax.f32 %v590, %v581
      %v595 = vmax.f32 %v591, %v582
      %v596 = vmax.f32 %v592, %v583
      %v597 = vmax.f32 %v593, %v584
      %v598 = vmax.f32 %v594, %v585
      %v599 = vmax.f32 %v595, %v586
      %v600 = vmax.f32 %v596, %v587
      %v601 = vmax.f32 %v597, %v588
      %v602 = vmax.f32 %v598, %v599
      %v603 = vmax.f32 %v600, %v601
      %v604 = vmax.f32 %v602, %v603
      %v605 = vrot.slane %v604, 4
      %v606 = vmax.f32 %v604, %v605
      %v607 = vrot.slane %v606, 2
      %v608 = vmax.f32 %v606, %v607
      %v609 = vrot.slane %v608, 1
      %v610 = vmax.f32 %v608, %v609
      %v611 = vmax.f32 %v589, %v610
      %v612 = vsub.f32 %v589, %v611
      %v613 = vmul.f32 %v612, 1.442695
      %v614 = vpow.pop %v613
      %v616 = vlaneseq
      %v617 = vshrl.u32 %v616, 7
      %v618 = vsub.s32 0, %v617
      %v619 = vrot.slane %v611, %v618
      %v621 = vsub.f32 %v573, %v619
      %v622 = vsub.f32 %v574, %v619
      %v623 = vsub.f32 %v575, %v619
      %v624 = vsub.f32 %v576, %v619
      %v625 = vsub.f32 %v577, %v619
      %v626 = vsub.f32 %v578, %v619
      %v627 = vsub.f32 %v579, %v619
      %v628 = vsub.f32 %v580, %v619
      %v629 = vsub.f32 %v581, %v619
      %v630 = vsub.f32 %v582, %v619
      %v631 = vsub.f32 %v583, %v619
      %v632 = vsub.f32 %v584, %v619
      %v633 = vsub.f32 %v585, %v619
      %v634 = vsub.f32 %v586, %v619
      %v635 = vsub.f32 %v587, %v619
      %v636 = vsub.f32 %v588, %v619
      %v637 = vmul.f32 %v621, 1.442695
      %v638 = vpow.pop %v637
      %v639 = vmul.f32 %v622, 1.442695
      %v640 = vpow.pop %v639
      %v641 = vmul.f32 %v623, 1.442695
      %v642 = vpow.pop %v641
      %v643 = vmul.f32 %v624, 1.442695
      %v644 = vpow.pop %v643
      %v645 = vmul.f32 %v625, 1.442695
      %v646 = vpow.pop %v645
      %v647 = vmul.f32 %v626, 1.442695
      %v648 = vpow.pop %v647
      %v649 = vmul.f32 %v627, 1.442695
      %v650 = vpow.pop %v649
      %v651 = vmul.f32 %v628, 1.442695
      %v652 = vpow.pop %v651
      %v653 = vmul.f32 %v629, 1.442695
      %v654 = vpow.pop %v653
      %v655 = vmul.f32 %v630, 1.442695
      %v656 = vpow.pop %v655
      %v657 = vmul.f32 %v631, 1.442695
      %v658 = vpow.pop %v657
      %v659 = vmul.f32 %v632, 1.442695
      %v660 = vpow.pop %v659
      %v661 = vmul.f32 %v633, 1.442695
      %v662 = vpow.pop %v661
      %v663 = vmul.f32 %v634, 1.442695
      %v664 = vpow.pop %v663
      %v665 = vmul.f32 %v635, 1.442695
      %v666 = vpow.pop %v665
      %v667 = vmul.f32 %v636, 1.442695
      %v668 = vpow.pop %v667
      %v669 = vld [vmem:[#allocation3] sm:$0x1]
      %v670 = vmul.f32 %v614, %v669
      %v671 = vadd.f32 %v638, %v640
      %v672 = vadd.f32 %v671, %v642
      %v673 = vadd.f32 %v672, %v644
      %v674 = vadd.f32 %v673, %v646
      %v675 = vadd.f32 %v674, %v648
      %v676 = vadd.f32 %v675, %v650
      %v677 = vadd.f32 %v676, %v652
      %v678 = vadd.f32 %v677, %v654
      %v679 = vadd.f32 %v678, %v656
      %v680 = vadd.f32 %v679, %v658
      %v681 = vadd.f32 %v680, %v660
      %v682 = vadd.f32 %v681, %v662
      %v683 = vadd.f32 %v682, %v664
      %v684 = vadd.f32 %v683, %v666
      %v685 = vadd.f32 %v684, %v668
      %v686 = vrot.slane %v685, 4
      %v687 = vadd.f32 %v685, %v686
      %v688 = vrot.slane %v687, 2
      %v689 = vadd.f32 %v687, %v688
      %v690 = vrot.slane %v689, 1
      %v691 = vadd.f32 %v689, %v690
      %v692 = vadd.f32 %v670, %v691
      %693 = vst [vmem:[#allocation3] sm:$0x1] %v692
      %v694 = vld [vmem:[#allocation4] sm:$0xff]
      %v696 = vlaneseq
      %v697 = vshrl.u32 %v696, 7
      %v698 = vsub.s32 0, %v697
      %v699 = vrot.slane %v614, %v698
      %v701 = vmul.f32 %v699, %v694
      %v702 = vpack.c.bf16 %v640, %v638
      %v703 = vpack.c.bf16 %v644, %v642
      %v704 = vpack.c.bf16 %v648, %v646
      %v705 = vpack.c.bf16 %v652, %v650
      %v706 = vpack.c.bf16 %v656, %v654
      %v707 = vpack.c.bf16 %v660, %v658
      %v708 = vpack.c.bf16 %v664, %v662
      %v709 = vpack.c.bf16 %v668, %v666
      %710 = vmatprep.subr.bf16.mxu0 0
      %711 = vmatpush1.bf16.msra.mxu0 %v702
      %712 = vmatprep.subr.bf16.mxu0 0
      %713 = vmatpush1.bf16.msra.mxu0 %v703
      %714 = vmatprep.subr.bf16.mxu0 0
      %715 = vmatpush1.bf16.msra.mxu0 %v704
      %716 = vmatprep.subr.bf16.mxu0 0
      %717 = vmatpush1.bf16.msra.mxu0 %v705
      %718 = vmatprep.subr.bf16.mxu0 0
      %719 = vmatpush1.bf16.msra.mxu0 %v706
      %720 = vmatprep.subr.bf16.mxu0 0
      %721 = vmatpush1.bf16.msra.mxu0 %v707
      %722 = vmatprep.subr.bf16.mxu0 0
      %723 = vmatpush1.bf16.msra.mxu0 %v708
      %724 = vmatprep.subr.bf16.mxu0 0
      %725 = vmatpush1.bf16.msra.mxu0 %v709
      %726 = vmatprep.subr.bf16.mxu0 0
      %727 = vmatpush1.bf16.msra.mxu0 0
      %728 = vmatprep.subr.bf16.mxu0 0
      %729 = vmatpush1.bf16.msra.mxu0 0
      %730 = vmatprep.subr.bf16.mxu0 0
      %731 = vmatpush1.bf16.msra.mxu0 0
      %732 = vmatprep.subr.bf16.mxu0 0
      %733 = vmatpush1.bf16.msra.mxu0 0
      %734 = vmatprep.subr.bf16.mxu0 0
      %735 = vmatpush1.bf16.msra.mxu0 0
      %736 = vmatprep.subr.bf16.mxu0 0
      %737 = vmatpush1.bf16.msra.mxu0 0
      %738 = vmatprep.subr.bf16.mxu0 0
      %739 = vmatpush1.bf16.msra.mxu0 0
      %740 = vmatprep.subr.bf16.mxu0 0
      %741 = vmatpush1.bf16.msra.mxu0 0
      %742 = vmatprep.mubr.bf16.mxu0 0
      %743 = vmatmul.mubr.bf16.gmra.mrb[0].mxu0 %v347
      %v744 = vpop.f32.mrb[0].mxu0
      %v745 = vadd.f32 0.0, %v744
      %v746 = vpop.f32.mrb[0].mxu0
      %v747 = vpop.f32.mrb[0].mxu0
      %v748 = vpop.f32.mrb[0].mxu0
      %749 = vdwg.mxu0
      %v750 = vadd.f32 %v701, %v745
      %751 = vst [vmem:[#allocation4] sm:$0xff] %v750
      %752 = vst [vmem:[#allocation2] sm:$0x1] %v611
      // Predicated region
      $region37: #{_lambda_.8} parent=31 // pred_check
        %p753 = pneg %p334
      $region38: #{_lambda_.8} parent=31 // pred_check_branch
        %755 = sbr.rel (%p753) target = $region40
      $region39: #{_lambda_.8} parent=31 // pred_region
        %v756 = vld [vmem:[#allocation4] sm:$0xff]
        %v757 = vld [vmem:[#allocation3] sm:$0x1]
        %v758 = vrcp.pop %v757
        %v760 = vlaneseq
        %v761 = vshrl.u32 %v760, 7
        %v762 = vsub.s32 0, %v761
        %v763 = vrot.slane %v758, %v762
        %v765 = vmul.f32 %v756, %v763
        %766 = vst [vmem:[%s332] sm:$0xff] %v765
      $region40: #{_lambda_.8} parent=31 // pred_fallthru
        _
      %p767 = scmp.lt.s32.totalorder %s20, 1
      %s768 = scalar_select %p767, %s20, 1
      %p769 = scmp.lt.s32.totalorder %s21, 1
      %s770 = scalar_select %p769, %s21, 1
      %p771 = scmp.lt.s32.totalorder %s22, 0
      %s772 = scalar_select %p771, %s22, 0
      %s773 = sadd.s32 %s772, %s770
      %s774 = smul.addr %s768, 2
      %s775 = sadd.s32 %s773, %s774
      %s776 = smul.addr %s775, 8
      %s777 = scalar_lea.vmem %s3, %s776
      // Predicated region
      $region41: #{_lambda_.8} parent=31 // pred_check
        %p778 = pneg %p156
      $region42: #{_lambda_.8} parent=31 // pred_check_branch
        %780 = sbr.rel (%p778) target = $region44
      $region43: #{_lambda_.8} parent=31 // pred_region
        _
      $region44: #{_lambda_.8} parent=31 // pred_fallthru
        _
    $region32: #{_lambda_.8} parent=5 // pred_fallthru
      _
    %p781 = scmp.le.s32.totalorder 2, %s9
    // Predicated region
    $region45: #{_lambda_.8} parent=5 // pred_check
      %p782 = pneg %p781
    $region46: #{_lambda_.8} parent=5 // pred_check_branch
      %784 = sbr.rel (%p782) target = $region48
    $region47: #{_lambda_.8} parent=5 // pred_region
      %s785 = ssub.s32 %s9, 2
      // Predicated region
      $region49: #{_lambda_.8} parent=47 // pred_check
        %p786 = pneg %p162
      $region50: #{_lambda_.8} parent=47 // pred_check_branch
        %788 = sbr.rel (%p786) target = $region52
      $region51: #{_lambda_.8} parent=47 // pred_region
        %p789 = scmp.lt.s32.totalorder %s24, 1
        %s790 = scalar_select %p789, %s24, 1
        %p791 = scmp.lt.s32.totalorder %s25, 1
        %s792 = scalar_select %p791, %s25, 1
        %p793 = scmp.lt.s32.totalorder %s26, 0
        %s794 = scalar_select %p793, %s26, 0
        %s795 = sadd.s32 %s794, %s792
        %s796 = smul.addr %s790, 2
        %s797 = sadd.s32 %s795, %s796
        %s798 = smul.addr %s797, 8
        %s799 = scalar_lea.vmem %s3, %s798
      $region52: #{_lambda_.8} parent=47 // pred_fallthru
        _
    $region48: #{_lambda_.8} parent=5 // pred_fallthru
      _
  $region6: #{_lambda_.8} parent=0 // loop_footer
    %s13 = sadd.s32 1, %s9
  $region7: #{_lambda_.8} parent=0 // loop_footer_branch
    %8 = sbr.rel target = $region3
  $region8: #{_lambda_.8} parent=0 // loop_exit
    _

// kernel: _lambda_.10
$region0: #{_lambda_.10}
  #allocation0 [shape = 'u32[]', space=smem, size = 0x4, offset = 0x4, fixed_abs, tag = 'smem constant byte address 0x4 - core index']
  #allocation1 [shape = 'u32[144,128]{1,0:T(1,128)}', space=vmem, size = 0x12000, scoped, tag = 'internal scratch']
  %s0 = inlined_call_operand.vmem [shape: f32[2,16,128], index: 0, kind: input, shape index: {}]
  %s1 = inlined_call_operand.vmem [shape: bf16[16,16], index: 1, kind: input, shape index: {}]
  %s2 = inlined_call_operand.vmem [shape: f32[16,1], index: 2, kind: input, shape index: {}]
  %s3 = inlined_call_operand.vmem [shape: f32[2,16,128], index: 3, kind: output, shape index: {}]
  %s4 = sld [smem:[#allocation0]]
  $region45: #{_lambda_.10} parent=0
    _
  %s6 = ssub.s32 1, %s4
  %s7 = scalar_select 0, %s6, %s4
  loop: start=0, step=1, limit=4
  $region2: #{_lambda_.10} parent=0 // loop_pre_header
    _
  $region3: #{_lambda_.10} parent=0 // loop_header
    %s9 = sphi 0, %s13
    %p10 = scmp.ge.s32.totalorder %s9, 4
    %s16 = sphi 0, %s28
    %s17 = sphi 0, %s24
    %s18 = sphi 0, %s16
    %s19 = sphi 0, %s17
    %s20 = sphi 0, %s18
    %s21 = sphi 0, %s19
    %s33 = sphi 0, %s35
    %s36 = sphi 0, %s33
    %s37 = sphi 0, %s36
    %s53 = sphi 0, %s37
    %s57 = sphi 0, %s57
    %s59 = sphi 0, %s57
    %s60 = sphi 0, %s59
    %s74 = sphi 0, %s60
    %s78 = sphi 0, %s78
    %s80 = sphi 0, %s78
    %s81 = sphi 0, %s80
    %s95 = sphi 0, %s81
    %s103 = sphi 0, %s105
    %s106 = sphi 0, %s103
    %s107 = sphi 0, %s106
    %s123 = sphi 0, %s107
  $region4: #{_lambda_.10} parent=0 // loop_header_branch
    %12 = sbr.rel (%p10) target = $region8
  $region5: #{_lambda_.10} parent=0 // loop_body
    %s14 = ssub.s32 %s9, 1
    %s15 = ssub.s32 %s9, 2
    %s22 = sadd.s32 1, %s17
    %p23 = scmp.ge.s32.totalorder %s22, 1
    %s24 = scalar_select %p23, 0, %s22
    %s25 = sadd.s32 1, %s16
    %s26 = scalar_select %p23, %s25, %s16
    %p27 = scmp.ge.s32.totalorder %s26, 2
    %s28 = scalar_select %p27, 0, %s26
    %s29 = ssub.s32 %s16, %s28
    %s30 = ssub.s32 %s17, %s24
    %s31 = sor.u32 %s29, %s30
    %p32 = scmp.eq.s32.totalorder %s31, 0
    %s34 = sadd.s32 %s33, 1
    %s35 = scalar_select %p32, %s33, %s34
    %p38 = pneg %p32
    %p39 = scmp.eq.s32.totalorder %s9, 1
    %p40 = por %p38, %p39
    %p41 = scmp.ne.s32.totalorder %s33, %s36
    %p42 = scmp.eq.s32.totalorder %s9, 0
    %p43 = por %p41, %p42
    %p44 = scmp.ne.s32.totalorder %s33, %s36
    %p45 = scmp.eq.s32.totalorder %s14, 1
    %p46 = por %p44, %p45
    %p47 = scmp.ne.s32.totalorder %s36, %s37
    %p48 = scmp.eq.s32.totalorder %s14, 0
    %p49 = por %p47, %p48
    %p50 = scmp.ne.s32.totalorder %s36, %s37
    %p51 = scmp.eq.s32.totalorder %s15, 1
    %p52 = por %p50, %p51
    %p54 = scmp.ne.s32.totalorder %s37, %s53
    %p55 = scmp.eq.s32.totalorder %s15, 0
    %p56 = por %p54, %p55
    %s58 = sadd.s32 %s57, 1
    %p61 = scmp.eq.s32.totalorder %s9, 1
    %p62 = scmp.ne.s32.totalorder %s57, %s59
    %p63 = scmp.eq.s32.totalorder %s9, 0
    %p64 = por %p62, %p63
    %p65 = scmp.ne.s32.totalorder %s57, %s59
    %p66 = scmp.eq.s32.totalorder %s14, 1
    %p67 = por %p65, %p66
    %p68 = scmp.ne.s32.totalorder %s59, %s60
    %p69 = scmp.eq.s32.totalorder %s14, 0
    %p70 = por %p68, %p69
    %p71 = scmp.ne.s32.totalorder %s59, %s60
    %p72 = scmp.eq.s32.totalorder %s15, 1
    %p73 = por %p71, %p72
    %p75 = scmp.ne.s32.totalorder %s60, %s74
    %p76 = scmp.eq.s32.totalorder %s15, 0
    %p77 = por %p75, %p76
    %s79 = sadd.s32 %s78, 1
    %p82 = scmp.eq.s32.totalorder %s9, 1
    %p83 = scmp.ne.s32.totalorder %s78, %s80
    %p84 = scmp.eq.s32.totalorder %s9, 0
    %p85 = por %p83, %p84
    %p86 = scmp.ne.s32.totalorder %s78, %s80
    %p87 = scmp.eq.s32.totalorder %s14, 1
    %p88 = por %p86, %p87
    %p89 = scmp.ne.s32.totalorder %s80, %s81
    %p90 = scmp.eq.s32.totalorder %s14, 0
    %p91 = por %p89, %p90
    %p92 = scmp.ne.s32.totalorder %s80, %s81
    %p93 = scmp.eq.s32.totalorder %s15, 1
    %p94 = por %p92, %p93
    %p96 = scmp.ne.s32.totalorder %s81, %s95
    %p97 = scmp.eq.s32.totalorder %s15, 0
    %p98 = por %p96, %p97
    %s99 = ssub.s32 %s16, %s28
    %s100 = ssub.s32 %s17, %s24
    %s101 = sor.u32 %s99, %s100
    %p102 = scmp.eq.s32.totalorder %s101, 0
    %s104 = sadd.s32 %s103, 1
    %s105 = scalar_select %p102, %s103, %s104
    %p108 = pneg %p102
    %p109 = scmp.eq.s32.totalorder %s9, 1
    %p110 = por %p108, %p109
    %p111 = scmp.ne.s32.totalorder %s103, %s106
    %p112 = scmp.eq.s32.totalorder %s9, 0
    %p113 = por %p111, %p112
    %p114 = scmp.ne.s32.totalorder %s103, %s106
    %p115 = scmp.eq.s32.totalorder %s14, 1
    %p116 = por %p114, %p115
    %p117 = scmp.ne.s32.totalorder %s106, %s107
    %p118 = scmp.eq.s32.totalorder %s14, 0
    %p119 = por %p117, %p118
    %p120 = scmp.ne.s32.totalorder %s106, %s107
    %p121 = scmp.eq.s32.totalorder %s15, 1
    %p122 = por %p120, %p121
    %p124 = scmp.ne.s32.totalorder %s107, %s123
    %p125 = scmp.eq.s32.totalorder %s15, 0
    %p126 = por %p124, %p125
    %p127 = scmp.le.s32.totalorder 1, %s9
    %p128 = scmp.lt.s32.totalorder %s9, 3
    %p129 = pnand %p127, %p128
    %p130 = pneg %p129
    // Predicated region
    $region9: #{_lambda_.10} parent=5 // pred_check
      _
    $region10: #{_lambda_.10} parent=5 // pred_check_branch
      %132 = sbr.rel (%p129) target = $region12
    $region11: #{_lambda_.10} parent=5 // pred_region
      %s133 = ssub.s32 %s9, 1
      // Predicated region
      $region13: #{_lambda_.10} parent=11 // pred_check
        %p134 = pneg %p70
      $region14: #{_lambda_.10} parent=11 // pred_check_branch
        %136 = sbr.rel (%p134) target = $region16
      $region15: #{_lambda_.10} parent=11 // pred_region
        _
      $region16: #{_lambda_.10} parent=11 // pred_fallthru
        _
      // Predicated region
      $region17: #{_lambda_.10} parent=11 // pred_check
        %p137 = pneg %p91
      $region18: #{_lambda_.10} parent=11 // pred_check_branch
        %139 = sbr.rel (%p137) target = $region20
      $region19: #{_lambda_.10} parent=11 // pred_region
        _
      $region20: #{_lambda_.10} parent=11 // pred_fallthru
        _
    $region12: #{_lambda_.10} parent=5 // pred_fallthru
      _
    %p140 = scmp.lt.s32.totalorder %s9, 2
    // Predicated region
    $region21: #{_lambda_.10} parent=5 // pred_check
      %p141 = pneg %p140
    $region22: #{_lambda_.10} parent=5 // pred_check_branch
      %143 = sbr.rel (%p141) target = $region24
    $region23: #{_lambda_.10} parent=5 // pred_region
      // Predicated region
      $region25: #{_lambda_.10} parent=23 // pred_check
        %p144 = pneg %p43
      $region26: #{_lambda_.10} parent=23 // pred_check_branch
        %146 = sbr.rel (%p144) target = $region28
      $region27: #{_lambda_.10} parent=23 // pred_region
        %p147 = scmp.lt.s32.totalorder %s16, 1
        %s148 = scalar_select %p147, %s16, 1
        %p149 = scmp.lt.s32.totalorder %s17, 0
        %s150 = scalar_select %p149, %s17, 0
        %s151 = smul.addr %s148, 2
        %s152 = sadd.s32 %s150, %s151
        %s153 = smul.addr %s152, 8
        %s154 = scalar_lea.vmem %s0, %s153
      $region28: #{_lambda_.10} parent=23 // pred_fallthru
        _
    $region24: #{_lambda_.10} parent=5 // pred_fallthru
      _
    %p155 = scmp.le.s32.totalorder 1, %s9
    %p156 = scmp.lt.s32.totalorder %s9, 3
    %p157 = pnand %p155, %p156
    %p158 = pneg %p157
    // Predicated region
    $region29: #{_lambda_.10} parent=5 // pred_check
      _
    $region30: #{_lambda_.10} parent=5 // pred_check_branch
      %160 = sbr.rel (%p157) target = $region32
    $region31: #{_lambda_.10} parent=5 // pred_region
      %s161 = ssub.s32 %s9, 1
      %p162 = scmp.lt.s32.totalorder %s18, 1
      %s163 = scalar_select %p162, %s18, 1
      %p164 = scmp.lt.s32.totalorder %s19, 0
      %s165 = scalar_select %p164, %s19, 0
      %s166 = smul.addr %s163, 2
      %s167 = sadd.s32 %s165, %s166
      %s168 = smul.addr %s167, 8
      %s169 = scalar_lea.vmem %s0, %s168
      %p170 = pneg %p49
      %p171 = pneg %p46
      %p172 = pneg %p70
      %p173 = pneg %p67
      %p174 = pneg %p91
      %p175 = pneg %p88
      %p176 = pneg %p119
      %p177 = pneg %p116
      %p178 = scmp.lt.s32.totalorder %s18, 1
      %s179 = scalar_select %p178, %s18, 1
      %p180 = scmp.lt.s32.totalorder %s19, 0
      %s181 = scalar_select %p180, %s19, 0
      %s182 = smul.addr %s179, 2
      %s183 = sadd.s32 %s181, %s182
      %s184 = smul.addr %s183, 8
      %s185 = scalar_lea.vmem %s3, %s184
      %p186 = scmp.lt.s32.totalorder %s18, 1
      %s187 = scalar_select %p186, %s18, 1
      %p188 = scmp.lt.s32.totalorder %s19, 0
      %s189 = scalar_select %p188, %s19, 0
      %s190 = smul.addr %s187, 2
      %s191 = sadd.s32 %s189, %s190
      %s192 = smul.addr %s191, 8
      %s193 = scalar_lea.vmem %s0, %s192
      %p194 = scmp.lt.s32.totalorder %s18, 1
      %s195 = scalar_select %p194, %s18, 1
      %p196 = scmp.lt.s32.totalorder %s19, 0
      %s197 = scalar_select %p196, %s19, 0
      %s198 = smul.addr %s195, 2
      %s199 = sadd.s32 %s197, %s198
      %s200 = smul.addr %s199, 8
      %s201 = scalar_lea.vmem %s3, %s200
      %v203 = vld [vmem:[%s193] sm:$0xff]
      %v204 = vld [vmem:[%s193 + $0x8] sm:$0xff]
      %v205 = vpack.c.bf16 %v204, %v203
      %v206 = vld [vmem:[%s1] sm:$0xf]
      %v207 = vld [vmem:[%s1 + $0x4] sm:$0xf]
      %v208 = vld [vmem:[%s2] sm:$0xff]
      %v209 = vld [vmem:[%s2 + $0x8] sm:$0xff]
      %211 = vset.pattern.permute.xlu0 0
      %212 = vperm.xlu0 %211, %v208
      %v213 = vpop.permute.xlu0 %212
      %216 = vset.pattern.permute.xlu0 0
      %217 = vperm.xlu0 %216, %v209
      %v218 = vpop.permute.xlu0 %217
      %v222 = vunpack.c.l.b16 %v206
      %v223 = vunpack.c.l.b16 %v207
      %v224 = vpack.c.b16 %v223, %v222
      %vm225 = vcmask 130048
      %v227 = vsel %vm225, %v224, 0
      %229 = vmatprep.subr.bf16.mxu0 0
      %230 = vmatpush1.bf16.msra.mxu0 %v205
      %231 = vmatprep.subr.bf16.mxu0 0
      %232 = vmatpush1.bf16.msra.mxu0 0
      %233 = vmatprep.subr.bf16.mxu0 0
      %234 = vmatpush1.bf16.msra.mxu0 0
      %235 = vmatprep.subr.bf16.mxu0 0
      %236 = vmatpush1.bf16.msra.mxu0 0
      %237 = vmatprep.subr.bf16.mxu0 0
      %238 = vmatpush1.bf16.msra.mxu0 0
      %239 = vmatprep.subr.bf16.mxu0 0
      %240 = vmatpush1.bf16.msra.mxu0 0
      %241 = vmatprep.subr.bf16.mxu0 0
      %242 = vmatpush1.bf16.msra.mxu0 0
      %243 = vmatprep.subr.bf16.mxu0 0
      %244 = vmatpush1.bf16.msra.mxu0 0
      %245 = vmatprep.subr.bf16.mxu0 0
      %246 = vmatpush1.bf16.msra.mxu0 0
      %247 = vmatprep.subr.bf16.mxu0 0
      %248 = vmatpush1.bf16.msra.mxu0 0
      %249 = vmatprep.subr.bf16.mxu0 0
      %250 = vmatpush1.bf16.msra.mxu0 0
      %251 = vmatprep.subr.bf16.mxu0 0
      %252 = vmatpush1.bf16.msra.mxu0 0
      %253 = vmatprep.subr.bf16.mxu0 0
      %254 = vmatpush1.bf16.msra.mxu0 0
      %255 = vmatprep.subr.bf16.mxu0 0
      %256 = vmatpush1.bf16.msra.mxu0 0
      %257 = vmatprep.subr.bf16.mxu0 0
      %258 = vmatpush1.bf16.msra.mxu0 0
      %259 = vmatprep.subr.bf16.mxu0 0
      %260 = vmatpush1.bf16.msra.mxu0 0
      %261 = vmatprep.mubr.bf16.mxu0 0
      %262 = vmatmul.mubr.bf16.gmra.mrb[0].mxu0 %v227
      %v263 = vpop.f32.mrb[0].mxu0
      %v264 = vadd.f32 %v213, %v263
      %v265 = vpop.f32.mrb[0].mxu0
      %v266 = vpop.f32.mrb[0].mxu0
      %v267 = vadd.f32 %v218, %v266
      %v268 = vpop.f32.mrb[0].mxu0
      %269 = vdwg.mxu0
      %v270 = vmul.f32 %v264, 0.5
      %v271 = vmul.f32 %v267, 0.5
      %v272 = vmul.f32 %v264, 0.044715
      %v273 = vmul.f32 %v267, 0.044715
      %v274 = vmul.f32 %v272, %v264
      %v275 = vmul.f32 %v273, %v267
      %v276 = vmul.f32 %v274, %v264
      %v277 = vmul.f32 %v275, %v267
      %v278 = vadd.f32 %v264, %v276
      %v279 = vadd.f32 %v267, %v277
      %v280 = vmul.f32 %v278, 0.7978846
      %v281 = vmul.f32 %v279, 0.7978846
      %v282 = vtanh.pop %v280
      %v283 = vtanh.pop %v281
      %v284 = vadd.f32 %v282, 1.0
      %v285 = vadd.f32 %v283, 1.0
      %v286 = vmul.f32 %v270, %v284
      %v287 = vmul.f32 %v271, %v285
      %288 = vst [vmem:[%s201] sm:$0xff] %v286
      %289 = vst [vmem:[%s201 + $0x8] sm:$0xff] %v287
      %p290 = scmp.lt.s32.totalorder %s18, 1
      %s291 = scalar_select %p290, %s18, 1
      %p292 = scmp.lt.s32.totalorder %s19, 0
      %s293 = scalar_select %p292, %s19, 0
      %s294 = smul.addr %s291, 2
      %s295 = sadd.s32 %s293, %s294
      %s296 = smul.addr %s295, 8
      %s297 = scalar_lea.vmem %s3, %s296
      // Predicated region
      $region33: #{_lambda_.10} parent=31 // pred_check
        %p298 = pneg %p116
      $region34: #{_lambda_.10} parent=31 // pred_check_branch
        %300 = sbr.rel (%p298) target = $region36
      $region35: #{_lambda_.10} parent=31 // pred_region
        _
      $region36: #{_lambda_.10} parent=31 // pred_fallthru
        _
    $region32: #{_lambda_.10} parent=5 // pred_fallthru
      _
    %p301 = scmp.le.s32.totalorder 2, %s9
    // Predicated region
    $region37: #{_lambda_.10} parent=5 // pred_check
      %p302 = pneg %p301
    $region38: #{_lambda_.10} parent=5 // pred_check_branch
      %304 = sbr.rel (%p302) target = $region40
    $region39: #{_lambda_.10} parent=5 // pred_region
      %s305 = ssub.s32 %s9, 2
      // Predicated region
      $region41: #{_lambda_.10} parent=39 // pred_check
        %p306 = pneg %p122
      $region42: #{_lambda_.10} parent=39 // pred_check_branch
        %308 = sbr.rel (%p306) target = $region44
      $region43: #{_lambda_.10} parent=39 // pred_region
        %p309 = scmp.lt.s32.totalorder %s20, 1
        %s310 = scalar_select %p309, %s20, 1
        %p311 = scmp.lt.s32.totalorder %s21, 0
        %s312 = scalar_select %p311, %s21, 0
        %s313 = smul.addr %s310, 2
        %s314 = sadd.s32 %s312, %s313
        %s315 = smul.addr %s314, 8
        %s316 = scalar_lea.vmem %s3, %s315
      $region44: #{_lambda_.10} parent=39 // pred_fallthru
        _
    $region40: #{_lambda_.10} parent=5 // pred_fallthru
      _
  $region6: #{_lambda_.10} parent=0 // loop_footer
    %s13 = sadd.s32 1, %s9
  $region7: #{_lambda_.10} parent=0 // loop_footer_branch
    %8 = sbr.rel target = $region3
  $region8: #{_lambda_.10} parent=0 // loop_exit
    _

// kernel: _lambda_.11
$region0: #{_lambda_.11}
  #allocation0 [shape = 'u32[]', space=smem, size = 0x4, offset = 0x4, fixed_abs, tag = 'smem constant byte address 0x4 - core index']
  #allocation1 [shape = 'u32[144,128]{1,0:T(1,128)}', space=vmem, size = 0x12000, scoped, tag = 'internal scratch']
  %s0 = inlined_call_operand.vmem [shape: f32[2,16,128], index: 0, kind: input, shape index: {}]
  %s1 = inlined_call_operand.vmem [shape: f32[2,16,128], index: 1, kind: input, shape index: {}]
  %s2 = inlined_call_operand.vmem [shape: f32[16,9], index: 2, kind: input, shape index: {}]
  %s3 = inlined_call_operand.vmem [shape: f32[16,1], index: 3, kind: input, shape index: {}]
  %s4 = inlined_call_operand.vmem [shape: s32[2,128], index: 4, kind: input, shape index: {}]
  %s5 = inlined_call_operand.vmem [shape: f32[2,16,128], index: 5, kind: output, shape index: {}]
  %s6 = sld [smem:[#allocation0]]
  $region53: #{_lambda_.11} parent=0
    _
  %s8 = ssub.s32 1, %s6
  %s9 = scalar_select 0, %s8, %s6
  loop: start=0, step=1, limit=4
  $region2: #{_lambda_.11} parent=0 // loop_pre_header
    _
  $region3: #{_lambda_.11} parent=0 // loop_header
    %s11 = sphi 0, %s15
    %p12 = scmp.ge.s32.totalorder %s11, 4
    %s18 = sphi 0, %s30
    %s19 = sphi 0, %s26
    %s20 = sphi 0, %s18
    %s21 = sphi 0, %s19
    %s22 = sphi 0, %s20
    %s23 = sphi 0, %s21
    %s35 = sphi 0, %s37
    %s38 = sphi 0, %s35
    %s39 = sphi 0, %s38
    %s55 = sphi 0, %s39
    %s63 = sphi 0, %s65
    %s66 = sphi 0, %s63
    %s67 = sphi 0, %s66
    %s83 = sphi 0, %s67
    %s89 = sphi 0, %s91
    %s92 = sphi 0, %s89
    %s93 = sphi 0, %s92
    %s109 = sphi 0, %s93
    %s115 = sphi 0, %s117
    %s118 = sphi 0, %s115
    %s119 = sphi 0, %s118
    %s135 = sphi 0, %s119
    %s139 = sphi 0, %s139
    %s141 = sphi 0, %s139
    %s142 = sphi 0, %s141
    %s156 = sphi 0, %s142
    %s164 = sphi 0, %s166
    %s167 = sphi 0, %s164
    %s168 = sphi 0, %s167
    %s184 = sphi 0, %s168
  $region4: #{_lambda_.11} parent=0 // loop_header_branch
    %14 = sbr.rel (%p12) target = $region8
  $region5: #{_lambda_.11} parent=0 // loop_body
    %s16 = ssub.s32 %s11, 1
    %s17 = ssub.s32 %s11, 2
    %s24 = sadd.s32 1, %s19
    %p25 = scmp.ge.s32.totalorder %s24, 1
    %s26 = scalar_select %p25, 0, %s24
    %s27 = sadd.s32 1, %s18
    %s28 = scalar_select %p25, %s27, %s18
    %p29 = scmp.ge.s32.totalorder %s28, 2
    %s30 = scalar_select %p29, 0, %s28
    %s31 = ssub.s32 %s18, %s30
    %s32 = ssub.s32 %s19, %s26
    %s33 = sor.u32 %s31, %s32
    %p34 = scmp.eq.s32.totalorder %s33, 0
    %s36 = sadd.s32 %s35, 1
    %s37 = scalar_select %p34, %s35, %s36
    %p40 = pneg %p34
    %p41 = scmp.eq.s32.totalorder %s11, 1
    %p42 = por %p40, %p41
    %p43 = scmp.ne.s32.totalorder %s35, %s38
    %p44 = scmp.eq.s32.totalorder %s11, 0
    %p45 = por %p43, %p44
    %p46 = scmp.ne.s32.totalorder %s35, %s38
    %p47 = scmp.eq.s32.totalorder %s16, 1
    %p48 = por %p46, %p47
    %p49 = scmp.ne.s32.totalorder %s38, %s39
    %p50 = scmp.eq.s32.totalorder %s16, 0
    %p51 = por %p49, %p50
    %p52 = scmp.ne.s32.totalorder %s38, %s39
    %p53 = scmp.eq.s32.totalorder %s17, 1
    %p54 = por %p52, %p53
    %p56 = scmp.ne.s32.totalorder %s39, %s55
    %p57 = scmp.eq.s32.totalorder %s17, 0
    %p58 = por %p56, %p57
    %s59 = ssub.s32 %s18, %s30
    %s60 = ssub.s32 %s19, %s26
    %s61 = sor.u32 %s59, %s60
    %p62 = scmp.eq.s32.totalorder %s61, 0
    %s64 = sadd.s32 %s63, 1
    %s65 = scalar_select %p62, %s63, %s64
    %p68 = pneg %p62
    %p69 = scmp.eq.s32.totalorder %s11, 1
    %p70 = por %p68, %p69
    %p71 = scmp.ne.s32.totalorder %s63, %s66
    %p72 = scmp.eq.s32.totalorder %s11, 0
    %p73 = por %p71, %p72
    %p74 = scmp.ne.s32.totalorder %s63, %s66
    %p75 = scmp.eq.s32.totalorder %s16, 1
    %p76 = por %p74, %p75
    %p77 = scmp.ne.s32.totalorder %s66, %s67
    %p78 = scmp.eq.s32.totalorder %s16, 0
    %p79 = por %p77, %p78
    %p80 = scmp.ne.s32.totalorder %s66, %s67
    %p81 = scmp.eq.s32.totalorder %s17, 1
    %p82 = por %p80, %p81
    %p84 = scmp.ne.s32.totalorder %s67, %s83
    %p85 = scmp.eq.s32.totalorder %s17, 0
    %p86 = por %p84, %p85
    %s87 = ssub.s32 %s19, %s26
    %p88 = scmp.eq.s32.totalorder %s87, 0
    %s90 = sadd.s32 %s89, 1
    %s91 = scalar_select %p88, %s89, %s90
    %p94 = pneg %p88
    %p95 = scmp.eq.s32.totalorder %s11, 1
    %p96 = por %p94, %p95
    %p97 = scmp.ne.s32.totalorder %s89, %s92
    %p98 = scmp.eq.s32.totalorder %s11, 0
    %p99 = por %p97, %p98
    %p100 = scmp.ne.s32.totalorder %s89, %s92
    %p101 = scmp.eq.s32.totalorder %s16, 1
    %p102 = por %p100, %p101
    %p103 = scmp.ne.s32.totalorder %s92, %s93
    %p104 = scmp.eq.s32.totalorder %s16, 0
    %p105 = por %p103, %p104
    %p106 = scmp.ne.s32.totalorder %s92, %s93
    %p107 = scmp.eq.s32.totalorder %s17, 1
    %p108 = por %p106, %p107
    %p110 = scmp.ne.s32.totalorder %s93, %s109
    %p111 = scmp.eq.s32.totalorder %s17, 0
    %p112 = por %p110, %p111
    %s113 = ssub.s32 %s19, %s26
    %p114 = scmp.eq.s32.totalorder %s113, 0
    %s116 = sadd.s32 %s115, 1
    %s117 = scalar_select %p114, %s115, %s116
    %p120 = pneg %p114
    %p121 = scmp.eq.s32.totalorder %s11, 1
    %p122 = por %p120, %p121
    %p123 = scmp.ne.s32.totalorder %s115, %s118
    %p124 = scmp.eq.s32.totalorder %s11, 0
    %p125 = por %p123, %p124
    %p126 = scmp.ne.s32.totalorder %s115, %s118
    %p127 = scmp.eq.s32.totalorder %s16, 1
    %p128 = por %p126, %p127
    %p129 = scmp.ne.s32.totalorder %s118, %s119
    %p130 = scmp.eq.s32.totalorder %s16, 0
    %p131 = por %p129, %p130
    %p132 = scmp.ne.s32.totalorder %s118, %s119
    %p133 = scmp.eq.s32.totalorder %s17, 1
    %p134 = por %p132, %p133
    %p136 = scmp.ne.s32.totalorder %s119, %s135
    %p137 = scmp.eq.s32.totalorder %s17, 0
    %p138 = por %p136, %p137
    %s140 = sadd.s32 %s139, 1
    %p143 = scmp.eq.s32.totalorder %s11, 1
    %p144 = scmp.ne.s32.totalorder %s139, %s141
    %p145 = scmp.eq.s32.totalorder %s11, 0
    %p146 = por %p144, %p145
    %p147 = scmp.ne.s32.totalorder %s139, %s141
    %p148 = scmp.eq.s32.totalorder %s16, 1
    %p149 = por %p147, %p148
    %p150 = scmp.ne.s32.totalorder %s141, %s142
    %p151 = scmp.eq.s32.totalorder %s16, 0
    %p152 = por %p150, %p151
    %p153 = scmp.ne.s32.totalorder %s141, %s142
    %p154 = scmp.eq.s32.totalorder %s17, 1
    %p155 = por %p153, %p154
    %p157 = scmp.ne.s32.totalorder %s142, %s156
    %p158 = scmp.eq.s32.totalorder %s17, 0
    %p159 = por %p157, %p158
    %s160 = ssub.s32 %s18, %s30
    %s161 = ssub.s32 %s19, %s26
    %s162 = sor.u32 %s160, %s161
    %p163 = scmp.eq.s32.totalorder %s162, 0
    %s165 = sadd.s32 %s164, 1
    %s166 = scalar_select %p163, %s164, %s165
    %p169 = pneg %p163
    %p170 = scmp.eq.s32.totalorder %s11, 1
    %p171 = por %p169, %p170
    %p172 = scmp.ne.s32.totalorder %s164, %s167
    %p173 = scmp.eq.s32.totalorder %s11, 0
    %p174 = por %p172, %p173
    %p175 = scmp.ne.s32.totalorder %s164, %s167
    %p176 = scmp.eq.s32.totalorder %s16, 1
    %p177 = por %p175, %p176
    %p178 = scmp.ne.s32.totalorder %s167, %s168
    %p179 = scmp.eq.s32.totalorder %s16, 0
    %p180 = por %p178, %p179
    %p181 = scmp.ne.s32.totalorder %s167, %s168
    %p182 = scmp.eq.s32.totalorder %s17, 1
    %p183 = por %p181, %p182
    %p185 = scmp.ne.s32.totalorder %s168, %s184
    %p186 = scmp.eq.s32.totalorder %s17, 0
    %p187 = por %p185, %p186
    %p188 = scmp.le.s32.totalorder 1, %s11
    %p189 = scmp.lt.s32.totalorder %s11, 3
    %p190 = pnand %p188, %p189
    %p191 = pneg %p190
    // Predicated region
    $region9: #{_lambda_.11} parent=5 // pred_check
      _
    $region10: #{_lambda_.11} parent=5 // pred_check_branch
      %193 = sbr.rel (%p190) target = $region12
    $region11: #{_lambda_.11} parent=5 // pred_region
      %s194 = ssub.s32 %s11, 1
      // Predicated region
      $region13: #{_lambda_.11} parent=11 // pred_check
        %p195 = pneg %p105
      $region14: #{_lambda_.11} parent=11 // pred_check_branch
        %197 = sbr.rel (%p195) target = $region16
      $region15: #{_lambda_.11} parent=11 // pred_region
        %s198 = smul.u32 2, %s21
        %p199 = scmp.lt.s32.totalorder %s198, 1
        %s200 = scalar_select %p199, %s198, 1
        %s201 = smul.addr %s200, 8
        %s202 = scalar_lea.vmem %s2, %s201
        %s203 = smul.u32 2, %s21
      $region16: #{_lambda_.11} parent=11 // pred_fallthru
        _
      // Predicated region
      $region17: #{_lambda_.11} parent=11 // pred_check
        %p204 = pneg %p131
      $region18: #{_lambda_.11} parent=11 // pred_check_branch
        %206 = sbr.rel (%p204) target = $region20
      $region19: #{_lambda_.11} parent=11 // pred_region
        %s207 = smul.u32 2, %s21
        %p208 = scmp.lt.s32.totalorder %s207, 1
        %s209 = scalar_select %p208, %s207, 1
        %s210 = smul.addr %s209, 8
        %s211 = scalar_lea.vmem %s3, %s210
        %s212 = smul.u32 2, %s21
      $region20: #{_lambda_.11} parent=11 // pred_fallthru
        _
      // Predicated region
      $region21: #{_lambda_.11} parent=11 // pred_check
        %p213 = pneg %p152
      $region22: #{_lambda_.11} parent=11 // pred_check_branch
        %215 = sbr.rel (%p213) target = $region24
      $region23: #{_lambda_.11} parent=11 // pred_region
        _
      $region24: #{_lambda_.11} parent=11 // pred_fallthru
        _
    $region12: #{_lambda_.11} parent=5 // pred_fallthru
      _
    %p216 = scmp.lt.s32.totalorder %s11, 2
    // Predicated region
    $region25: #{_lambda_.11} parent=5 // pred_check
      %p217 = pneg %p216
    $region26: #{_lambda_.11} parent=5 // pred_check_branch
      %219 = sbr.rel (%p217) target = $region28
    $region27: #{_lambda_.11} parent=5 // pred_region
      // Predicated region
      $region29: #{_lambda_.11} parent=27 // pred_check
        %p220 = pneg %p45
      $region30: #{_lambda_.11} parent=27 // pred_check_branch
        %222 = sbr.rel (%p220) target = $region32
      $region31: #{_lambda_.11} parent=27 // pred_region
        %s223 = smul.u32 2, %s19
        %p224 = scmp.lt.s32.totalorder %s18, 1
        %s225 = scalar_select %p224, %s18, 1
        %p226 = scmp.lt.s32.totalorder %s223, 1
        %s227 = scalar_select %p226, %s223, 1
        %s228 = smul.addr %s225, 2
        %s229 = sadd.s32 %s227, %s228
        %s230 = smul.addr %s229, 8
        %s231 = scalar_lea.vmem %s0, %s230
        %s232 = smul.u32 2, %s19
      $region32: #{_lambda_.11} parent=27 // pred_fallthru
        _
      // Predicated region
      $region33: #{_lambda_.11} parent=27 // pred_check
        %p233 = pneg %p73
      $region34: #{_lambda_.11} parent=27 // pred_check_branch
        %235 = sbr.rel (%p233) target = $region36
      $region35: #{_lambda_.11} parent=27 // pred_region
        %s236 = smul.u32 2, %s19
        %p237 = scmp.lt.s32.totalorder %s18, 1
        %s238 = scalar_select %p237, %s18, 1
        %p239 = scmp.lt.s32.totalorder %s236, 1
        %s240 = scalar_select %p239, %s236, 1
        %s241 = smul.addr %s238, 2
        %s242 = sadd.s32 %s240, %s241
        %s243 = smul.addr %s242, 8
        %s244 = scalar_lea.vmem %s1, %s243
        %s245 = smul.u32 2, %s19
      $region36: #{_lambda_.11} parent=27 // pred_fallthru
        _
    $region28: #{_lambda_.11} parent=5 // pred_fallthru
      _
    %p246 = scmp.le.s32.totalorder 1, %s11
    %p247 = scmp.lt.s32.totalorder %s11, 3
    %p248 = pnand %p246, %p247
    %p249 = pneg %p248
    // Predicated region
    $region37: #{_lambda_.11} parent=5 // pred_check
      _
    $region38: #{_lambda_.11} parent=5 // pred_check_branch
      %251 = sbr.rel (%p248) target = $region40
    $region39: #{_lambda_.11} parent=5 // pred_region
      %s252 = ssub.s32 %s11, 1
      %s253 = smul.u32 2, %s21
      %p254 = scmp.lt.s32.totalorder %s20, 1
      %s255 = scalar_select %p254, %s20, 1
      %p256 = scmp.lt.s32.totalorder %s253, 1
      %s257 = scalar_select %p256, %s253, 1
      %s258 = smul.addr %s255, 2
      %s259 = sadd.s32 %s257, %s258
      %s260 = smul.addr %s259, 8
      %s261 = scalar_lea.vmem %s0, %s260
      %p262 = pneg %p51
      %p263 = pneg %p48
      %s264 = smul.u32 2, %s21
      %p265 = scmp.lt.s32.totalorder %s20, 1
      %s266 = scalar_select %p265, %s20, 1
      %p267 = scmp.lt.s32.totalorder %s264, 1
      %s268 = scalar_select %p267, %s264, 1
      %s269 = smul.addr %s266, 2
      %s270 = sadd.s32 %s268, %s269
      %s271 = smul.addr %s270, 8
      %s272 = scalar_lea.vmem %s1, %s271
      %p273 = pneg %p79
      %p274 = pneg %p76
      %s275 = smul.u32 2, %s21
      %p276 = scmp.lt.s32.totalorder %s275, 1
      %s277 = scalar_select %p276, %s275, 1
      %s278 = smul.addr %s277, 8
      %s279 = scalar_lea.vmem %s2, %s278
      %p280 = pneg %p105
      %p281 = pneg %p102
      %s282 = smul.u32 2, %s21
      %p283 = scmp.lt.s32.totalorder %s282, 1
      %s284 = scalar_select %p283, %s282, 1
      %s285 = smul.addr %s284, 8
      %s286 = scalar_lea.vmem %s3, %s285
      %p287 = pneg %p131
      %p288 = pneg %p128
      %p289 = pneg %p152
      %p290 = pneg %p149
      %p291 = pneg %p180
      %p292 = pneg %p177
      %s293 = smul.u32 2, %s21
      %p294 = scmp.lt.s32.totalorder %s20, 1
      %s295 = scalar_select %p294, %s20, 1
      %p296 = scmp.lt.s32.totalorder %s293, 1
      %s297 = scalar_select %p296, %s293, 1
      %s298 = smul.addr %s295, 2
      %s299 = sadd.s32 %s297, %s298
      %s300 = smul.addr %s299, 8
      %s301 = scalar_lea.vmem %s5, %s300
      %s302 = smul.u32 2, %s21
      %p303 = scmp.lt.s32.totalorder %s20, 1
      %s304 = scalar_select %p303, %s20, 1
      %p305 = scmp.lt.s32.totalorder %s302, 1
      %s306 = scalar_select %p305, %s302, 1
      %s307 = smul.addr %s304, 2
      %s308 = sadd.s32 %s306, %s307
      %s309 = smul.addr %s308, 8
      %s310 = scalar_lea.vmem %s0, %s309
      %s311 = smul.u32 2, %s21
      %s312 = smul.u32 2, %s21
      %p313 = scmp.lt.s32.totalorder %s20, 1
      %s314 = scalar_select %p313, %s20, 1
      %p315 = scmp.lt.s32.totalorder %s312, 1
      %s316 = scalar_select %p315, %s312, 1
      %s317 = smul.addr %s314, 2
      %s318 = sadd.s32 %s316, %s317
      %s319 = smul.addr %s318, 8
      %s320 = scalar_lea.vmem %s1, %s319
      %s321 = smul.u32 2, %s21
      %s322 = smul.u32 2, %s21
      %p323 = scmp.lt.s32.totalorder %s322, 1
      %s324 = scalar_select %p323, %s322, 1
      %s325 = smul.addr %s324, 8
      %s326 = scalar_lea.vmem %s2, %s325
      %s327 = smul.u32 2, %s21
      %s328 = smul.u32 2, %s21
      %p329 = scmp.lt.s32.totalorder %s328, 1
      %s330 = scalar_select %p329, %s328, 1
      %s331 = smul.addr %s330, 8
      %s332 = scalar_lea.vmem %s3, %s331
      %s333 = smul.u32 2, %s21
      %s334 = smul.u32 2, %s21
      %p335 = scmp.lt.s32.totalorder %s20, 1
      %s336 = scalar_select %p335, %s20, 1
      %p337 = scmp.lt.s32.totalorder %s334, 1
      %s338 = scalar_select %p337, %s334, 1
      %s339 = smul.addr %s336, 2
      %s340 = sadd.s32 %s338, %s339
      %s341 = smul.addr %s340, 8
      %s342 = scalar_lea.vmem %s5, %s341
      %s343 = smul.u32 2, %s21
      %v344 = vld [vmem:[%s310] sm:$0xff]
      %v345 = vld [vmem:[%s310 + $0x8] sm:$0xff]
      %v346 = vld [vmem:[%s4] sm:$0x1]
      %v347 = vld [vmem:[%s4 + $0x1] sm:$0x1]
      %v348 = vld [vmem:[%s326] sm:$0xff]
      %v349 = vld [vmem:[%s326 + $0x8] sm:$0xff]
      %351 = vset.pattern.permute.xlu0 4
      %352 = vperm.xlu0 %351, %v348
      %v353 = vpop.permute.xlu0 %352
      %356 = vset.pattern.permute.xlu0 4
      %357 = vperm.xlu0 %356, %v349
      %v358 = vpop.permute.xlu0 %357
      %v360 = vmul.f32 %v344, %v353
      %v361 = vmul.f32 %v345, %v358
      %362 = vrot.lane.b32.xlu0 %v344, 9
      %v363 = vpop.permute.xlu0 %362
      %364 = vrot.lane.b32.xlu0 %v345, 9
      %v365 = vpop.permute.xlu0 %364
      %vm366 = vcmp.gt.s32.totalorder %v347, 0
      %vm367 = vcmp.gt.s32.totalorder %v346, 0
      %vm368 = vmand %vm366, %vm367
      %v369 = vsel %vm368, 1, 0
      %v370 = vlaneseq
      %v371 = vshrl.u32 %v370, 7
      %v372 = vsub.s32 0, %v371
      %v373 = vrot.slane %v369, %v372
      %vm374 = vcmp.eq.s32.totalorder %v373, 1
      %v375 = vsel %vm374, %v363, 0.0
      %v376 = vsel %vm374, %v365, 0.0
      %377 = vset.pattern.permute.xlu0 0
      %378 = vperm.xlu0 %377, %v348
      %v379 = vpop.permute.xlu0 %378
      %381 = vset.pattern.permute.xlu0 0
      %382 = vperm.xlu0 %381, %v349
      %v383 = vpop.permute.xlu0 %382
      %v385 = vmul.f32 %v375, %v379
      %v386 = vmul.f32 %v376, %v383
      %v387 = vadd.f32 %v360, %v385
      %v388 = vadd.f32 %v361, %v386
      %389 = vrot.lane.b32.xlu0 %v344, 8
      %v390 = vpop.permute.xlu0 %389
      %391 = vrot.lane.b32.xlu0 %v345, 8
      %v392 = vpop.permute.xlu0 %391
      %v393 = vsel %vm367, 1, 0
      %v394 = vlaneseq
      %v395 = vshrl.u32 %v394, 7
      %v396 = vsub.s32 0, %v395
      %v397 = vrot.slane %v393, %v396
      %vm398 = vcmp.eq.s32.totalorder %v397, 1
      %v399 = vsel %vm398, %v390, 0.0
      %v400 = vsel %vm398, %v392, 0.0
      %401 = vset.pattern.permute.xlu0 1
      %402 = vperm.xlu0 %401, %v348
      %v403 = vpop.permute.xlu0 %402
      %405 = vset.pattern.permute.xlu0 1
      %406 = vperm.xlu0 %405, %v349
      %v407 = vpop.permute.xlu0 %406
      %v409 = vmul.f32 %v399, %v403
      %v410 = vmul.f32 %v400, %v407
      %v411 = vadd.f32 %v387, %v409
      %v412 = vadd.f32 %v388, %v410
      %413 = vrot.lane.b32.xlu0 %v344, 7
      %v414 = vpop.permute.xlu0 %413
      %415 = vrot.lane.b32.xlu0 %v345, 7
      %v416 = vpop.permute.xlu0 %415
      %vm417 = vcmp.lt.s32.totalorder %v347, 7
      %vm418 = vmand %vm417, %vm367
      %v419 = vsel %vm418, 1, 0
      %v420 = vlaneseq
      %v421 = vshrl.u32 %v420, 7
      %v422 = vsub.s32 0, %v421
      %v423 = vrot.slane %v419, %v422
      %vm424 = vcmp.eq.s32.totalorder %v423, 1
      %v425 = vsel %vm424, %v414, 0.0
      %v426 = vsel %vm424, %v416, 0.0
      %427 = vset.pattern.permute.xlu0 2
      %428 = vperm.xlu0 %427, %v348
      %v429 = vpop.permute.xlu0 %428
      %431 = vset.pattern.permute.xlu0 2
      %432 = vperm.xlu0 %431, %v349
      %v433 = vpop.permute.xlu0 %432
      %v435 = vmul.f32 %v425, %v429
      %v436 = vmul.f32 %v426, %v433
      %v437 = vadd.f32 %v411, %v435
      %v438 = vadd.f32 %v412, %v436
      %439 = vrot.lane.b32.xlu0 %v344, 1
      %v440 = vpop.permute.xlu0 %439
      %441 = vrot.lane.b32.xlu0 %v345, 1
      %v442 = vpop.permute.xlu0 %441
      %v443 = vsel %vm366, 1, 0
      %v444 = vlaneseq
      %v445 = vshrl.u32 %v444, 7
      %v446 = vsub.s32 0, %v445
      %v447 = vrot.slane %v443, %v446
      %vm448 = vcmp.eq.s32.totalorder %v447, 1
      %v449 = vsel %vm448, %v440, 0.0
      %v450 = vsel %vm448, %v442, 0.0
      %451 = vset.pattern.permute.xlu0 3
      %452 = vperm.xlu0 %451, %v348
      %v453 = vpop.permute.xlu0 %452
      %455 = vset.pattern.permute.xlu0 3
      %456 = vperm.xlu0 %455, %v349
      %v457 = vpop.permute.xlu0 %456
      %v459 = vmul.f32 %v449, %v453
      %v460 = vmul.f32 %v450, %v457
      %v461 = vadd.f32 %v437, %v459
      %v462 = vadd.f32 %v438, %v460
      %463 = vrot.lane.b32.xlu0 %v344, 127
      %v464 = vpop.permute.xlu0 %463
      %465 = vrot.lane.b32.xlu0 %v345, 127
      %v466 = vpop.permute.xlu0 %465
      %v467 = vsel %vm417, 1, 0
      %v468 = vlaneseq
      %v469 = vshrl.u32 %v468, 7
      %v470 = vsub.s32 0, %v469
      %v471 = vrot.slane %v467, %v470
      %vm472 = vcmp.eq.s32.totalorder %v471, 1
      %v473 = vsel %vm472, %v464, 0.0
      %v474 = vsel %vm472, %v466, 0.0
      %475 = vset.pattern.permute.xlu0 5
      %476 = vperm.xlu0 %475, %v348
      %v477 = vpop.permute.xlu0 %476
      %479 = vset.pattern.permute.xlu0 5
      %480 = vperm.xlu0 %479, %v349
      %v481 = vpop.permute.xlu0 %480
      %v483 = vmul.f32 %v473, %v477
      %v484 = vmul.f32 %v474, %v481
      %v485 = vadd.f32 %v461, %v483
      %v486 = vadd.f32 %v462, %v484
      %487 = vrot.lane.b32.xlu0 %v344, 121
      %v488 = vpop.permute.xlu0 %487
      %489 = vrot.lane.b32.xlu0 %v345, 121
      %v490 = vpop.permute.xlu0 %489
      %vm491 = vcmp.lt.s32.totalorder %v346, 7
      %vm492 = vmand %vm366, %vm491
      %v493 = vsel %vm492, 1, 0
      %v494 = vlaneseq
      %v495 = vshrl.u32 %v494, 7
      %v496 = vsub.s32 0, %v495
      %v497 = vrot.slane %v493, %v496
      %vm498 = vcmp.eq.s32.totalorder %v497, 1
      %v499 = vsel %vm498, %v488, 0.0
      %v500 = vsel %vm498, %v490, 0.0
      %501 = vset.pattern.permute.xlu0 6
      %502 = vperm.xlu0 %501, %v348
      %v503 = vpop.permute.xlu0 %502
      %505 = vset.pattern.permute.xlu0 6
      %506 = vperm.xlu0 %505, %v349
      %v507 = vpop.permute.xlu0 %506
      %v509 = vmul.f32 %v499, %v503
      %v510 = vmul.f32 %v500, %v507
      %v511 = vadd.f32 %v485, %v509
      %v512 = vadd.f32 %v486, %v510
      %513 = vrot.lane.b32.xlu0 %v344, 120
      %v514 = vpop.permute.xlu0 %513
      %515 = vrot.lane.b32.xlu0 %v345, 120
      %v516 = vpop.permute.xlu0 %515
      %v517 = vsel %vm491, 1, 0
      %v518 = vlaneseq
      %v519 = vshrl.u32 %v518, 7
      %v520 = vsub.s32 0, %v519
      %v521 = vrot.slane %v517, %v520
      %vm522 = vcmp.eq.s32.totalorder %v521, 1
      %v523 = vsel %vm522, %v514, 0.0
      %v524 = vsel %vm522, %v516, 0.0
      %525 = vset.pattern.permute.xlu0 7
      %526 = vperm.xlu0 %525, %v348
      %v527 = vpop.permute.xlu0 %526
      %529 = vset.pattern.permute.xlu0 7
      %530 = vperm.xlu0 %529, %v349
      %v531 = vpop.permute.xlu0 %530
      %v533 = vmul.f32 %v523, %v527
      %v534 = vmul.f32 %v524, %v531
      %v535 = vadd.f32 %v511, %v533
      %v536 = vadd.f32 %v512, %v534
      %537 = vrot.lane.b32.xlu0 %v344, 119
      %v538 = vpop.permute.xlu0 %537
      %539 = vrot.lane.b32.xlu0 %v345, 119
      %v540 = vpop.permute.xlu0 %539
      %vm541 = vmand %vm417, %vm491
      %v542 = vsel %vm541, 1, 0
      %v543 = vlaneseq
      %v544 = vshrl.u32 %v543, 7
      %v545 = vsub.s32 0, %v544
      %v546 = vrot.slane %v542, %v545
      %vm547 = vcmp.eq.s32.totalorder %v546, 1
      %v548 = vsel %vm547, %v538, 0.0
      %v549 = vsel %vm547, %v540, 0.0
      %550 = vset.pattern.permute.xlu0 8
      %551 = vperm.xlu0 %550, %v348
      %v552 = vpop.permute.xlu0 %551
      %554 = vset.pattern.permute.xlu0 8
      %555 = vperm.xlu0 %554, %v349
      %v556 = vpop.permute.xlu0 %555
      %v558 = vmul.f32 %v548, %v552
      %v559 = vmul.f32 %v549, %v556
      %v560 = vadd.f32 %v535, %v558
      %v561 = vadd.f32 %v536, %v559
      %v562 = vld [vmem:[%s332] sm:$0xff]
      %v563 = vld [vmem:[%s332 + $0x8] sm:$0xff]
      %565 = vset.pattern.permute.xlu0 0
      %566 = vperm.xlu0 %565, %v562
      %v567 = vpop.permute.xlu0 %566
      %570 = vset.pattern.permute.xlu0 0
      %571 = vperm.xlu0 %570, %v563
      %v572 = vpop.permute.xlu0 %571
      %v574 = vadd.f32 %v560, %v567
      %v575 = vadd.f32 %v561, %v572
      %v576 = vmul.f32 %v574, 0.5
      %v577 = vmul.f32 %v575, 0.5
      %v578 = vmul.f32 %v574, 0.044715
      %v579 = vmul.f32 %v575, 0.044715
      %v580 = vmul.f32 %v578, %v574
      %v581 = vmul.f32 %v579, %v575
      %v582 = vmul.f32 %v580, %v574
      %v583 = vmul.f32 %v581, %v575
      %v584 = vadd.f32 %v574, %v582
      %v585 = vadd.f32 %v575, %v583
      %v586 = vmul.f32 %v584, 0.7978846
      %v587 = vmul.f32 %v585, 0.7978846
      %v588 = vtanh.pop %v586
      %v589 = vtanh.pop %v587
      %v590 = vadd.f32 %v588, 1.0
      %v591 = vadd.f32 %v589, 1.0
      %v592 = vmul.f32 %v576, %v590
      %v593 = vmul.f32 %v577, %v591
      %v594 = vadd.f32 %v344, %v592
      %v595 = vadd.f32 %v345, %v593
      %v596 = vmul.f32 %v594, 0.5
      %v597 = vmul.f32 %v595, 0.5
      %v598 = vmul.f32 %v594, 0.044715
      %v599 = vmul.f32 %v595, 0.044715
      %v600 = vmul.f32 %v598, %v594
      %v601 = vmul.f32 %v599, %v595
      %v602 = vmul.f32 %v600, %v594
      %v603 = vmul.f32 %v601, %v595
      %v604 = vadd.f32 %v594, %v602
      %v605 = vadd.f32 %v595, %v603
      %v606 = vmul.f32 %v604, 0.7978846
      %v607 = vmul.f32 %v605, 0.7978846
      %v608 = vtanh.pop %v606
      %v609 = vtanh.pop %v607
      %v610 = vadd.f32 %v608, 1.0
      %v611 = vadd.f32 %v609, 1.0
      %v612 = vmul.f32 %v596, %v610
      %v613 = vmul.f32 %v597, %v611
      %v614 = vld [vmem:[%s320] sm:$0xff]
      %v615 = vld [vmem:[%s320 + $0x8] sm:$0xff]
      %v616 = vadd.f32 %v612, %v614
      %v617 = vadd.f32 %v613, %v615
      %618 = vst [vmem:[%s342] sm:$0xff] %v616
      %619 = vst [vmem:[%s342 + $0x8] sm:$0xff] %v617
      %s620 = smul.u32 2, %s21
      %p621 = scmp.lt.s32.totalorder %s20, 1
      %s622 = scalar_select %p621, %s20, 1
      %p623 = scmp.lt.s32.totalorder %s620, 1
      %s624 = scalar_select %p623, %s620, 1
      %s625 = smul.addr %s622, 2
      %s626 = sadd.s32 %s624, %s625
      %s627 = smul.addr %s626, 8
      %s628 = scalar_lea.vmem %s5, %s627
      // Predicated region
      $region41: #{_lambda_.11} parent=39 // pred_check
        %p629 = pneg %p177
      $region42: #{_lambda_.11} parent=39 // pred_check_branch
        %631 = sbr.rel (%p629) target = $region44
      $region43: #{_lambda_.11} parent=39 // pred_region
        %s632 = smul.u32 2, %s21
      $region44: #{_lambda_.11} parent=39 // pred_fallthru
        _
    $region40: #{_lambda_.11} parent=5 // pred_fallthru
      _
    %p633 = scmp.le.s32.totalorder 2, %s11
    // Predicated region
    $region45: #{_lambda_.11} parent=5 // pred_check
      %p634 = pneg %p633
    $region46: #{_lambda_.11} parent=5 // pred_check_branch
      %636 = sbr.rel (%p634) target = $region48
    $region47: #{_lambda_.11} parent=5 // pred_region
      %s637 = ssub.s32 %s11, 2
      // Predicated region
      $region49: #{_lambda_.11} parent=47 // pred_check
        %p638 = pneg %p183
      $region50: #{_lambda_.11} parent=47 // pred_check_branch
        %640 = sbr.rel (%p638) target = $region52
      $region51: #{_lambda_.11} parent=47 // pred_region
        %s641 = smul.u32 2, %s23
        %p642 = scmp.lt.s32.totalorder %s22, 1
        %s643 = scalar_select %p642, %s22, 1
        %p644 = scmp.lt.s32.totalorder %s641, 1
        %s645 = scalar_select %p644, %s641, 1
        %s646 = smul.addr %s643, 2
        %s647 = sadd.s32 %s645, %s646
        %s648 = smul.addr %s647, 8
        %s649 = scalar_lea.vmem %s5, %s648
      $region52: #{_lambda_.11} parent=47 // pred_fallthru
        _
    $region48: #{_lambda_.11} parent=5 // pred_fallthru
      _
  $region6: #{_lambda_.11} parent=0 // loop_footer
    %s15 = sadd.s32 1, %s11
  $region7: #{_lambda_.11} parent=0 // loop_footer_branch
    %10 = sbr.rel target = $region3
  $region8: #{_lambda_.11} parent=0 // loop_exit
    _

</llo_original>
